<compile_context>
chip_gen: v6e
topology: v6e:2x2x1
jax: 0.10.0
libtpu: 0.0.40
codegen_flags: <defaults>
</compile_context>

<pallas_src>
import functools

import jax
import jax.numpy as jnp
from jax.experimental import pallas as pl
from jax.experimental.pallas import tpu as pltpu

# Layer sizes exactly as in the PyTorch module.
LAYER_DIMS = [15, 512, 1024, 512, 256, 128, 32, 1]
NUM_LAYERS = len(LAYER_DIMS) - 1  # 7 Linear layers


def _round_up(n, m):
    return (n + m - 1) // m * m


def _mlp_kernel(x_ref, *refs):
    """Fused MLP forward: 7x (bf16 matmul w/ f32 accum + bias), ReLU between layers."""
    # refs = (w1, b1, w2, b2, ..., w7, b7, out)
    out_ref = refs[-1]
    param_refs = refs[:-1]

    h = x_ref[...].astype(jnp.bfloat16)
    for layer in range(NUM_LAYERS):
        w = param_refs[2 * layer][...]        # (in, out) bf16
        b = param_refs[2 * layer + 1][...]    # (1, out)  f32
        y = jnp.dot(h, w, preferred_element_type=jnp.float32) + b
        if layer < NUM_LAYERS - 1:
            h = jnp.maximum(y, 0.0).astype(jnp.bfloat16)  # ReLU, re-quantize for MXU
        else:
            h = y                                          # no activation on last layer
    out_ref[...] = h.astype(out_ref.dtype)


@functools.partial(jax.jit, static_argnames=("tile_b",))
def mlp_forward(x, params, tile_b=256):
    """x: (B, 15) f32.  params: list of (W_i bf16 (in,out), b_i f32 (1,out))."""
    B, F = x.shape
    assert F == LAYER_DIMS[0]

    # Effective batch tile: clamp to the (padded) batch for small B; keep it a
    # multiple of 8 (sublane).  For big batches that would otherwise be a single
    # grid step, split into >=2 steps so v7x's two TensorCores both get work.
    eff_tile = min(tile_b, _round_up(B, 8))
    if B >= 256 and _round_up(B, eff_tile) == eff_tile:
        eff_tile = _round_up((B + 1) // 2, 8)
    Bp = _round_up(B, eff_tile)
    xp = x if Bp == B else jnp.pad(x, ((0, Bp - B), (0, 0)))

    flat_params = []
    # x / out tiled over batch; every weight & bias passed as one full-resident
    # block (index_map always returns block (0, 0), so Pallas never re-DMAs them).
    in_specs = [pl.BlockSpec((eff_tile, F), lambda i: (i, 0))]
    for w, b in params:
        flat_params.extend([w, b])
        in_specs.append(pl.BlockSpec(w.shape, lambda i: (0, 0)))
        in_specs.append(pl.BlockSpec(b.shape, lambda i: (0, 0)))
    out_spec = pl.BlockSpec((eff_tile, LAYER_DIMS[-1]), lambda i: (i, 0))

    n_mm = sum(din * dout for din, dout in zip(LAYER_DIMS[:-1], LAYER_DIMS[1:]))
    n_bias = sum(LAYER_DIMS[1:])
    cost = pl.CostEstimate(
        flops=2 * Bp * n_mm,
        transcendentals=0,
        bytes_accessed=2 * n_mm + 4 * n_bias + 4 * Bp * F + 4 * Bp * LAYER_DIMS[-1],
    )

    out = pl.pallas_call(
        _mlp_kernel,
        out_shape=jax.ShapeDtypeStruct((Bp, LAYER_DIMS[-1]), jnp.float32),
        grid_spec=pltpu.PrefetchScalarGridSpec(
            num_scalar_prefetch=0,
            grid=(Bp // eff_tile,),
            in_specs=in_specs,
            out_specs=out_spec,
        ),
        compiler_params=pltpu.CompilerParams(
            dimension_semantics=("parallel",),
            vmem_limit_bytes=32 * 1024 * 1024,  # safe on v5e's 16 MiB scoped default
        ),
        cost_estimate=cost,
    )(xp, *flat_params)

    return out if Bp == B else out[:B]


def init_params(key, scale=None):
    """Params as (W bf16 (in,out), b f32 (1,out)).

    scale=None uses U(-1/sqrt(fan_in), 1/sqrt(fan_in)) so the self-test has
    non-degenerate magnitudes; pass scale=1e-4 to reproduce MLP.init_weights()
    (weights ~U(-1e-4, 1e-4), biases zero).
    """
    params = []
    for i in range(NUM_LAYERS):
        key, sub = jax.random.split(key)
        fan_in, fan_out = LAYER_DIMS[i], LAYER_DIMS[i + 1]
        s = scale if scale is not None else float(fan_in) ** -0.5
        w = jax.random.uniform(
            sub, (fan_in, fan_out), dtype=jnp.float32, minval=-s, maxval=s
        ).astype(jnp.bfloat16)
        b = jnp.zeros((1, fan_out), dtype=jnp.float32)
        params.append((w, b))
    return params


def mlp_reference(x, params):
    """Pure-JAX reference using the same bf16-weight / f32-accumulate recipe."""
    h = x.astype(jnp.bfloat16)
    for i, (w, b) in enumerate(params):
        y = jnp.dot(h, w, preferred_element_type=jnp.float32) + b
        if i < NUM_LAYERS - 1:
            h = jnp.maximum(y, 0.0).astype(jnp.bfloat16)
        else:
            h = y
    return h


if __name__ == "__main__":
    key = jax.random.PRNGKey(0)
    key, xkey = jax.random.split(key)
    params = init_params(key)

    # Small batch: single grid step, whole batch resident (weight-DMA-bound path).
    B = 16
    x = jax.random.normal(xkey, (B, LAYER_DIMS[0]), dtype=jnp.float32)
    out = jax.block_until_ready(mlp_forward(x, params))
    ref = mlp_reference(x, params)
    assert out.shape == (B, 1), out.shape
    assert jnp.allclose(out, ref, rtol=1e-2, atol=1e-5), "mismatch vs reference (small batch)"

    # Larger batch: exercises batch padding (200 -> 256) and a 2-step tiled grid.
    B2 = 200
    x2 = jax.random.normal(jax.random.PRNGKey(1), (B2, LAYER_DIMS[0]), dtype=jnp.float32)
    out2 = jax.block_until_ready(mlp_forward(x2, params, tile_b=128))
    ref2 = mlp_reference(x2, params)
    assert out2.shape == (B2, 1), out2.shape
    assert jnp.allclose(out2, ref2, rtol=1e-2, atol=1e-5), "mismatch vs reference (tiled batch)"

    print("KERNEL_OK")
</pallas_src>

<mosaic_0001>
module attributes {stable_mosaic.version = 11 : i64} {
  func.func @_mlp_kernel(%arg0: i32, %arg1: memref<16x15xf32, #tpu.memory_space<vmem>>, %arg2: memref<15x512xbf16, #tpu.memory_space<vmem>>, %arg3: memref<1x512xf32, #tpu.memory_space<vmem>>, %arg4: memref<512x1024xbf16, #tpu.memory_space<vmem>>, %arg5: memref<1x1024xf32, #tpu.memory_space<vmem>>, %arg6: memref<1024x512xbf16, #tpu.memory_space<vmem>>, %arg7: memref<1x512xf32, #tpu.memory_space<vmem>>, %arg8: memref<512x256xbf16, #tpu.memory_space<vmem>>, %arg9: memref<1x256xf32, #tpu.memory_space<vmem>>, %arg10: memref<256x128xbf16, #tpu.memory_space<vmem>>, %arg11: memref<1x128xf32, #tpu.memory_space<vmem>>, %arg12: memref<128x32xbf16, #tpu.memory_space<vmem>>, %arg13: memref<1x32xf32, #tpu.memory_space<vmem>>, %arg14: memref<32x1xbf16, #tpu.memory_space<vmem>>, %arg15: memref<1x1xf32, #tpu.memory_space<vmem>>, %arg16: memref<16x1xf32, #tpu.memory_space<vmem>>) attributes {dimension_semantics = [#tpu.dimension_semantics<parallel>], iteration_bounds = array<i64: 1>, scalar_prefetch = 0 : i64, scratch_operands = 0 : i64, tpu.core_type = #tpu.core_type<tc>, window_params = [{transform_indices = @transform_0, window_bounds = array<i64: 16, 15>}, {pipeline_mode = #tpu.pipeline_mode<synchronous>, transform_indices = @transform_1, window_bounds = array<i64: 15, 512>}, {pipeline_mode = #tpu.pipeline_mode<synchronous>, transform_indices = @transform_2, window_bounds = array<i64: 1, 512>}, {pipeline_mode = #tpu.pipeline_mode<synchronous>, transform_indices = @transform_3, window_bounds = array<i64: 512, 1024>}, {pipeline_mode = #tpu.pipeline_mode<synchronous>, transform_indices = @transform_4, window_bounds = array<i64: 1, 1024>}, {pipeline_mode = #tpu.pipeline_mode<synchronous>, transform_indices = @transform_5, window_bounds = array<i64: 1024, 512>}, {pipeline_mode = #tpu.pipeline_mode<synchronous>, transform_indices = @transform_6, window_bounds = array<i64: 1, 512>}, {pipeline_mode = #tpu.pipeline_mode<synchronous>, transform_indices = @transform_7, window_bounds = array<i64: 512, 256>}, {pipeline_mode = #tpu.pipeline_mode<synchronous>, transform_indices = @transform_8, window_bounds = array<i64: 1, 256>}, {pipeline_mode = #tpu.pipeline_mode<synchronous>, transform_indices = @transform_9, window_bounds = array<i64: 256, 128>}, {pipeline_mode = #tpu.pipeline_mode<synchronous>, transform_indices = @transform_10, window_bounds = array<i64: 1, 128>}, {pipeline_mode = #tpu.pipeline_mode<synchronous>, transform_indices = @transform_11, window_bounds = array<i64: 128, 32>}, {pipeline_mode = #tpu.pipeline_mode<synchronous>, transform_indices = @transform_12, window_bounds = array<i64: 1, 32>}, {pipeline_mode = #tpu.pipeline_mode<synchronous>, transform_indices = @transform_13, window_bounds = array<i64: 32, 1>}, {pipeline_mode = #tpu.pipeline_mode<synchronous>, transform_indices = @transform_14, window_bounds = array<i64: 1, 1>}, {transform_indices = @transform_15, window_bounds = array<i64: 16, 1>}]} {
    %c0 = arith.constant 0 : index
    %c0_0 = arith.constant 0 : index
    %0 = vector.load %arg1[%c0, %c0_0] : memref<16x15xf32, #tpu.memory_space<vmem>>, vector<16x15xf32>
    %1 = arith.truncf %0 : vector<16x15xf32> to vector<16x15xbf16>
    %c0_1 = arith.constant 0 : index
    %c0_2 = arith.constant 0 : index
    %2 = vector.load %arg2[%c0_1, %c0_2] : memref<15x512xbf16, #tpu.memory_space<vmem>>, vector<15x512xbf16>
    %c0_3 = arith.constant 0 : index
    %c0_4 = arith.constant 0 : index
    %3 = vector.load %arg3[%c0_3, %c0_4] : memref<1x512xf32, #tpu.memory_space<vmem>>, vector<1x512xf32>
    %cst = arith.constant dense<0.000000e+00> : vector<16x512xf32>
    %4 = tpu.matmul %1, %2, %cst {dimension_numbers = #tpu.dot_dimension_numbers<[1], [0], [0], [1], [0, 0, 1, 1], [], []>} : vector<16x15xbf16>, vector<15x512xbf16>, vector<16x512xf32> -> vector<16x512xf32>
    %5 = vector.broadcast %3 : vector<1x512xf32> to vector<16x512xf32>
    %6 = arith.addf %4, %5 : vector<16x512xf32>
    %cst_5 = arith.constant 0.000000e+00 : f32
    %7 = vector.broadcast %cst_5 : f32 to vector<16x512xf32>
    %8 = arith.maximumf %6, %7 : vector<16x512xf32>
    %9 = arith.truncf %8 : vector<16x512xf32> to vector<16x512xbf16>
    %c0_6 = arith.constant 0 : index
    %c0_7 = arith.constant 0 : index
    %10 = vector.load %arg4[%c0_6, %c0_7] : memref<512x1024xbf16, #tpu.memory_space<vmem>>, vector<512x1024xbf16>
    %c0_8 = arith.constant 0 : index
    %c0_9 = arith.constant 0 : index
    %11 = vector.load %arg5[%c0_8, %c0_9] : memref<1x1024xf32, #tpu.memory_space<vmem>>, vector<1x1024xf32>
    %cst_10 = arith.constant dense<0.000000e+00> : vector<16x1024xf32>
    %12 = tpu.matmul %9, %10, %cst_10 {dimension_numbers = #tpu.dot_dimension_numbers<[1], [0], [0], [1], [0, 0, 1, 1], [], []>} : vector<16x512xbf16>, vector<512x1024xbf16>, vector<16x1024xf32> -> vector<16x1024xf32>
    %13 = vector.broadcast %11 : vector<1x1024xf32> to vector<16x1024xf32>
    %14 = arith.addf %12, %13 : vector<16x1024xf32>
    %cst_11 = arith.constant 0.000000e+00 : f32
    %15 = vector.broadcast %cst_11 : f32 to vector<16x1024xf32>
    %16 = arith.maximumf %14, %15 : vector<16x1024xf32>
    %17 = arith.truncf %16 : vector<16x1024xf32> to vector<16x1024xbf16>
    %c0_12 = arith.constant 0 : index
    %c0_13 = arith.constant 0 : index
    %18 = vector.load %arg6[%c0_12, %c0_13] : memref<1024x512xbf16, #tpu.memory_space<vmem>>, vector<1024x512xbf16>
    %c0_14 = arith.constant 0 : index
    %c0_15 = arith.constant 0 : index
    %19 = vector.load %arg7[%c0_14, %c0_15] : memref<1x512xf32, #tpu.memory_space<vmem>>, vector<1x512xf32>
    %cst_16 = arith.constant dense<0.000000e+00> : vector<16x512xf32>
    %20 = tpu.matmul %17, %18, %cst_16 {dimension_numbers = #tpu.dot_dimension_numbers<[1], [0], [0], [1], [0, 0, 1, 1], [], []>} : vector<16x1024xbf16>, vector<1024x512xbf16>, vector<16x512xf32> -> vector<16x512xf32>
    %21 = vector.broadcast %19 : vector<1x512xf32> to vector<16x512xf32>
    %22 = arith.addf %20, %21 : vector<16x512xf32>
    %cst_17 = arith.constant 0.000000e+00 : f32
    %23 = vector.broadcast %cst_17 : f32 to vector<16x512xf32>
    %24 = arith.maximumf %22, %23 : vector<16x512xf32>
    %25 = arith.truncf %24 : vector<16x512xf32> to vector<16x512xbf16>
    %c0_18 = arith.constant 0 : index
    %c0_19 = arith.constant 0 : index
    %26 = vector.load %arg8[%c0_18, %c0_19] : memref<512x256xbf16, #tpu.memory_space<vmem>>, vector<512x256xbf16>
    %c0_20 = arith.constant 0 : index
    %c0_21 = arith.constant 0 : index
    %27 = vector.load %arg9[%c0_20, %c0_21] : memref<1x256xf32, #tpu.memory_space<vmem>>, vector<1x256xf32>
    %cst_22 = arith.constant dense<0.000000e+00> : vector<16x256xf32>
    %28 = tpu.matmul %25, %26, %cst_22 {dimension_numbers = #tpu.dot_dimension_numbers<[1], [0], [0], [1], [0, 0, 1, 1], [], []>} : vector<16x512xbf16>, vector<512x256xbf16>, vector<16x256xf32> -> vector<16x256xf32>
    %29 = vector.broadcast %27 : vector<1x256xf32> to vector<16x256xf32>
    %30 = arith.addf %28, %29 : vector<16x256xf32>
    %cst_23 = arith.constant 0.000000e+00 : f32
    %31 = vector.broadcast %cst_23 : f32 to vector<16x256xf32>
    %32 = arith.maximumf %30, %31 : vector<16x256xf32>
    %33 = arith.truncf %32 : vector<16x256xf32> to vector<16x256xbf16>
    %c0_24 = arith.constant 0 : index
    %c0_25 = arith.constant 0 : index
    %34 = vector.load %arg10[%c0_24, %c0_25] : memref<256x128xbf16, #tpu.memory_space<vmem>>, vector<256x128xbf16>
    %c0_26 = arith.constant 0 : index
    %c0_27 = arith.constant 0 : index
    %35 = vector.load %arg11[%c0_26, %c0_27] : memref<1x128xf32, #tpu.memory_space<vmem>>, vector<1x128xf32>
    %cst_28 = arith.constant dense<0.000000e+00> : vector<16x128xf32>
    %36 = tpu.matmul %33, %34, %cst_28 {dimension_numbers = #tpu.dot_dimension_numbers<[1], [0], [0], [1], [0, 0, 1, 1], [], []>} : vector<16x256xbf16>, vector<256x128xbf16>, vector<16x128xf32> -> vector<16x128xf32>
    %37 = vector.broadcast %35 : vector<1x128xf32> to vector<16x128xf32>
    %38 = arith.addf %36, %37 : vector<16x128xf32>
    %cst_29 = arith.constant 0.000000e+00 : f32
    %39 = vector.broadcast %cst_29 : f32 to vector<16x128xf32>
    %40 = arith.maximumf %38, %39 : vector<16x128xf32>
    %41 = arith.truncf %40 : vector<16x128xf32> to vector<16x128xbf16>
    %c0_30 = arith.constant 0 : index
    %c0_31 = arith.constant 0 : index
    %42 = vector.load %arg12[%c0_30, %c0_31] : memref<128x32xbf16, #tpu.memory_space<vmem>>, vector<128x32xbf16>
    %c0_32 = arith.constant 0 : index
    %c0_33 = arith.constant 0 : index
    %43 = vector.load %arg13[%c0_32, %c0_33] : memref<1x32xf32, #tpu.memory_space<vmem>>, vector<1x32xf32>
    %cst_34 = arith.constant dense<0.000000e+00> : vector<16x32xf32>
    %44 = tpu.matmul %41, %42, %cst_34 {dimension_numbers = #tpu.dot_dimension_numbers<[1], [0], [0], [1], [0, 0, 1, 1], [], []>} : vector<16x128xbf16>, vector<128x32xbf16>, vector<16x32xf32> -> vector<16x32xf32>
    %45 = vector.broadcast %43 : vector<1x32xf32> to vector<16x32xf32>
    %46 = arith.addf %44, %45 : vector<16x32xf32>
    %cst_35 = arith.constant 0.000000e+00 : f32
    %47 = vector.broadcast %cst_35 : f32 to vector<16x32xf32>
    %48 = arith.maximumf %46, %47 : vector<16x32xf32>
    %49 = arith.truncf %48 : vector<16x32xf32> to vector<16x32xbf16>
    %c0_36 = arith.constant 0 : index
    %c0_37 = arith.constant 0 : index
    %50 = vector.load %arg14[%c0_36, %c0_37] : memref<32x1xbf16, #tpu.memory_space<vmem>>, vector<32x1xbf16>
    %c0_38 = arith.constant 0 : index
    %c0_39 = arith.constant 0 : index
    %51 = vector.load %arg15[%c0_38, %c0_39] : memref<1x1xf32, #tpu.memory_space<vmem>>, vector<1x1xf32>
    %cst_40 = arith.constant dense<0.000000e+00> : vector<16x1xf32>
    %52 = tpu.matmul %49, %50, %cst_40 {dimension_numbers = #tpu.dot_dimension_numbers<[1], [0], [0], [1], [0, 0, 1, 1], [], []>} : vector<16x32xbf16>, vector<32x1xbf16>, vector<16x1xf32> -> vector<16x1xf32>
    %53 = vector.broadcast %51 : vector<1x1xf32> to vector<16x1xf32>
    %54 = arith.addf %52, %53 : vector<16x1xf32>
    %c0_41 = arith.constant 0 : index
    %c0_42 = arith.constant 0 : index
    %55 = vector.load %arg16[%c0_41, %c0_42] : memref<16x1xf32, #tpu.memory_space<vmem>>, vector<16x1xf32>
    tpu.vector_store %arg16[%c0_41, %c0_42], %54 {strides = array<i32>} : memref<16x1xf32, #tpu.memory_space<vmem>>, vector<16x1xf32>,
    return
  }
  func.func @transform_0(%arg0: i32) -> (i32, i32) {
    %c0_i32 = arith.constant 0 : i32
    %c0_i32_0 = arith.constant 0 : i32
    return %arg0, %c0_i32 : i32, i32
  }
  func.func @transform_1(%arg0: i32) -> (i32, i32) {
    %c0_i32 = arith.constant 0 : i32
    %c0_i32_0 = arith.constant 0 : i32
    %c0_i32_1 = arith.constant 0 : i32
    return %c0_i32, %c0_i32_0 : i32, i32
  }
  func.func @transform_2(%arg0: i32) -> (i32, i32) {
    %c0_i32 = arith.constant 0 : i32
    %c0_i32_0 = arith.constant 0 : i32
    %c0_i32_1 = arith.constant 0 : i32
    return %c0_i32, %c0_i32_0 : i32, i32
  }
  func.func @transform_3(%arg0: i32) -> (i32, i32) {
    %c0_i32 = arith.constant 0 : i32
    %c0_i32_0 = arith.constant 0 : i32
    %c0_i32_1 = arith.constant 0 : i32
    return %c0_i32, %c0_i32_0 : i32, i32
  }
  func.func @transform_4(%arg0: i32) -> (i32, i32) {
    %c0_i32 = arith.constant 0 : i32
    %c0_i32_0 = arith.constant 0 : i32
    %c0_i32_1 = arith.constant 0 : i32
    return %c0_i32, %c0_i32_0 : i32, i32
  }
  func.func @transform_5(%arg0: i32) -> (i32, i32) {
    %c0_i32 = arith.constant 0 : i32
    %c0_i32_0 = arith.constant 0 : i32
    %c0_i32_1 = arith.constant 0 : i32
    return %c0_i32, %c0_i32_0 : i32, i32
  }
  func.func @transform_6(%arg0: i32) -> (i32, i32) {
    %c0_i32 = arith.constant 0 : i32
    %c0_i32_0 = arith.constant 0 : i32
    %c0_i32_1 = arith.constant 0 : i32
    return %c0_i32, %c0_i32_0 : i32, i32
  }
  func.func @transform_7(%arg0: i32) -> (i32, i32) {
    %c0_i32 = arith.constant 0 : i32
    %c0_i32_0 = arith.constant 0 : i32
    %c0_i32_1 = arith.constant 0 : i32
    return %c0_i32, %c0_i32_0 : i32, i32
  }
  func.func @transform_8(%arg0: i32) -> (i32, i32) {
    %c0_i32 = arith.constant 0 : i32
    %c0_i32_0 = arith.constant 0 : i32
    %c0_i32_1 = arith.constant 0 : i32
    return %c0_i32, %c0_i32_0 : i32, i32
  }
  func.func @transform_9(%arg0: i32) -> (i32, i32) {
    %c0_i32 = arith.constant 0 : i32
    %c0_i32_0 = arith.constant 0 : i32
    %c0_i32_1 = arith.constant 0 : i32
    return %c0_i32, %c0_i32_0 : i32, i32
  }
  func.func @transform_10(%arg0: i32) -> (i32, i32) {
    %c0_i32 = arith.constant 0 : i32
    %c0_i32_0 = arith.constant 0 : i32
    %c0_i32_1 = arith.constant 0 : i32
    return %c0_i32, %c0_i32_0 : i32, i32
  }
  func.func @transform_11(%arg0: i32) -> (i32, i32) {
    %c0_i32 = arith.constant 0 : i32
    %c0_i32_0 = arith.constant 0 : i32
    %c0_i32_1 = arith.constant 0 : i32
    return %c0_i32, %c0_i32_0 : i32, i32
  }
  func.func @transform_12(%arg0: i32) -> (i32, i32) {
    %c0_i32 = arith.constant 0 : i32
    %c0_i32_0 = arith.constant 0 : i32
    %c0_i32_1 = arith.constant 0 : i32
    return %c0_i32, %c0_i32_0 : i32, i32
  }
  func.func @transform_13(%arg0: i32) -> (i32, i32) {
    %c0_i32 = arith.constant 0 : i32
    %c0_i32_0 = arith.constant 0 : i32
    %c0_i32_1 = arith.constant 0 : i32
    return %c0_i32, %c0_i32_0 : i32, i32
  }
  func.func @transform_14(%arg0: i32) -> (i32, i32) {
    %c0_i32 = arith.constant 0 : i32
    %c0_i32_0 = arith.constant 0 : i32
    %c0_i32_1 = arith.constant 0 : i32
    return %c0_i32, %c0_i32_0 : i32, i32
  }
  func.func @transform_15(%arg0: i32) -> (i32, i32) {
    %c0_i32 = arith.constant 0 : i32
    %c0_i32_0 = arith.constant 0 : i32
    return %arg0, %c0_i32 : i32, i32
  }
}

</mosaic_0001>

<llo_original>
// kernel: mlp_forward.1
$region0: #{mlp_forward.1}
  #allocation0 [shape = 'u32[]', space=smem, size = 0x4, offset = 0x4, fixed_abs, tag = 'smem constant byte address 0x4 - core index']
  #allocation1 [shape = 'u32[144,128]{1,0:T(1,128)}', space=vmem, size = 0x12000, scoped, tag = 'internal scratch']
  #allocation2 [shape = 'f32[1,1]{1,0:T(1,128)S(1)}', space=vmem, size = 0x200, scoped, tag = 'scoped memory for mlp_forward.1']
  %s0 = inlined_call_operand.vmem [shape: f32[16,15], index: 0, kind: input, shape index: {}]
  %s1 = inlined_call_operand.vmem [shape: bf16[15,512], index: 1, kind: input, shape index: {}]
  %s2 = inlined_call_operand.vmem [shape: f32[1,512], index: 2, kind: input, shape index: {}]
  %s3 = inlined_call_operand.hbm [shape: bf16[512,1024], index: 3, kind: input, shape index: {}]
  %s4 = inlined_call_operand.vmem [shape: f32[1,1024], index: 4, kind: input, shape index: {}]
  %s5 = inlined_call_operand.hbm [shape: bf16[1024,512], index: 5, kind: input, shape index: {}]
  %s6 = inlined_call_operand.vmem [shape: f32[1,512], index: 6, kind: input, shape index: {}]
  %s7 = inlined_call_operand.hbm [shape: bf16[512,256], index: 7, kind: input, shape index: {}]
  %s8 = inlined_call_operand.vmem [shape: f32[1,256], index: 8, kind: input, shape index: {}]
  %s9 = inlined_call_operand.hbm [shape: bf16[256,128], index: 9, kind: input, shape index: {}]
  %s10 = inlined_call_operand.vmem [shape: f32[1,128], index: 10, kind: input, shape index: {}]
  %s11 = inlined_call_operand.vmem [shape: bf16[128,32], index: 11, kind: input, shape index: {}]
  %s12 = inlined_call_operand.vmem [shape: f32[1,32], index: 12, kind: input, shape index: {}]
  %s13 = inlined_call_operand.vmem [shape: bf16[32,1], index: 13, kind: input, shape index: {}]
  %s14 = inlined_call_operand.<no memory space> [shape: f32[1,1], index: 14, kind: input, shape index: {}]
  %s15 = inlined_call_operand.vmem [shape: f32[16,1], index: 15, kind: output, shape index: {}]
  %s16 = sld [smem:[#allocation0]]
  $region86: #{mlp_forward.1} parent=0
    _
  %s18 = ssub.s32 1, %s16
  %s19 = scalar_select 0, %s18, %s16
  %v20 = vstv %s14
  %21 = vst [vmem:[#allocation2] sm:$0x1] %v20
  $region1: #{mlp_forward.1} parent=0
    #allocation3 [shape = 'u8[1048576]{0}', space=vmem, size = 0x100000, scoped, tag = 'input window, operand 3, single buffered']
    #allocation4 [shape = 's32[1]{0}', space=sflag, size = 0x4, scoped, tag = 'scoped memory for mlp_forward.1']
    #allocation5 [shape = 'u8[1048576]{0}', space=vmem, size = 0x100000, scoped, tag = 'input window, operand 5, single buffered']
    #allocation6 [shape = 's32[1]{0}', space=sflag, size = 0x4, scoped, tag = 'scoped memory for mlp_forward.1']
    #allocation7 [shape = 'u8[262144]{0}', space=vmem, size = 0x40000, scoped, tag = 'input window, operand 7, single buffered']
    #allocation8 [shape = 'u8[65536]{0}', space=vmem, size = 0x10000, scoped, tag = 'input window, operand 9, single buffered']
    #allocation9 [shape = 's32[1]{0}', space=sflag, size = 0x4, scoped, tag = 'scoped memory for mlp_forward.1']
    %22 = vsyncpa [#allocation4], 0
    %23 = vsyncpa [#allocation6], 0
    %24 = vsyncpa [#allocation9], 0
    // Predicated region
    $region2: #{mlp_forward.1} parent=1 // pred_check
      _
    $region3: #{mlp_forward.1} parent=1 // pred_check_branch
      %26 = sbr.rel (0) target = $region5
    $region4: #{mlp_forward.1} parent=1 // pred_region
      _
    $region5: #{mlp_forward.1} parent=1 // pred_fallthru
      _
    // Predicated region
    $region6: #{mlp_forward.1} parent=1 // pred_check
      _
    $region7: #{mlp_forward.1} parent=1 // pred_check_branch
      %28 = sbr.rel (0) target = $region9
    $region8: #{mlp_forward.1} parent=1 // pred_region
      _
    $region9: #{mlp_forward.1} parent=1 // pred_fallthru
      _
    // Predicated region
    $region10: #{mlp_forward.1} parent=1 // pred_check
      _
    $region11: #{mlp_forward.1} parent=1 // pred_check_branch
      %30 = sbr.rel (0) target = $region13
    $region12: #{mlp_forward.1} parent=1 // pred_region
      _
    $region13: #{mlp_forward.1} parent=1 // pred_fallthru
      _
    // Predicated region
    $region14: #{mlp_forward.1} parent=1 // pred_check
      _
    $region15: #{mlp_forward.1} parent=1 // pred_check_branch
      %32 = sbr.rel (0) target = $region17
    $region16: #{mlp_forward.1} parent=1 // pred_region
      %s34 = ssub.s32 32768, 32768
      %35 = vsyncadd [#allocation4], %s34
      %s36 = sshll.u32 [#allocation3], 4
      %s37 = int_to_ptr.vmem [resolvable:$true] %s36
      %42 = dma.hbm_to_vmem [thread:$0]  %s3, 32768, %s37, [#allocation4], 512, 512, 32
    $region17: #{mlp_forward.1} parent=1 // pred_fallthru
      _
    // Predicated region
    $region18: #{mlp_forward.1} parent=1 // pred_check
      _
    $region19: #{mlp_forward.1} parent=1 // pred_check_branch
      %44 = sbr.rel (0) target = $region21
    $region20: #{mlp_forward.1} parent=1 // pred_region
      _
    $region21: #{mlp_forward.1} parent=1 // pred_fallthru
      _
    // Predicated region
    $region22: #{mlp_forward.1} parent=1 // pred_check
      _
    $region23: #{mlp_forward.1} parent=1 // pred_check_branch
      %46 = sbr.rel (0) target = $region25
    $region24: #{mlp_forward.1} parent=1 // pred_region
      %s48 = ssub.s32 32768, 32768
      %49 = vsyncadd [#allocation6], %s48
      %s50 = sshll.u32 [#allocation5], 4
      %s51 = int_to_ptr.vmem [resolvable:$true] %s50
      %56 = dma.hbm_to_vmem [thread:$0]  %s5, 32768, %s51, [#allocation6], 256, 256, 16
    $region25: #{mlp_forward.1} parent=1 // pred_fallthru
      _
    // Predicated region
    $region26: #{mlp_forward.1} parent=1 // pred_check
      _
    $region27: #{mlp_forward.1} parent=1 // pred_check_branch
      %58 = sbr.rel (0) target = $region29
    $region28: #{mlp_forward.1} parent=1 // pred_region
      _
    $region29: #{mlp_forward.1} parent=1 // pred_fallthru
      _
    // Predicated region
    $region30: #{mlp_forward.1} parent=1 // pred_check
      _
    $region31: #{mlp_forward.1} parent=1 // pred_check_branch
      %60 = sbr.rel (0) target = $region33
    $region32: #{mlp_forward.1} parent=1 // pred_region
      %s62 = ssub.s32 8192, 8192
      %63 = vsyncadd [#allocation6], %s62
      %s64 = sshll.u32 [#allocation7], 4
      %s65 = int_to_ptr.vmem [resolvable:$true] %s64
      %70 = dma.hbm_to_vmem [thread:$0]  %s7, 8192, %s65, [#allocation6], 128, 128, 8
    $region33: #{mlp_forward.1} parent=1 // pred_fallthru
      _
    // Predicated region
    $region34: #{mlp_forward.1} parent=1 // pred_check
      _
    $region35: #{mlp_forward.1} parent=1 // pred_check_branch
      %72 = sbr.rel (0) target = $region37
    $region36: #{mlp_forward.1} parent=1 // pred_region
      _
    $region37: #{mlp_forward.1} parent=1 // pred_fallthru
      _
    // Predicated region
    $region38: #{mlp_forward.1} parent=1 // pred_check
      _
    $region39: #{mlp_forward.1} parent=1 // pred_check_branch
      %74 = sbr.rel (0) target = $region41
    $region40: #{mlp_forward.1} parent=1 // pred_region
      %s76 = ssub.s32 2048, 2048
      %77 = vsyncadd [#allocation9], %s76
      %s78 = sshll.u32 [#allocation8], 4
      %s79 = int_to_ptr.vmem [resolvable:$true] %s78
      %84 = dma.hbm_to_vmem [thread:$0]  %s9, 2048, %s79, [#allocation9], 64, 64, 4
    $region41: #{mlp_forward.1} parent=1 // pred_fallthru
      _
    // Predicated region
    $region42: #{mlp_forward.1} parent=1 // pred_check
      _
    $region43: #{mlp_forward.1} parent=1 // pred_check_branch
      %86 = sbr.rel (0) target = $region45
    $region44: #{mlp_forward.1} parent=1 // pred_region
      _
    $region45: #{mlp_forward.1} parent=1 // pred_fallthru
      _
    // Predicated region
    $region46: #{mlp_forward.1} parent=1 // pred_check
      _
    $region47: #{mlp_forward.1} parent=1 // pred_check_branch
      %88 = sbr.rel (0) target = $region49
    $region48: #{mlp_forward.1} parent=1 // pred_region
      _
    $region49: #{mlp_forward.1} parent=1 // pred_fallthru
      _
    // Predicated region
    $region50: #{mlp_forward.1} parent=1 // pred_check
      _
    $region51: #{mlp_forward.1} parent=1 // pred_check_branch
      %90 = sbr.rel (0) target = $region53
    $region52: #{mlp_forward.1} parent=1 // pred_region
      _
    $region53: #{mlp_forward.1} parent=1 // pred_fallthru
      _
    // Predicated region
    $region54: #{mlp_forward.1} parent=1 // pred_check
      _
    $region55: #{mlp_forward.1} parent=1 // pred_check_branch
      %92 = sbr.rel (0) target = $region57
    $region56: #{mlp_forward.1} parent=1 // pred_region
      _
    $region57: #{mlp_forward.1} parent=1 // pred_fallthru
      _
    // Predicated region
    $region58: #{mlp_forward.1} parent=1 // pred_check
      _
    $region59: #{mlp_forward.1} parent=1 // pred_check_branch
      %94 = sbr.rel (0) target = $region61
    $region60: #{mlp_forward.1} parent=1 // pred_region
      _
    $region61: #{mlp_forward.1} parent=1 // pred_fallthru
      _
    // Predicated region
    $region62: #{mlp_forward.1} parent=1 // pred_check
      _
    $region63: #{mlp_forward.1} parent=1 // pred_check_branch
      %96 = sbr.rel (0) target = $region65
    $region64: #{mlp_forward.1} parent=1 // pred_region
      %97 = dma.done [#allocation4], 32768
    $region65: #{mlp_forward.1} parent=1 // pred_fallthru
      _
    // Predicated region
    $region66: #{mlp_forward.1} parent=1 // pred_check
      _
    $region67: #{mlp_forward.1} parent=1 // pred_check_branch
      %99 = sbr.rel (0) target = $region69
    $region68: #{mlp_forward.1} parent=1 // pred_region
      %100 = dma.done [#allocation6], 32768
    $region69: #{mlp_forward.1} parent=1 // pred_fallthru
      _
    // Predicated region
    $region70: #{mlp_forward.1} parent=1 // pred_check
      _
    $region71: #{mlp_forward.1} parent=1 // pred_check_branch
      %102 = sbr.rel (0) target = $region73
    $region72: #{mlp_forward.1} parent=1 // pred_region
      %103 = dma.done [#allocation6], 8192
    $region73: #{mlp_forward.1} parent=1 // pred_fallthru
      _
    // Predicated region
    $region74: #{mlp_forward.1} parent=1 // pred_check
      _
    $region75: #{mlp_forward.1} parent=1 // pred_check_branch
      %105 = sbr.rel (0) target = $region77
    $region76: #{mlp_forward.1} parent=1 // pred_region
      %106 = dma.done [#allocation9], 2048
    $region77: #{mlp_forward.1} parent=1 // pred_fallthru
      _
    %v108 = vld [vmem:[%s0] sm:$0xff]
    %v109 = vld [vmem:[%s0 + $0x8] sm:$0xff]
    %v110 = vpack.c.bf16 %v109, %v108
    %v111 = vld [vmem:[%s1] sm:$0xff]
    %v112 = vld [vmem:[%s1 + $0x8] sm:$0xff]
    %v113 = vld [vmem:[%s1 + $0x10] sm:$0xff]
    %v114 = vld [vmem:[%s1 + $0x18] sm:$0xff]
    %v115 = vld [vmem:[%s2] sm:$0xf]
    %v117 = vlaneseq
    %v118 = vshrl.u32 %v117, 7
    %v119 = vsub.s32 0, %v118
    %v120 = vrot.slane %v115, %v119
    %v121 = vlaneseq
    %v122 = vshrl.u32 %v121, 7
    %v123 = vsub.s32 1, %v122
    %v124 = vrot.slane %v115, %v123
    %v125 = vlaneseq
    %v126 = vshrl.u32 %v125, 7
    %v127 = vsub.s32 2, %v126
    %v128 = vrot.slane %v115, %v127
    %v129 = vlaneseq
    %v130 = vshrl.u32 %v129, 7
    %v131 = vsub.s32 3, %v130
    %v132 = vrot.slane %v115, %v131
    %v141 = vunpack.c.l.b16 %v111
    %v142 = vunpack.c.h.b16 %v111
    %v143 = vunpack.c.l.b16 %v112
    %v144 = vunpack.c.h.b16 %v112
    %v145 = vunpack.c.l.b16 %v113
    %v146 = vunpack.c.h.b16 %v113
    %v147 = vunpack.c.l.b16 %v114
    %v148 = vunpack.c.h.b16 %v114
    %v149 = vpack.c.b16 %v145, %v141
    %v150 = vpack.c.b16 %v146, %v142
    %v151 = vpack.c.b16 %v147, %v143
    %v152 = vpack.c.b16 %v148, %v144
    %vm153 = vcmask 121856
    %v155 = vsel %vm153, %v110, 0
    %vm157 = vcmask 1046528
    %vm158 = vcmask 1047552
    %v159 = vsel %vm157, 4294967295, 65535
    %v160 = vsel %vm158, %v159, 0
    %v162 = vand.u32 %v149, %v160
    %v165 = vand.u32 %v150, %v160
    %v168 = vand.u32 %v151, %v160
    %v171 = vand.u32 %v152, %v160
    %173 = vmatprep.subr.bf16.mxu0 0
    %174 = vmatpush1.bf16.msra.mxu0 0
    %175 = vmatprep.subr.bf16.mxu0 0
    %176 = vmatpush1.bf16.msra.mxu0 0
    %177 = vmatprep.subr.bf16.mxu0 0
    %178 = vmatpush1.bf16.msra.mxu0 0
    %179 = vmatprep.subr.bf16.mxu0 0
    %180 = vmatpush1.bf16.msra.mxu0 0
    %181 = vmatprep.subr.bf16.mxu0 0
    %182 = vmatpush1.bf16.msra.mxu0 0
    %183 = vmatprep.subr.bf16.mxu0 0
    %184 = vmatpush1.bf16.msra.mxu0 0
    %185 = vmatprep.subr.bf16.mxu0 0
    %186 = vmatpush1.bf16.msra.mxu0 0
    %187 = vmatprep.subr.bf16.mxu0 %v165
    %188 = vmatpush1.bf16.msra.mxu0 %v162
    %189 = vmatprep.subr.bf16.mxu0 0
    %190 = vmatpush2.bf16.msra.mxu0 0
    %191 = vmatprep.subr.bf16.mxu0 0
    %192 = vmatpush2.bf16.msra.mxu0 0
    %193 = vmatprep.subr.bf16.mxu0 0
    %194 = vmatpush2.bf16.msra.mxu0 0
    %195 = vmatprep.subr.bf16.mxu0 0
    %196 = vmatpush2.bf16.msra.mxu0 0
    %197 = vmatprep.subr.bf16.mxu0 0
    %198 = vmatpush2.bf16.msra.mxu0 0
    %199 = vmatprep.subr.bf16.mxu0 0
    %200 = vmatpush2.bf16.msra.mxu0 0
    %201 = vmatprep.subr.bf16.mxu0 0
    %202 = vmatpush2.bf16.msra.mxu0 0
    %203 = vmatprep.subr.bf16.mxu0 0
    %204 = vmatpush2.bf16.msra.mxu0 0
    %205 = vmatprep.mubr.bf16.mxu0 0
    %206 = vmatmul.mubr.bf16.gmra.mxu0 %v155
    %v207 = vpop.f32.mrf.mxu0
    %v208 = vadd.f32 %v120, %v207
    %v209 = vpop.f32.mrf.mxu0
    %v210 = vadd.f32 %v124, %v209
    %v211 = vpop.f32.mrf.mxu0
    %v212 = vadd.f32 %v120, %v211
    %v213 = vpop.f32.mrf.mxu0
    %v214 = vadd.f32 %v124, %v213
    %215 = vdwg.mxu0
    %216 = vmatprep.subr.bf16.mxu0 0
    %217 = vmatpush1.bf16.msra.mxu0 0
    %218 = vmatprep.subr.bf16.mxu0 0
    %219 = vmatpush1.bf16.msra.mxu0 0
    %220 = vmatprep.subr.bf16.mxu0 0
    %221 = vmatpush1.bf16.msra.mxu0 0
    %222 = vmatprep.subr.bf16.mxu0 0
    %223 = vmatpush1.bf16.msra.mxu0 0
    %224 = vmatprep.subr.bf16.mxu0 0
    %225 = vmatpush1.bf16.msra.mxu0 0
    %226 = vmatprep.subr.bf16.mxu0 0
    %227 = vmatpush1.bf16.msra.mxu0 0
    %228 = vmatprep.subr.bf16.mxu0 0
    %229 = vmatpush1.bf16.msra.mxu0 0
    %230 = vmatprep.subr.bf16.mxu0 %v171
    %231 = vmatpush1.bf16.msra.mxu0 %v168
    %232 = vmatprep.subr.bf16.mxu0 0
    %233 = vmatpush2.bf16.msra.mxu0 0
    %234 = vmatprep.subr.bf16.mxu0 0
    %235 = vmatpush2.bf16.msra.mxu0 0
    %236 = vmatprep.subr.bf16.mxu0 0
    %237 = vmatpush2.bf16.msra.mxu0 0
    %238 = vmatprep.subr.bf16.mxu0 0
    %239 = vmatpush2.bf16.msra.mxu0 0
    %240 = vmatprep.subr.bf16.mxu0 0
    %241 = vmatpush2.bf16.msra.mxu0 0
    %242 = vmatprep.subr.bf16.mxu0 0
    %243 = vmatpush2.bf16.msra.mxu0 0
    %244 = vmatprep.subr.bf16.mxu0 0
    %245 = vmatpush2.bf16.msra.mxu0 0
    %246 = vmatprep.subr.bf16.mxu0 0
    %247 = vmatpush2.bf16.msra.mxu0 0
    %248 = vmatprep.mubr.bf16.mxu0 0
    %249 = vmatmul.mubr.bf16.gmra.mxu0 %v155
    %v250 = vpop.f32.mrf.mxu0
    %v251 = vadd.f32 %v128, %v250
    %v252 = vpop.f32.mrf.mxu0
    %v253 = vadd.f32 %v132, %v252
    %v254 = vpop.f32.mrf.mxu0
    %v255 = vadd.f32 %v128, %v254
    %v256 = vpop.f32.mrf.mxu0
    %v257 = vadd.f32 %v132, %v256
    %258 = vdwg.mxu0
    %v259 = vmax.f32 %v208, 0.0
    %v260 = vmax.f32 %v210, 0.0
    %v261 = vmax.f32 %v251, 0.0
    %v262 = vmax.f32 %v253, 0.0
    %v263 = vmax.f32 %v212, 0.0
    %v264 = vmax.f32 %v214, 0.0
    %v265 = vmax.f32 %v255, 0.0
    %v266 = vmax.f32 %v257, 0.0
    %v267 = vpack.c.bf16 %v263, %v259
    %v268 = vpack.c.bf16 %v264, %v260
    %v269 = vpack.c.bf16 %v265, %v261
    %v270 = vpack.c.bf16 %v266, %v262
    %v271 = vld [vmem:[#allocation3] sm:$0xff]
    %v272 = vld [vmem:[#allocation3 + $0x8] sm:$0xff]
    %v273 = vld [vmem:[#allocation3 + $0x10] sm:$0xff]
    %v274 = vld [vmem:[#allocation3 + $0x18] sm:$0xff]
    %v275 = vld [vmem:[#allocation3 + $0x20] sm:$0xff]
    %v276 = vld [vmem:[#allocation3 + $0x28] sm:$0xff]
    %v277 = vld [vmem:[#allocation3 + $0x30] sm:$0xff]
    %v278 = vld [vmem:[#allocation3 + $0x38] sm:$0xff]
    %v279 = vld [vmem:[#allocation3 + $0x40] sm:$0xff]
    %v280 = vld [vmem:[#allocation3 + $0x48] sm:$0xff]
    %v281 = vld [vmem:[#allocation3 + $0x50] sm:$0xff]
    %v282 = vld [vmem:[#allocation3 + $0x58] sm:$0xff]
    %v283 = vld [vmem:[#allocation3 + $0x60] sm:$0xff]
    %v284 = vld [vmem:[#allocation3 + $0x68] sm:$0xff]
    %v285 = vld [vmem:[#allocation3 + $0x70] sm:$0xff]
    %v286 = vld [vmem:[#allocation3 + $0x78] sm:$0xff]
    %v287 = vld [vmem:[#allocation3 + $0x80] sm:$0xff]
    %v288 = vld [vmem:[#allocation3 + $0x88] sm:$0xff]
    %v289 = vld [vmem:[#allocation3 + $0x90] sm:$0xff]
    %v290 = vld [vmem:[#allocation3 + $0x98] sm:$0xff]
    %v291 = vld [vmem:[#allocation3 + $0xa0] sm:$0xff]
    %v292 = vld [vmem:[#allocation3 + $0xa8] sm:$0xff]
    %v293 = vld [vmem:[#allocation3 + $0xb0] sm:$0xff]
    %v294 = vld [vmem:[#allocation3 + $0xb8] sm:$0xff]
    %v295 = vld [vmem:[#allocation3 + $0xc0] sm:$0xff]
    %v296 = vld [vmem:[#allocation3 + $0xc8] sm:$0xff]
    %v297 = vld [vmem:[#allocation3 + $0xd0] sm:$0xff]
    %v298 = vld [vmem:[#allocation3 + $0xd8] sm:$0xff]
    %v299 = vld [vmem:[#allocation3 + $0xe0] sm:$0xff]
    %v300 = vld [vmem:[#allocation3 + $0xe8] sm:$0xff]
    %v301 = vld [vmem:[#allocation3 + $0xf0] sm:$0xff]
    %v302 = vld [vmem:[#allocation3 + $0xf8] sm:$0xff]
    %v303 = vld [vmem:[#allocation3 + $0x100] sm:$0xff]
    %v304 = vld [vmem:[#allocation3 + $0x108] sm:$0xff]
    %v305 = vld [vmem:[#allocation3 + $0x110] sm:$0xff]
    %v306 = vld [vmem:[#allocation3 + $0x118] sm:$0xff]
    %v307 = vld [vmem:[#allocation3 + $0x120] sm:$0xff]
    %v308 = vld [vmem:[#allocation3 + $0x128] sm:$0xff]
    %v309 = vld [vmem:[#allocation3 + $0x130] sm:$0xff]
    %v310 = vld [vmem:[#allocation3 + $0x138] sm:$0xff]
    %v311 = vld [vmem:[#allocation3 + $0x140] sm:$0xff]
    %v312 = vld [vmem:[#allocation3 + $0x148] sm:$0xff]
    %v313 = vld [vmem:[#allocation3 + $0x150] sm:$0xff]
    %v314 = vld [vmem:[#allocation3 + $0x158] sm:$0xff]
    %v315 = vld [vmem:[#allocation3 + $0x160] sm:$0xff]
    %v316 = vld [vmem:[#allocation3 + $0x168] sm:$0xff]
    %v317 = vld [vmem:[#allocation3 + $0x170] sm:$0xff]
    %v318 = vld [vmem:[#allocation3 + $0x178] sm:$0xff]
    %v319 = vld [vmem:[#allocation3 + $0x180] sm:$0xff]
    %v320 = vld [vmem:[#allocation3 + $0x188] sm:$0xff]
    %v321 = vld [vmem:[#allocation3 + $0x190] sm:$0xff]
    %v322 = vld [vmem:[#allocation3 + $0x198] sm:$0xff]
    %v323 = vld [vmem:[#allocation3 + $0x1a0] sm:$0xff]
    %v324 = vld [vmem:[#allocation3 + $0x1a8] sm:$0xff]
    %v325 = vld [vmem:[#allocation3 + $0x1b0] sm:$0xff]
    %v326 = vld [vmem:[#allocation3 + $0x1b8] sm:$0xff]
    %v327 = vld [vmem:[#allocation3 + $0x1c0] sm:$0xff]
    %v328 = vld [vmem:[#allocation3 + $0x1c8] sm:$0xff]
    %v329 = vld [vmem:[#allocation3 + $0x1d0] sm:$0xff]
    %v330 = vld [vmem:[#allocation3 + $0x1d8] sm:$0xff]
    %v331 = vld [vmem:[#allocation3 + $0x1e0] sm:$0xff]
    %v332 = vld [vmem:[#allocation3 + $0x1e8] sm:$0xff]
    %v333 = vld [vmem:[#allocation3 + $0x1f0] sm:$0xff]
    %v334 = vld [vmem:[#allocation3 + $0x1f8] sm:$0xff]
    %v335 = vld [vmem:[#allocation3 + $0x200] sm:$0xff]
    %v336 = vld [vmem:[#allocation3 + $0x208] sm:$0xff]
    %v337 = vld [vmem:[#allocation3 + $0x210] sm:$0xff]
    %v338 = vld [vmem:[#allocation3 + $0x218] sm:$0xff]
    %v339 = vld [vmem:[#allocation3 + $0x220] sm:$0xff]
    %v340 = vld [vmem:[#allocation3 + $0x228] sm:$0xff]
    %v341 = vld [vmem:[#allocation3 + $0x230] sm:$0xff]
    %v342 = vld [vmem:[#allocation3 + $0x238] sm:$0xff]
    %v343 = vld [vmem:[#allocation3 + $0x240] sm:$0xff]
    %v344 = vld [vmem:[#allocation3 + $0x248] sm:$0xff]
    %v345 = vld [vmem:[#allocation3 + $0x250] sm:$0xff]
    %v346 = vld [vmem:[#allocation3 + $0x258] sm:$0xff]
    %v347 = vld [vmem:[#allocation3 + $0x260] sm:$0xff]
    %v348 = vld [vmem:[#allocation3 + $0x268] sm:$0xff]
    %v349 = vld [vmem:[#allocation3 + $0x270] sm:$0xff]
    %v350 = vld [vmem:[#allocation3 + $0x278] sm:$0xff]
    %v351 = vld [vmem:[#allocation3 + $0x280] sm:$0xff]
    %v352 = vld [vmem:[#allocation3 + $0x288] sm:$0xff]
    %v353 = vld [vmem:[#allocation3 + $0x290] sm:$0xff]
    %v354 = vld [vmem:[#allocation3 + $0x298] sm:$0xff]
    %v355 = vld [vmem:[#allocation3 + $0x2a0] sm:$0xff]
    %v356 = vld [vmem:[#allocation3 + $0x2a8] sm:$0xff]
    %v357 = vld [vmem:[#allocation3 + $0x2b0] sm:$0xff]
    %v358 = vld [vmem:[#allocation3 + $0x2b8] sm:$0xff]
    %v359 = vld [vmem:[#allocation3 + $0x2c0] sm:$0xff]
    %v360 = vld [vmem:[#allocation3 + $0x2c8] sm:$0xff]
    %v361 = vld [vmem:[#allocation3 + $0x2d0] sm:$0xff]
    %v362 = vld [vmem:[#allocation3 + $0x2d8] sm:$0xff]
    %v363 = vld [vmem:[#allocation3 + $0x2e0] sm:$0xff]
    %v364 = vld [vmem:[#allocation3 + $0x2e8] sm:$0xff]
    %v365 = vld [vmem:[#allocation3 + $0x2f0] sm:$0xff]
    %v366 = vld [vmem:[#allocation3 + $0x2f8] sm:$0xff]
    %v367 = vld [vmem:[#allocation3 + $0x300] sm:$0xff]
    %v368 = vld [vmem:[#allocation3 + $0x308] sm:$0xff]
    %v369 = vld [vmem:[#allocation3 + $0x310] sm:$0xff]
    %v370 = vld [vmem:[#allocation3 + $0x318] sm:$0xff]
    %v371 = vld [vmem:[#allocation3 + $0x320] sm:$0xff]
    %v372 = vld [vmem:[#allocation3 + $0x328] sm:$0xff]
    %v373 = vld [vmem:[#allocation3 + $0x330] sm:$0xff]
    %v374 = vld [vmem:[#allocation3 + $0x338] sm:$0xff]
    %v375 = vld [vmem:[#allocation3 + $0x340] sm:$0xff]
    %v376 = vld [vmem:[#allocation3 + $0x348] sm:$0xff]
    %v377 = vld [vmem:[#allocation3 + $0x350] sm:$0xff]
    %v378 = vld [vmem:[#allocation3 + $0x358] sm:$0xff]
    %v379 = vld [vmem:[#allocation3 + $0x360] sm:$0xff]
    %v380 = vld [vmem:[#allocation3 + $0x368] sm:$0xff]
    %v381 = vld [vmem:[#allocation3 + $0x370] sm:$0xff]
    %v382 = vld [vmem:[#allocation3 + $0x378] sm:$0xff]
    %v383 = vld [vmem:[#allocation3 + $0x380] sm:$0xff]
    %v384 = vld [vmem:[#allocation3 + $0x388] sm:$0xff]
    %v385 = vld [vmem:[#allocation3 + $0x390] sm:$0xff]
    %v386 = vld [vmem:[#allocation3 + $0x398] sm:$0xff]
    %v387 = vld [vmem:[#allocation3 + $0x3a0] sm:$0xff]
    %v388 = vld [vmem:[#allocation3 + $0x3a8] sm:$0xff]
    %v389 = vld [vmem:[#allocation3 + $0x3b0] sm:$0xff]
    %v390 = vld [vmem:[#allocation3 + $0x3b8] sm:$0xff]
    %v391 = vld [vmem:[#allocation3 + $0x3c0] sm:$0xff]
    %v392 = vld [vmem:[#allocation3 + $0x3c8] sm:$0xff]
    %v393 = vld [vmem:[#allocation3 + $0x3d0] sm:$0xff]
    %v394 = vld [vmem:[#allocation3 + $0x3d8] sm:$0xff]
    %v395 = vld [vmem:[#allocation3 + $0x3e0] sm:$0xff]
    %v396 = vld [vmem:[#allocation3 + $0x3e8] sm:$0xff]
    %v397 = vld [vmem:[#allocation3 + $0x3f0] sm:$0xff]
    %v398 = vld [vmem:[#allocation3 + $0x3f8] sm:$0xff]
    %v399 = vld [vmem:[#allocation3 + $0x400] sm:$0xff]
    %v400 = vld [vmem:[#allocation3 + $0x408] sm:$0xff]
    %v401 = vld [vmem:[#allocation3 + $0x410] sm:$0xff]
    %v402 = vld [vmem:[#allocation3 + $0x418] sm:$0xff]
    %v403 = vld [vmem:[#allocation3 + $0x420] sm:$0xff]
    %v404 = vld [vmem:[#allocation3 + $0x428] sm:$0xff]
    %v405 = vld [vmem:[#allocation3 + $0x430] sm:$0xff]
    %v406 = vld [vmem:[#allocation3 + $0x438] sm:$0xff]
    %v407 = vld [vmem:[#allocation3 + $0x440] sm:$0xff]
    %v408 = vld [vmem:[#allocation3 + $0x448] sm:$0xff]
    %v409 = vld [vmem:[#allocation3 + $0x450] sm:$0xff]
    %v410 = vld [vmem:[#allocation3 + $0x458] sm:$0xff]
    %v411 = vld [vmem:[#allocation3 + $0x460] sm:$0xff]
    %v412 = vld [vmem:[#allocation3 + $0x468] sm:$0xff]
    %v413 = vld [vmem:[#allocation3 + $0x470] sm:$0xff]
    %v414 = vld [vmem:[#allocation3 + $0x478] sm:$0xff]
    %v415 = vld [vmem:[#allocation3 + $0x480] sm:$0xff]
    %v416 = vld [vmem:[#allocation3 + $0x488] sm:$0xff]
    %v417 = vld [vmem:[#allocation3 + $0x490] sm:$0xff]
    %v418 = vld [vmem:[#allocation3 + $0x498] sm:$0xff]
    %v419 = vld [vmem:[#allocation3 + $0x4a0] sm:$0xff]
    %v420 = vld [vmem:[#allocation3 + $0x4a8] sm:$0xff]
    %v421 = vld [vmem:[#allocation3 + $0x4b0] sm:$0xff]
    %v422 = vld [vmem:[#allocation3 + $0x4b8] sm:$0xff]
    %v423 = vld [vmem:[#allocation3 + $0x4c0] sm:$0xff]
    %v424 = vld [vmem:[#allocation3 + $0x4c8] sm:$0xff]
    %v425 = vld [vmem:[#allocation3 + $0x4d0] sm:$0xff]
    %v426 = vld [vmem:[#allocation3 + $0x4d8] sm:$0xff]
    %v427 = vld [vmem:[#allocation3 + $0x4e0] sm:$0xff]
    %v428 = vld [vmem:[#allocation3 + $0x4e8] sm:$0xff]
    %v429 = vld [vmem:[#allocation3 + $0x4f0] sm:$0xff]
    %v430 = vld [vmem:[#allocation3 + $0x4f8] sm:$0xff]
    %v431 = vld [vmem:[#allocation3 + $0x500] sm:$0xff]
    %v432 = vld [vmem:[#allocation3 + $0x508] sm:$0xff]
    %v433 = vld [vmem:[#allocation3 + $0x510] sm:$0xff]
    %v434 = vld [vmem:[#allocation3 + $0x518] sm:$0xff]
    %v435 = vld [vmem:[#allocation3 + $0x520] sm:$0xff]
    %v436 = vld [vmem:[#allocation3 + $0x528] sm:$0xff]
    %v437 = vld [vmem:[#allocation3 + $0x530] sm:$0xff]
    %v438 = vld [vmem:[#allocation3 + $0x538] sm:$0xff]
    %v439 = vld [vmem:[#allocation3 + $0x540] sm:$0xff]
    %v440 = vld [vmem:[#allocation3 + $0x548] sm:$0xff]
    %v441 = vld [vmem:[#allocation3 + $0x550] sm:$0xff]
    %v442 = vld [vmem:[#allocation3 + $0x558] sm:$0xff]
    %v443 = vld [vmem:[#allocation3 + $0x560] sm:$0xff]
    %v444 = vld [vmem:[#allocation3 + $0x568] sm:$0xff]
    %v445 = vld [vmem:[#allocation3 + $0x570] sm:$0xff]
    %v446 = vld [vmem:[#allocation3 + $0x578] sm:$0xff]
    %v447 = vld [vmem:[#allocation3 + $0x580] sm:$0xff]
    %v448 = vld [vmem:[#allocation3 + $0x588] sm:$0xff]
    %v449 = vld [vmem:[#allocation3 + $0x590] sm:$0xff]
    %v450 = vld [vmem:[#allocation3 + $0x598] sm:$0xff]
    %v451 = vld [vmem:[#allocation3 + $0x5a0] sm:$0xff]
    %v452 = vld [vmem:[#allocation3 + $0x5a8] sm:$0xff]
    %v453 = vld [vmem:[#allocation3 + $0x5b0] sm:$0xff]
    %v454 = vld [vmem:[#allocation3 + $0x5b8] sm:$0xff]
    %v455 = vld [vmem:[#allocation3 + $0x5c0] sm:$0xff]
    %v456 = vld [vmem:[#allocation3 + $0x5c8] sm:$0xff]
    %v457 = vld [vmem:[#allocation3 + $0x5d0] sm:$0xff]
    %v458 = vld [vmem:[#allocation3 + $0x5d8] sm:$0xff]
    %v459 = vld [vmem:[#allocation3 + $0x5e0] sm:$0xff]
    %v460 = vld [vmem:[#allocation3 + $0x5e8] sm:$0xff]
    %v461 = vld [vmem:[#allocation3 + $0x5f0] sm:$0xff]
    %v462 = vld [vmem:[#allocation3 + $0x5f8] sm:$0xff]
    %v463 = vld [vmem:[#allocation3 + $0x600] sm:$0xff]
    %v464 = vld [vmem:[#allocation3 + $0x608] sm:$0xff]
    %v465 = vld [vmem:[#allocation3 + $0x610] sm:$0xff]
    %v466 = vld [vmem:[#allocation3 + $0x618] sm:$0xff]
    %v467 = vld [vmem:[#allocation3 + $0x620] sm:$0xff]
    %v468 = vld [vmem:[#allocation3 + $0x628] sm:$0xff]
    %v469 = vld [vmem:[#allocation3 + $0x630] sm:$0xff]
    %v470 = vld [vmem:[#allocation3 + $0x638] sm:$0xff]
    %v471 = vld [vmem:[#allocation3 + $0x640] sm:$0xff]
    %v472 = vld [vmem:[#allocation3 + $0x648] sm:$0xff]
    %v473 = vld [vmem:[#allocation3 + $0x650] sm:$0xff]
    %v474 = vld [vmem:[#allocation3 + $0x658] sm:$0xff]
    %v475 = vld [vmem:[#allocation3 + $0x660] sm:$0xff]
    %v476 = vld [vmem:[#allocation3 + $0x668] sm:$0xff]
    %v477 = vld [vmem:[#allocation3 + $0x670] sm:$0xff]
    %v478 = vld [vmem:[#allocation3 + $0x678] sm:$0xff]
    %v479 = vld [vmem:[#allocation3 + $0x680] sm:$0xff]
    %v480 = vld [vmem:[#allocation3 + $0x688] sm:$0xff]
    %v481 = vld [vmem:[#allocation3 + $0x690] sm:$0xff]
    %v482 = vld [vmem:[#allocation3 + $0x698] sm:$0xff]
    %v483 = vld [vmem:[#allocation3 + $0x6a0] sm:$0xff]
    %v484 = vld [vmem:[#allocation3 + $0x6a8] sm:$0xff]
    %v485 = vld [vmem:[#allocation3 + $0x6b0] sm:$0xff]
    %v486 = vld [vmem:[#allocation3 + $0x6b8] sm:$0xff]
    %v487 = vld [vmem:[#allocation3 + $0x6c0] sm:$0xff]
    %v488 = vld [vmem:[#allocation3 + $0x6c8] sm:$0xff]
    %v489 = vld [vmem:[#allocation3 + $0x6d0] sm:$0xff]
    %v490 = vld [vmem:[#allocation3 + $0x6d8] sm:$0xff]
    %v491 = vld [vmem:[#allocation3 + $0x6e0] sm:$0xff]
    %v492 = vld [vmem:[#allocation3 + $0x6e8] sm:$0xff]
    %v493 = vld [vmem:[#allocation3 + $0x6f0] sm:$0xff]
    %v494 = vld [vmem:[#allocation3 + $0x6f8] sm:$0xff]
    %v495 = vld [vmem:[#allocation3 + $0x700] sm:$0xff]
    %v496 = vld [vmem:[#allocation3 + $0x708] sm:$0xff]
    %v497 = vld [vmem:[#allocation3 + $0x710] sm:$0xff]
    %v498 = vld [vmem:[#allocation3 + $0x718] sm:$0xff]
    %v499 = vld [vmem:[#allocation3 + $0x720] sm:$0xff]
    %v500 = vld [vmem:[#allocation3 + $0x728] sm:$0xff]
    %v501 = vld [vmem:[#allocation3 + $0x730] sm:$0xff]
    %v502 = vld [vmem:[#allocation3 + $0x738] sm:$0xff]
    %v503 = vld [vmem:[#allocation3 + $0x740] sm:$0xff]
    %v504 = vld [vmem:[#allocation3 + $0x748] sm:$0xff]
    %v505 = vld [vmem:[#allocation3 + $0x750] sm:$0xff]
    %v506 = vld [vmem:[#allocation3 + $0x758] sm:$0xff]
    %v507 = vld [vmem:[#allocation3 + $0x760] sm:$0xff]
    %v508 = vld [vmem:[#allocation3 + $0x768] sm:$0xff]
    %v509 = vld [vmem:[#allocation3 + $0x770] sm:$0xff]
    %v510 = vld [vmem:[#allocation3 + $0x778] sm:$0xff]
    %v511 = vld [vmem:[#allocation3 + $0x780] sm:$0xff]
    %v512 = vld [vmem:[#allocation3 + $0x788] sm:$0xff]
    %v513 = vld [vmem:[#allocation3 + $0x790] sm:$0xff]
    %v514 = vld [vmem:[#allocation3 + $0x798] sm:$0xff]
    %v515 = vld [vmem:[#allocation3 + $0x7a0] sm:$0xff]
    %v516 = vld [vmem:[#allocation3 + $0x7a8] sm:$0xff]
    %v517 = vld [vmem:[#allocation3 + $0x7b0] sm:$0xff]
    %v518 = vld [vmem:[#allocation3 + $0x7b8] sm:$0xff]
    %v519 = vld [vmem:[#allocation3 + $0x7c0] sm:$0xff]
    %v520 = vld [vmem:[#allocation3 + $0x7c8] sm:$0xff]
    %v521 = vld [vmem:[#allocation3 + $0x7d0] sm:$0xff]
    %v522 = vld [vmem:[#allocation3 + $0x7d8] sm:$0xff]
    %v523 = vld [vmem:[#allocation3 + $0x7e0] sm:$0xff]
    %v524 = vld [vmem:[#allocation3 + $0x7e8] sm:$0xff]
    %v525 = vld [vmem:[#allocation3 + $0x7f0] sm:$0xff]
    %v526 = vld [vmem:[#allocation3 + $0x7f8] sm:$0xff]
    %v527 = vld [vmem:[%s4] sm:$0xff]
    %v529 = vlaneseq
    %v530 = vshrl.u32 %v529, 7
    %v531 = vsub.s32 0, %v530
    %v532 = vrot.slane %v527, %v531
    %v533 = vlaneseq
    %v534 = vshrl.u32 %v533, 7
    %v535 = vsub.s32 1, %v534
    %v536 = vrot.slane %v527, %v535
    %v537 = vlaneseq
    %v538 = vshrl.u32 %v537, 7
    %v539 = vsub.s32 2, %v538
    %v540 = vrot.slane %v527, %v539
    %v541 = vlaneseq
    %v542 = vshrl.u32 %v541, 7
    %v543 = vsub.s32 3, %v542
    %v544 = vrot.slane %v527, %v543
    %v545 = vlaneseq
    %v546 = vshrl.u32 %v545, 7
    %v547 = vsub.s32 4, %v546
    %v548 = vrot.slane %v527, %v547
    %v549 = vlaneseq
    %v550 = vshrl.u32 %v549, 7
    %v551 = vsub.s32 5, %v550
    %v552 = vrot.slane %v527, %v551
    %v553 = vlaneseq
    %v554 = vshrl.u32 %v553, 7
    %v555 = vsub.s32 6, %v554
    %v556 = vrot.slane %v527, %v555
    %v557 = vlaneseq
    %v558 = vshrl.u32 %v557, 7
    %v559 = vsub.s32 7, %v558
    %v560 = vrot.slane %v527, %v559
    %v825 = vunpack.c.l.b16 %v271
    %v826 = vunpack.c.h.b16 %v271
    %v827 = vunpack.c.l.b16 %v272
    %v828 = vunpack.c.h.b16 %v272
    %v829 = vunpack.c.l.b16 %v273
    %v830 = vunpack.c.h.b16 %v273
    %v831 = vunpack.c.l.b16 %v274
    %v832 = vunpack.c.h.b16 %v274
    %v833 = vunpack.c.l.b16 %v275
    %v834 = vunpack.c.h.b16 %v275
    %v835 = vunpack.c.l.b16 %v276
    %v836 = vunpack.c.h.b16 %v276
    %v837 = vunpack.c.l.b16 %v277
    %v838 = vunpack.c.h.b16 %v277
    %v839 = vunpack.c.l.b16 %v278
    %v840 = vunpack.c.h.b16 %v278
    %v841 = vunpack.c.l.b16 %v279
    %v842 = vunpack.c.h.b16 %v279
    %v843 = vunpack.c.l.b16 %v280
    %v844 = vunpack.c.h.b16 %v280
    %v845 = vunpack.c.l.b16 %v281
    %v846 = vunpack.c.h.b16 %v281
    %v847 = vunpack.c.l.b16 %v282
    %v848 = vunpack.c.h.b16 %v282
    %v849 = vunpack.c.l.b16 %v283
    %v850 = vunpack.c.h.b16 %v283
    %v851 = vunpack.c.l.b16 %v284
    %v852 = vunpack.c.h.b16 %v284
    %v853 = vunpack.c.l.b16 %v285
    %v854 = vunpack.c.h.b16 %v285
    %v855 = vunpack.c.l.b16 %v286
    %v856 = vunpack.c.h.b16 %v286
    %v857 = vunpack.c.l.b16 %v287
    %v858 = vunpack.c.h.b16 %v287
    %v859 = vunpack.c.l.b16 %v288
    %v860 = vunpack.c.h.b16 %v288
    %v861 = vunpack.c.l.b16 %v289
    %v862 = vunpack.c.h.b16 %v289
    %v863 = vunpack.c.l.b16 %v290
    %v864 = vunpack.c.h.b16 %v290
    %v865 = vunpack.c.l.b16 %v291
    %v866 = vunpack.c.h.b16 %v291
    %v867 = vunpack.c.l.b16 %v292
    %v868 = vunpack.c.h.b16 %v292
    %v869 = vunpack.c.l.b16 %v293
    %v870 = vunpack.c.h.b16 %v293
    %v871 = vunpack.c.l.b16 %v294
    %v872 = vunpack.c.h.b16 %v294
    %v873 = vunpack.c.l.b16 %v295
    %v874 = vunpack.c.h.b16 %v295
    %v875 = vunpack.c.l.b16 %v296
    %v876 = vunpack.c.h.b16 %v296
    %v877 = vunpack.c.l.b16 %v297
    %v878 = vunpack.c.h.b16 %v297
    %v879 = vunpack.c.l.b16 %v298
    %v880 = vunpack.c.h.b16 %v298
    %v881 = vunpack.c.l.b16 %v299
    %v882 = vunpack.c.h.b16 %v299
    %v883 = vunpack.c.l.b16 %v300
    %v884 = vunpack.c.h.b16 %v300
    %v885 = vunpack.c.l.b16 %v301
    %v886 = vunpack.c.h.b16 %v301
    %v887 = vunpack.c.l.b16 %v302
    %v888 = vunpack.c.h.b16 %v302
    %v889 = vunpack.c.l.b16 %v303
    %v890 = vunpack.c.h.b16 %v303
    %v891 = vunpack.c.l.b16 %v304
    %v892 = vunpack.c.h.b16 %v304
    %v893 = vunpack.c.l.b16 %v305
    %v894 = vunpack.c.h.b16 %v305
    %v895 = vunpack.c.l.b16 %v306
    %v896 = vunpack.c.h.b16 %v306
    %v897 = vunpack.c.l.b16 %v307
    %v898 = vunpack.c.h.b16 %v307
    %v899 = vunpack.c.l.b16 %v308
    %v900 = vunpack.c.h.b16 %v308
    %v901 = vunpack.c.l.b16 %v309
    %v902 = vunpack.c.h.b16 %v309
    %v903 = vunpack.c.l.b16 %v310
    %v904 = vunpack.c.h.b16 %v310
    %v905 = vunpack.c.l.b16 %v311
    %v906 = vunpack.c.h.b16 %v311
    %v907 = vunpack.c.l.b16 %v312
    %v908 = vunpack.c.h.b16 %v312
    %v909 = vunpack.c.l.b16 %v313
    %v910 = vunpack.c.h.b16 %v313
    %v911 = vunpack.c.l.b16 %v314
    %v912 = vunpack.c.h.b16 %v314
    %v913 = vunpack.c.l.b16 %v315
    %v914 = vunpack.c.h.b16 %v315
    %v915 = vunpack.c.l.b16 %v316
    %v916 = vunpack.c.h.b16 %v316
    %v917 = vunpack.c.l.b16 %v317
    %v918 = vunpack.c.h.b16 %v317
    %v919 = vunpack.c.l.b16 %v318
    %v920 = vunpack.c.h.b16 %v318
    %v921 = vunpack.c.l.b16 %v319
    %v922 = vunpack.c.h.b16 %v319
    %v923 = vunpack.c.l.b16 %v320
    %v924 = vunpack.c.h.b16 %v320
    %v925 = vunpack.c.l.b16 %v321
    %v926 = vunpack.c.h.b16 %v321
    %v927 = vunpack.c.l.b16 %v322
    %v928 = vunpack.c.h.b16 %v322
    %v929 = vunpack.c.l.b16 %v323
    %v930 = vunpack.c.h.b16 %v323
    %v931 = vunpack.c.l.b16 %v324
    %v932 = vunpack.c.h.b16 %v324
    %v933 = vunpack.c.l.b16 %v325
    %v934 = vunpack.c.h.b16 %v325
    %v935 = vunpack.c.l.b16 %v326
    %v936 = vunpack.c.h.b16 %v326
    %v937 = vunpack.c.l.b16 %v327
    %v938 = vunpack.c.h.b16 %v327
    %v939 = vunpack.c.l.b16 %v328
    %v940 = vunpack.c.h.b16 %v328
    %v941 = vunpack.c.l.b16 %v329
    %v942 = vunpack.c.h.b16 %v329
    %v943 = vunpack.c.l.b16 %v330
    %v944 = vunpack.c.h.b16 %v330
    %v945 = vunpack.c.l.b16 %v331
    %v946 = vunpack.c.h.b16 %v331
    %v947 = vunpack.c.l.b16 %v332
    %v948 = vunpack.c.h.b16 %v332
    %v949 = vunpack.c.l.b16 %v333
    %v950 = vunpack.c.h.b16 %v333
    %v951 = vunpack.c.l.b16 %v334
    %v952 = vunpack.c.h.b16 %v334
    %v953 = vunpack.c.l.b16 %v335
    %v954 = vunpack.c.h.b16 %v335
    %v955 = vunpack.c.l.b16 %v336
    %v956 = vunpack.c.h.b16 %v336
    %v957 = vunpack.c.l.b16 %v337
    %v958 = vunpack.c.h.b16 %v337
    %v959 = vunpack.c.l.b16 %v338
    %v960 = vunpack.c.h.b16 %v338
    %v961 = vunpack.c.l.b16 %v339
    %v962 = vunpack.c.h.b16 %v339
    %v963 = vunpack.c.l.b16 %v340
    %v964 = vunpack.c.h.b16 %v340
    %v965 = vunpack.c.l.b16 %v341
    %v966 = vunpack.c.h.b16 %v341
    %v967 = vunpack.c.l.b16 %v342
    %v968 = vunpack.c.h.b16 %v342
    %v969 = vunpack.c.l.b16 %v343
    %v970 = vunpack.c.h.b16 %v343
    %v971 = vunpack.c.l.b16 %v344
    %v972 = vunpack.c.h.b16 %v344
    %v973 = vunpack.c.l.b16 %v345
    %v974 = vunpack.c.h.b16 %v345
    %v975 = vunpack.c.l.b16 %v346
    %v976 = vunpack.c.h.b16 %v346
    %v977 = vunpack.c.l.b16 %v347
    %v978 = vunpack.c.h.b16 %v347
    %v979 = vunpack.c.l.b16 %v348
    %v980 = vunpack.c.h.b16 %v348
    %v981 = vunpack.c.l.b16 %v349
    %v982 = vunpack.c.h.b16 %v349
    %v983 = vunpack.c.l.b16 %v350
    %v984 = vunpack.c.h.b16 %v350
    %v985 = vunpack.c.l.b16 %v351
    %v986 = vunpack.c.h.b16 %v351
    %v987 = vunpack.c.l.b16 %v352
    %v988 = vunpack.c.h.b16 %v352
    %v989 = vunpack.c.l.b16 %v353
    %v990 = vunpack.c.h.b16 %v353
    %v991 = vunpack.c.l.b16 %v354
    %v992 = vunpack.c.h.b16 %v354
    %v993 = vunpack.c.l.b16 %v355
    %v994 = vunpack.c.h.b16 %v355
    %v995 = vunpack.c.l.b16 %v356
    %v996 = vunpack.c.h.b16 %v356
    %v997 = vunpack.c.l.b16 %v357
    %v998 = vunpack.c.h.b16 %v357
    %v999 = vunpack.c.l.b16 %v358
    %v1000 = vunpack.c.h.b16 %v358
    %v1001 = vunpack.c.l.b16 %v359
    %v1002 = vunpack.c.h.b16 %v359
    %v1003 = vunpack.c.l.b16 %v360
    %v1004 = vunpack.c.h.b16 %v360
    %v1005 = vunpack.c.l.b16 %v361
    %v1006 = vunpack.c.h.b16 %v361
    %v1007 = vunpack.c.l.b16 %v362
    %v1008 = vunpack.c.h.b16 %v362
    %v1009 = vunpack.c.l.b16 %v363
    %v1010 = vunpack.c.h.b16 %v363
    %v1011 = vunpack.c.l.b16 %v364
    %v1012 = vunpack.c.h.b16 %v364
    %v1013 = vunpack.c.l.b16 %v365
    %v1014 = vunpack.c.h.b16 %v365
    %v1015 = vunpack.c.l.b16 %v366
    %v1016 = vunpack.c.h.b16 %v366
    %v1017 = vunpack.c.l.b16 %v367
    %v1018 = vunpack.c.h.b16 %v367
    %v1019 = vunpack.c.l.b16 %v368
    %v1020 = vunpack.c.h.b16 %v368
    %v1021 = vunpack.c.l.b16 %v369
    %v1022 = vunpack.c.h.b16 %v369
    %v1023 = vunpack.c.l.b16 %v370
    %v1024 = vunpack.c.h.b16 %v370
    %v1025 = vunpack.c.l.b16 %v371
    %v1026 = vunpack.c.h.b16 %v371
    %v1027 = vunpack.c.l.b16 %v372
    %v1028 = vunpack.c.h.b16 %v372
    %v1029 = vunpack.c.l.b16 %v373
    %v1030 = vunpack.c.h.b16 %v373
    %v1031 = vunpack.c.l.b16 %v374
    %v1032 = vunpack.c.h.b16 %v374
    %v1033 = vunpack.c.l.b16 %v375
    %v1034 = vunpack.c.h.b16 %v375
    %v1035 = vunpack.c.l.b16 %v376
    %v1036 = vunpack.c.h.b16 %v376
    %v1037 = vunpack.c.l.b16 %v377
    %v1038 = vunpack.c.h.b16 %v377
    %v1039 = vunpack.c.l.b16 %v378
    %v1040 = vunpack.c.h.b16 %v378
    %v1041 = vunpack.c.l.b16 %v379
    %v1042 = vunpack.c.h.b16 %v379
    %v1043 = vunpack.c.l.b16 %v380
    %v1044 = vunpack.c.h.b16 %v380
    %v1045 = vunpack.c.l.b16 %v381
    %v1046 = vunpack.c.h.b16 %v381
    %v1047 = vunpack.c.l.b16 %v382
    %v1048 = vunpack.c.h.b16 %v382
    %v1049 = vunpack.c.l.b16 %v383
    %v1050 = vunpack.c.h.b16 %v383
    %v1051 = vunpack.c.l.b16 %v384
    %v1052 = vunpack.c.h.b16 %v384
    %v1053 = vunpack.c.l.b16 %v385
    %v1054 = vunpack.c.h.b16 %v385
    %v1055 = vunpack.c.l.b16 %v386
    %v1056 = vunpack.c.h.b16 %v386
    %v1057 = vunpack.c.l.b16 %v387
    %v1058 = vunpack.c.h.b16 %v387
    %v1059 = vunpack.c.l.b16 %v388
    %v1060 = vunpack.c.h.b16 %v388
    %v1061 = vunpack.c.l.b16 %v389
    %v1062 = vunpack.c.h.b16 %v389
    %v1063 = vunpack.c.l.b16 %v390
    %v1064 = vunpack.c.h.b16 %v390
    %v1065 = vunpack.c.l.b16 %v391
    %v1066 = vunpack.c.h.b16 %v391
    %v1067 = vunpack.c.l.b16 %v392
    %v1068 = vunpack.c.h.b16 %v392
    %v1069 = vunpack.c.l.b16 %v393
    %v1070 = vunpack.c.h.b16 %v393
    %v1071 = vunpack.c.l.b16 %v394
    %v1072 = vunpack.c.h.b16 %v394
    %v1073 = vunpack.c.l.b16 %v395
    %v1074 = vunpack.c.h.b16 %v395
    %v1075 = vunpack.c.l.b16 %v396
    %v1076 = vunpack.c.h.b16 %v396
    %v1077 = vunpack.c.l.b16 %v397
    %v1078 = vunpack.c.h.b16 %v397
    %v1079 = vunpack.c.l.b16 %v398
    %v1080 = vunpack.c.h.b16 %v398
    %v1081 = vunpack.c.l.b16 %v399
    %v1082 = vunpack.c.h.b16 %v399
    %v1083 = vunpack.c.l.b16 %v400
    %v1084 = vunpack.c.h.b16 %v400
    %v1085 = vunpack.c.l.b16 %v401
    %v1086 = vunpack.c.h.b16 %v401
    %v1087 = vunpack.c.l.b16 %v402
    %v1088 = vunpack.c.h.b16 %v402
    %v1089 = vunpack.c.l.b16 %v403
    %v1090 = vunpack.c.h.b16 %v403
    %v1091 = vunpack.c.l.b16 %v404
    %v1092 = vunpack.c.h.b16 %v404
    %v1093 = vunpack.c.l.b16 %v405
    %v1094 = vunpack.c.h.b16 %v405
    %v1095 = vunpack.c.l.b16 %v406
    %v1096 = vunpack.c.h.b16 %v406
    %v1097 = vunpack.c.l.b16 %v407
    %v1098 = vunpack.c.h.b16 %v407
    %v1099 = vunpack.c.l.b16 %v408
    %v1100 = vunpack.c.h.b16 %v408
    %v1101 = vunpack.c.l.b16 %v409
    %v1102 = vunpack.c.h.b16 %v409
    %v1103 = vunpack.c.l.b16 %v410
    %v1104 = vunpack.c.h.b16 %v410
    %v1105 = vunpack.c.l.b16 %v411
    %v1106 = vunpack.c.h.b16 %v411
    %v1107 = vunpack.c.l.b16 %v412
    %v1108 = vunpack.c.h.b16 %v412
    %v1109 = vunpack.c.l.b16 %v413
    %v1110 = vunpack.c.h.b16 %v413
    %v1111 = vunpack.c.l.b16 %v414
    %v1112 = vunpack.c.h.b16 %v414
    %v1113 = vunpack.c.l.b16 %v415
    %v1114 = vunpack.c.h.b16 %v415
    %v1115 = vunpack.c.l.b16 %v416
    %v1116 = vunpack.c.h.b16 %v416
    %v1117 = vunpack.c.l.b16 %v417
    %v1118 = vunpack.c.h.b16 %v417
    %v1119 = vunpack.c.l.b16 %v418
    %v1120 = vunpack.c.h.b16 %v418
    %v1121 = vunpack.c.l.b16 %v419
    %v1122 = vunpack.c.h.b16 %v419
    %v1123 = vunpack.c.l.b16 %v420
    %v1124 = vunpack.c.h.b16 %v420
    %v1125 = vunpack.c.l.b16 %v421
    %v1126 = vunpack.c.h.b16 %v421
    %v1127 = vunpack.c.l.b16 %v422
    %v1128 = vunpack.c.h.b16 %v422
    %v1129 = vunpack.c.l.b16 %v423
    %v1130 = vunpack.c.h.b16 %v423
    %v1131 = vunpack.c.l.b16 %v424
    %v1132 = vunpack.c.h.b16 %v424
    %v1133 = vunpack.c.l.b16 %v425
    %v1134 = vunpack.c.h.b16 %v425
    %v1135 = vunpack.c.l.b16 %v426
    %v1136 = vunpack.c.h.b16 %v426
    %v1137 = vunpack.c.l.b16 %v427
    %v1138 = vunpack.c.h.b16 %v427
    %v1139 = vunpack.c.l.b16 %v428
    %v1140 = vunpack.c.h.b16 %v428
    %v1141 = vunpack.c.l.b16 %v429
    %v1142 = vunpack.c.h.b16 %v429
    %v1143 = vunpack.c.l.b16 %v430
    %v1144 = vunpack.c.h.b16 %v430
    %v1145 = vunpack.c.l.b16 %v431
    %v1146 = vunpack.c.h.b16 %v431
    %v1147 = vunpack.c.l.b16 %v432
    %v1148 = vunpack.c.h.b16 %v432
    %v1149 = vunpack.c.l.b16 %v433
    %v1150 = vunpack.c.h.b16 %v433
    %v1151 = vunpack.c.l.b16 %v434
    %v1152 = vunpack.c.h.b16 %v434
    %v1153 = vunpack.c.l.b16 %v435
    %v1154 = vunpack.c.h.b16 %v435
    %v1155 = vunpack.c.l.b16 %v436
    %v1156 = vunpack.c.h.b16 %v436
    %v1157 = vunpack.c.l.b16 %v437
    %v1158 = vunpack.c.h.b16 %v437
    %v1159 = vunpack.c.l.b16 %v438
    %v1160 = vunpack.c.h.b16 %v438
    %v1161 = vunpack.c.l.b16 %v439
    %v1162 = vunpack.c.h.b16 %v439
    %v1163 = vunpack.c.l.b16 %v440
    %v1164 = vunpack.c.h.b16 %v440
    %v1165 = vunpack.c.l.b16 %v441
    %v1166 = vunpack.c.h.b16 %v441
    %v1167 = vunpack.c.l.b16 %v442
    %v1168 = vunpack.c.h.b16 %v442
    %v1169 = vunpack.c.l.b16 %v443
    %v1170 = vunpack.c.h.b16 %v443
    %v1171 = vunpack.c.l.b16 %v444
    %v1172 = vunpack.c.h.b16 %v444
    %v1173 = vunpack.c.l.b16 %v445
    %v1174 = vunpack.c.h.b16 %v445
    %v1175 = vunpack.c.l.b16 %v446
    %v1176 = vunpack.c.h.b16 %v446
    %v1177 = vunpack.c.l.b16 %v447
    %v1178 = vunpack.c.h.b16 %v447
    %v1179 = vunpack.c.l.b16 %v448
    %v1180 = vunpack.c.h.b16 %v448
    %v1181 = vunpack.c.l.b16 %v449
    %v1182 = vunpack.c.h.b16 %v449
    %v1183 = vunpack.c.l.b16 %v450
    %v1184 = vunpack.c.h.b16 %v450
    %v1185 = vunpack.c.l.b16 %v451
    %v1186 = vunpack.c.h.b16 %v451
    %v1187 = vunpack.c.l.b16 %v452
    %v1188 = vunpack.c.h.b16 %v452
    %v1189 = vunpack.c.l.b16 %v453
    %v1190 = vunpack.c.h.b16 %v453
    %v1191 = vunpack.c.l.b16 %v454
    %v1192 = vunpack.c.h.b16 %v454
    %v1193 = vunpack.c.l.b16 %v455
    %v1194 = vunpack.c.h.b16 %v455
    %v1195 = vunpack.c.l.b16 %v456
    %v1196 = vunpack.c.h.b16 %v456
    %v1197 = vunpack.c.l.b16 %v457
    %v1198 = vunpack.c.h.b16 %v457
    %v1199 = vunpack.c.l.b16 %v458
    %v1200 = vunpack.c.h.b16 %v458
    %v1201 = vunpack.c.l.b16 %v459
    %v1202 = vunpack.c.h.b16 %v459
    %v1203 = vunpack.c.l.b16 %v460
    %v1204 = vunpack.c.h.b16 %v460
    %v1205 = vunpack.c.l.b16 %v461
    %v1206 = vunpack.c.h.b16 %v461
    %v1207 = vunpack.c.l.b16 %v462
    %v1208 = vunpack.c.h.b16 %v462
    %v1209 = vunpack.c.l.b16 %v463
    %v1210 = vunpack.c.h.b16 %v463
    %v1211 = vunpack.c.l.b16 %v464
    %v1212 = vunpack.c.h.b16 %v464
    %v1213 = vunpack.c.l.b16 %v465
    %v1214 = vunpack.c.h.b16 %v465
    %v1215 = vunpack.c.l.b16 %v466
    %v1216 = vunpack.c.h.b16 %v466
    %v1217 = vunpack.c.l.b16 %v467
    %v1218 = vunpack.c.h.b16 %v467
    %v1219 = vunpack.c.l.b16 %v468
    %v1220 = vunpack.c.h.b16 %v468
    %v1221 = vunpack.c.l.b16 %v469
    %v1222 = vunpack.c.h.b16 %v469
    %v1223 = vunpack.c.l.b16 %v470
    %v1224 = vunpack.c.h.b16 %v470
    %v1225 = vunpack.c.l.b16 %v471
    %v1226 = vunpack.c.h.b16 %v471
    %v1227 = vunpack.c.l.b16 %v472
    %v1228 = vunpack.c.h.b16 %v472
    %v1229 = vunpack.c.l.b16 %v473
    %v1230 = vunpack.c.h.b16 %v473
    %v1231 = vunpack.c.l.b16 %v474
    %v1232 = vunpack.c.h.b16 %v474
    %v1233 = vunpack.c.l.b16 %v475
    %v1234 = vunpack.c.h.b16 %v475
    %v1235 = vunpack.c.l.b16 %v476
    %v1236 = vunpack.c.h.b16 %v476
    %v1237 = vunpack.c.l.b16 %v477
    %v1238 = vunpack.c.h.b16 %v477
    %v1239 = vunpack.c.l.b16 %v478
    %v1240 = vunpack.c.h.b16 %v478
    %v1241 = vunpack.c.l.b16 %v479
    %v1242 = vunpack.c.h.b16 %v479
    %v1243 = vunpack.c.l.b16 %v480
    %v1244 = vunpack.c.h.b16 %v480
    %v1245 = vunpack.c.l.b16 %v481
    %v1246 = vunpack.c.h.b16 %v481
    %v1247 = vunpack.c.l.b16 %v482
    %v1248 = vunpack.c.h.b16 %v482
    %v1249 = vunpack.c.l.b16 %v483
    %v1250 = vunpack.c.h.b16 %v483
    %v1251 = vunpack.c.l.b16 %v484
    %v1252 = vunpack.c.h.b16 %v484
    %v1253 = vunpack.c.l.b16 %v485
    %v1254 = vunpack.c.h.b16 %v485
    %v1255 = vunpack.c.l.b16 %v486
    %v1256 = vunpack.c.h.b16 %v486
    %v1257 = vunpack.c.l.b16 %v487
    %v1258 = vunpack.c.h.b16 %v487
    %v1259 = vunpack.c.l.b16 %v488
    %v1260 = vunpack.c.h.b16 %v488
    %v1261 = vunpack.c.l.b16 %v489
    %v1262 = vunpack.c.h.b16 %v489
    %v1263 = vunpack.c.l.b16 %v490
    %v1264 = vunpack.c.h.b16 %v490
    %v1265 = vunpack.c.l.b16 %v491
    %v1266 = vunpack.c.h.b16 %v491
    %v1267 = vunpack.c.l.b16 %v492
    %v1268 = vunpack.c.h.b16 %v492
    %v1269 = vunpack.c.l.b16 %v493
    %v1270 = vunpack.c.h.b16 %v493
    %v1271 = vunpack.c.l.b16 %v494
    %v1272 = vunpack.c.h.b16 %v494
    %v1273 = vunpack.c.l.b16 %v495
    %v1274 = vunpack.c.h.b16 %v495
    %v1275 = vunpack.c.l.b16 %v496
    %v1276 = vunpack.c.h.b16 %v496
    %v1277 = vunpack.c.l.b16 %v497
    %v1278 = vunpack.c.h.b16 %v497
    %v1279 = vunpack.c.l.b16 %v498
    %v1280 = vunpack.c.h.b16 %v498
    %v1281 = vunpack.c.l.b16 %v499
    %v1282 = vunpack.c.h.b16 %v499
    %v1283 = vunpack.c.l.b16 %v500
    %v1284 = vunpack.c.h.b16 %v500
    %v1285 = vunpack.c.l.b16 %v501
    %v1286 = vunpack.c.h.b16 %v501
    %v1287 = vunpack.c.l.b16 %v502
    %v1288 = vunpack.c.h.b16 %v502
    %v1289 = vunpack.c.l.b16 %v503
    %v1290 = vunpack.c.h.b16 %v503
    %v1291 = vunpack.c.l.b16 %v504
    %v1292 = vunpack.c.h.b16 %v504
    %v1293 = vunpack.c.l.b16 %v505
    %v1294 = vunpack.c.h.b16 %v505
    %v1295 = vunpack.c.l.b16 %v506
    %v1296 = vunpack.c.h.b16 %v506
    %v1297 = vunpack.c.l.b16 %v507
    %v1298 = vunpack.c.h.b16 %v507
    %v1299 = vunpack.c.l.b16 %v508
    %v1300 = vunpack.c.h.b16 %v508
    %v1301 = vunpack.c.l.b16 %v509
    %v1302 = vunpack.c.h.b16 %v509
    %v1303 = vunpack.c.l.b16 %v510
    %v1304 = vunpack.c.h.b16 %v510
    %v1305 = vunpack.c.l.b16 %v511
    %v1306 = vunpack.c.h.b16 %v511
    %v1307 = vunpack.c.l.b16 %v512
    %v1308 = vunpack.c.h.b16 %v512
    %v1309 = vunpack.c.l.b16 %v513
    %v1310 = vunpack.c.h.b16 %v513
    %v1311 = vunpack.c.l.b16 %v514
    %v1312 = vunpack.c.h.b16 %v514
    %v1313 = vunpack.c.l.b16 %v515
    %v1314 = vunpack.c.h.b16 %v515
    %v1315 = vunpack.c.l.b16 %v516
    %v1316 = vunpack.c.h.b16 %v516
    %v1317 = vunpack.c.l.b16 %v517
    %v1318 = vunpack.c.h.b16 %v517
    %v1319 = vunpack.c.l.b16 %v518
    %v1320 = vunpack.c.h.b16 %v518
    %v1321 = vunpack.c.l.b16 %v519
    %v1322 = vunpack.c.h.b16 %v519
    %v1323 = vunpack.c.l.b16 %v520
    %v1324 = vunpack.c.h.b16 %v520
    %v1325 = vunpack.c.l.b16 %v521
    %v1326 = vunpack.c.h.b16 %v521
    %v1327 = vunpack.c.l.b16 %v522
    %v1328 = vunpack.c.h.b16 %v522
    %v1329 = vunpack.c.l.b16 %v523
    %v1330 = vunpack.c.h.b16 %v523
    %v1331 = vunpack.c.l.b16 %v524
    %v1332 = vunpack.c.h.b16 %v524
    %v1333 = vunpack.c.l.b16 %v525
    %v1334 = vunpack.c.h.b16 %v525
    %v1335 = vunpack.c.l.b16 %v526
    %v1336 = vunpack.c.h.b16 %v526
    %v1337 = vpack.c.b16 %v833, %v825
    %v1338 = vpack.c.b16 %v834, %v826
    %v1339 = vpack.c.b16 %v835, %v827
    %v1340 = vpack.c.b16 %v836, %v828
    %v1341 = vpack.c.b16 %v837, %v829
    %v1342 = vpack.c.b16 %v838, %v830
    %v1343 = vpack.c.b16 %v839, %v831
    %v1344 = vpack.c.b16 %v840, %v832
    %v1345 = vpack.c.b16 %v849, %v841
    %v1346 = vpack.c.b16 %v850, %v842
    %v1347 = vpack.c.b16 %v851, %v843
    %v1348 = vpack.c.b16 %v852, %v844
    %v1349 = vpack.c.b16 %v853, %v845
    %v1350 = vpack.c.b16 %v854, %v846
    %v1351 = vpack.c.b16 %v855, %v847
    %v1352 = vpack.c.b16 %v856, %v848
    %v1353 = vpack.c.b16 %v865, %v857
    %v1354 = vpack.c.b16 %v866, %v858
    %v1355 = vpack.c.b16 %v867, %v859
    %v1356 = vpack.c.b16 %v868, %v860
    %v1357 = vpack.c.b16 %v869, %v861
    %v1358 = vpack.c.b16 %v870, %v862
    %v1359 = vpack.c.b16 %v871, %v863
    %v1360 = vpack.c.b16 %v872, %v864
    %v1361 = vpack.c.b16 %v881, %v873
    %v1362 = vpack.c.b16 %v882, %v874
    %v1363 = vpack.c.b16 %v883, %v875
    %v1364 = vpack.c.b16 %v884, %v876
    %v1365 = vpack.c.b16 %v885, %v877
    %v1366 = vpack.c.b16 %v886, %v878
    %v1367 = vpack.c.b16 %v887, %v879
    %v1368 = vpack.c.b16 %v888, %v880
    %v1369 = vpack.c.b16 %v897, %v889
    %v1370 = vpack.c.b16 %v898, %v890
    %v1371 = vpack.c.b16 %v899, %v891
    %v1372 = vpack.c.b16 %v900, %v892
    %v1373 = vpack.c.b16 %v901, %v893
    %v1374 = vpack.c.b16 %v902, %v894
    %v1375 = vpack.c.b16 %v903, %v895
    %v1376 = vpack.c.b16 %v904, %v896
    %v1377 = vpack.c.b16 %v913, %v905
    %v1378 = vpack.c.b16 %v914, %v906
    %v1379 = vpack.c.b16 %v915, %v907
    %v1380 = vpack.c.b16 %v916, %v908
    %v1381 = vpack.c.b16 %v917, %v909
    %v1382 = vpack.c.b16 %v918, %v910
    %v1383 = vpack.c.b16 %v919, %v911
    %v1384 = vpack.c.b16 %v920, %v912
    %v1385 = vpack.c.b16 %v929, %v921
    %v1386 = vpack.c.b16 %v930, %v922
    %v1387 = vpack.c.b16 %v931, %v923
    %v1388 = vpack.c.b16 %v932, %v924
    %v1389 = vpack.c.b16 %v933, %v925
    %v1390 = vpack.c.b16 %v934, %v926
    %v1391 = vpack.c.b16 %v935, %v927
    %v1392 = vpack.c.b16 %v936, %v928
    %v1393 = vpack.c.b16 %v945, %v937
    %v1394 = vpack.c.b16 %v946, %v938
    %v1395 = vpack.c.b16 %v947, %v939
    %v1396 = vpack.c.b16 %v948, %v940
    %v1397 = vpack.c.b16 %v949, %v941
    %v1398 = vpack.c.b16 %v950, %v942
    %v1399 = vpack.c.b16 %v951, %v943
    %v1400 = vpack.c.b16 %v952, %v944
    %v1401 = vpack.c.b16 %v961, %v953
    %v1402 = vpack.c.b16 %v962, %v954
    %v1403 = vpack.c.b16 %v963, %v955
    %v1404 = vpack.c.b16 %v964, %v956
    %v1405 = vpack.c.b16 %v965, %v957
    %v1406 = vpack.c.b16 %v966, %v958
    %v1407 = vpack.c.b16 %v967, %v959
    %v1408 = vpack.c.b16 %v968, %v960
    %v1409 = vpack.c.b16 %v977, %v969
    %v1410 = vpack.c.b16 %v978, %v970
    %v1411 = vpack.c.b16 %v979, %v971
    %v1412 = vpack.c.b16 %v980, %v972
    %v1413 = vpack.c.b16 %v981, %v973
    %v1414 = vpack.c.b16 %v982, %v974
    %v1415 = vpack.c.b16 %v983, %v975
    %v1416 = vpack.c.b16 %v984, %v976
    %v1417 = vpack.c.b16 %v993, %v985
    %v1418 = vpack.c.b16 %v994, %v986
    %v1419 = vpack.c.b16 %v995, %v987
    %v1420 = vpack.c.b16 %v996, %v988
    %v1421 = vpack.c.b16 %v997, %v989
    %v1422 = vpack.c.b16 %v998, %v990
    %v1423 = vpack.c.b16 %v999, %v991
    %v1424 = vpack.c.b16 %v1000, %v992
    %v1425 = vpack.c.b16 %v1009, %v1001
    %v1426 = vpack.c.b16 %v1010, %v1002
    %v1427 = vpack.c.b16 %v1011, %v1003
    %v1428 = vpack.c.b16 %v1012, %v1004
    %v1429 = vpack.c.b16 %v1013, %v1005
    %v1430 = vpack.c.b16 %v1014, %v1006
    %v1431 = vpack.c.b16 %v1015, %v1007
    %v1432 = vpack.c.b16 %v1016, %v1008
    %v1433 = vpack.c.b16 %v1025, %v1017
    %v1434 = vpack.c.b16 %v1026, %v1018
    %v1435 = vpack.c.b16 %v1027, %v1019
    %v1436 = vpack.c.b16 %v1028, %v1020
    %v1437 = vpack.c.b16 %v1029, %v1021
    %v1438 = vpack.c.b16 %v1030, %v1022
    %v1439 = vpack.c.b16 %v1031, %v1023
    %v1440 = vpack.c.b16 %v1032, %v1024
    %v1441 = vpack.c.b16 %v1041, %v1033
    %v1442 = vpack.c.b16 %v1042, %v1034
    %v1443 = vpack.c.b16 %v1043, %v1035
    %v1444 = vpack.c.b16 %v1044, %v1036
    %v1445 = vpack.c.b16 %v1045, %v1037
    %v1446 = vpack.c.b16 %v1046, %v1038
    %v1447 = vpack.c.b16 %v1047, %v1039
    %v1448 = vpack.c.b16 %v1048, %v1040
    %v1449 = vpack.c.b16 %v1057, %v1049
    %v1450 = vpack.c.b16 %v1058, %v1050
    %v1451 = vpack.c.b16 %v1059, %v1051
    %v1452 = vpack.c.b16 %v1060, %v1052
    %v1453 = vpack.c.b16 %v1061, %v1053
    %v1454 = vpack.c.b16 %v1062, %v1054
    %v1455 = vpack.c.b16 %v1063, %v1055
    %v1456 = vpack.c.b16 %v1064, %v1056
    %v1457 = vpack.c.b16 %v1073, %v1065
    %v1458 = vpack.c.b16 %v1074, %v1066
    %v1459 = vpack.c.b16 %v1075, %v1067
    %v1460 = vpack.c.b16 %v1076, %v1068
    %v1461 = vpack.c.b16 %v1077, %v1069
    %v1462 = vpack.c.b16 %v1078, %v1070
    %v1463 = vpack.c.b16 %v1079, %v1071
    %v1464 = vpack.c.b16 %v1080, %v1072
    %v1465 = vpack.c.b16 %v1089, %v1081
    %v1466 = vpack.c.b16 %v1090, %v1082
    %v1467 = vpack.c.b16 %v1091, %v1083
    %v1468 = vpack.c.b16 %v1092, %v1084
    %v1469 = vpack.c.b16 %v1093, %v1085
    %v1470 = vpack.c.b16 %v1094, %v1086
    %v1471 = vpack.c.b16 %v1095, %v1087
    %v1472 = vpack.c.b16 %v1096, %v1088
    %v1473 = vpack.c.b16 %v1105, %v1097
    %v1474 = vpack.c.b16 %v1106, %v1098
    %v1475 = vpack.c.b16 %v1107, %v1099
    %v1476 = vpack.c.b16 %v1108, %v1100
    %v1477 = vpack.c.b16 %v1109, %v1101
    %v1478 = vpack.c.b16 %v1110, %v1102
    %v1479 = vpack.c.b16 %v1111, %v1103
    %v1480 = vpack.c.b16 %v1112, %v1104
    %v1481 = vpack.c.b16 %v1121, %v1113
    %v1482 = vpack.c.b16 %v1122, %v1114
    %v1483 = vpack.c.b16 %v1123, %v1115
    %v1484 = vpack.c.b16 %v1124, %v1116
    %v1485 = vpack.c.b16 %v1125, %v1117
    %v1486 = vpack.c.b16 %v1126, %v1118
    %v1487 = vpack.c.b16 %v1127, %v1119
    %v1488 = vpack.c.b16 %v1128, %v1120
    %v1489 = vpack.c.b16 %v1137, %v1129
    %v1490 = vpack.c.b16 %v1138, %v1130
    %v1491 = vpack.c.b16 %v1139, %v1131
    %v1492 = vpack.c.b16 %v1140, %v1132
    %v1493 = vpack.c.b16 %v1141, %v1133
    %v1494 = vpack.c.b16 %v1142, %v1134
    %v1495 = vpack.c.b16 %v1143, %v1135
    %v1496 = vpack.c.b16 %v1144, %v1136
    %v1497 = vpack.c.b16 %v1153, %v1145
    %v1498 = vpack.c.b16 %v1154, %v1146
    %v1499 = vpack.c.b16 %v1155, %v1147
    %v1500 = vpack.c.b16 %v1156, %v1148
    %v1501 = vpack.c.b16 %v1157, %v1149
    %v1502 = vpack.c.b16 %v1158, %v1150
    %v1503 = vpack.c.b16 %v1159, %v1151
    %v1504 = vpack.c.b16 %v1160, %v1152
    %v1505 = vpack.c.b16 %v1169, %v1161
    %v1506 = vpack.c.b16 %v1170, %v1162
    %v1507 = vpack.c.b16 %v1171, %v1163
    %v1508 = vpack.c.b16 %v1172, %v1164
    %v1509 = vpack.c.b16 %v1173, %v1165
    %v1510 = vpack.c.b16 %v1174, %v1166
    %v1511 = vpack.c.b16 %v1175, %v1167
    %v1512 = vpack.c.b16 %v1176, %v1168
    %v1513 = vpack.c.b16 %v1185, %v1177
    %v1514 = vpack.c.b16 %v1186, %v1178
    %v1515 = vpack.c.b16 %v1187, %v1179
    %v1516 = vpack.c.b16 %v1188, %v1180
    %v1517 = vpack.c.b16 %v1189, %v1181
    %v1518 = vpack.c.b16 %v1190, %v1182
    %v1519 = vpack.c.b16 %v1191, %v1183
    %v1520 = vpack.c.b16 %v1192, %v1184
    %v1521 = vpack.c.b16 %v1201, %v1193
    %v1522 = vpack.c.b16 %v1202, %v1194
    %v1523 = vpack.c.b16 %v1203, %v1195
    %v1524 = vpack.c.b16 %v1204, %v1196
    %v1525 = vpack.c.b16 %v1205, %v1197
    %v1526 = vpack.c.b16 %v1206, %v1198
    %v1527 = vpack.c.b16 %v1207, %v1199
    %v1528 = vpack.c.b16 %v1208, %v1200
    %v1529 = vpack.c.b16 %v1217, %v1209
    %v1530 = vpack.c.b16 %v1218, %v1210
    %v1531 = vpack.c.b16 %v1219, %v1211
    %v1532 = vpack.c.b16 %v1220, %v1212
    %v1533 = vpack.c.b16 %v1221, %v1213
    %v1534 = vpack.c.b16 %v1222, %v1214
    %v1535 = vpack.c.b16 %v1223, %v1215
    %v1536 = vpack.c.b16 %v1224, %v1216
    %v1537 = vpack.c.b16 %v1233, %v1225
    %v1538 = vpack.c.b16 %v1234, %v1226
    %v1539 = vpack.c.b16 %v1235, %v1227
    %v1540 = vpack.c.b16 %v1236, %v1228
    %v1541 = vpack.c.b16 %v1237, %v1229
    %v1542 = vpack.c.b16 %v1238, %v1230
    %v1543 = vpack.c.b16 %v1239, %v1231
    %v1544 = vpack.c.b16 %v1240, %v1232
    %v1545 = vpack.c.b16 %v1249, %v1241
    %v1546 = vpack.c.b16 %v1250, %v1242
    %v1547 = vpack.c.b16 %v1251, %v1243
    %v1548 = vpack.c.b16 %v1252, %v1244
    %v1549 = vpack.c.b16 %v1253, %v1245
    %v1550 = vpack.c.b16 %v1254, %v1246
    %v1551 = vpack.c.b16 %v1255, %v1247
    %v1552 = vpack.c.b16 %v1256, %v1248
    %v1553 = vpack.c.b16 %v1265, %v1257
    %v1554 = vpack.c.b16 %v1266, %v1258
    %v1555 = vpack.c.b16 %v1267, %v1259
    %v1556 = vpack.c.b16 %v1268, %v1260
    %v1557 = vpack.c.b16 %v1269, %v1261
    %v1558 = vpack.c.b16 %v1270, %v1262
    %v1559 = vpack.c.b16 %v1271, %v1263
    %v1560 = vpack.c.b16 %v1272, %v1264
    %v1561 = vpack.c.b16 %v1281, %v1273
    %v1562 = vpack.c.b16 %v1282, %v1274
    %v1563 = vpack.c.b16 %v1283, %v1275
    %v1564 = vpack.c.b16 %v1284, %v1276
    %v1565 = vpack.c.b16 %v1285, %v1277
    %v1566 = vpack.c.b16 %v1286, %v1278
    %v1567 = vpack.c.b16 %v1287, %v1279
    %v1568 = vpack.c.b16 %v1288, %v1280
    %v1569 = vpack.c.b16 %v1297, %v1289
    %v1570 = vpack.c.b16 %v1298, %v1290
    %v1571 = vpack.c.b16 %v1299, %v1291
    %v1572 = vpack.c.b16 %v1300, %v1292
    %v1573 = vpack.c.b16 %v1301, %v1293
    %v1574 = vpack.c.b16 %v1302, %v1294
    %v1575 = vpack.c.b16 %v1303, %v1295
    %v1576 = vpack.c.b16 %v1304, %v1296
    %v1577 = vpack.c.b16 %v1313, %v1305
    %v1578 = vpack.c.b16 %v1314, %v1306
    %v1579 = vpack.c.b16 %v1315, %v1307
    %v1580 = vpack.c.b16 %v1316, %v1308
    %v1581 = vpack.c.b16 %v1317, %v1309
    %v1582 = vpack.c.b16 %v1318, %v1310
    %v1583 = vpack.c.b16 %v1319, %v1311
    %v1584 = vpack.c.b16 %v1320, %v1312
    %v1585 = vpack.c.b16 %v1329, %v1321
    %v1586 = vpack.c.b16 %v1330, %v1322
    %v1587 = vpack.c.b16 %v1331, %v1323
    %v1588 = vpack.c.b16 %v1332, %v1324
    %v1589 = vpack.c.b16 %v1333, %v1325
    %v1590 = vpack.c.b16 %v1334, %v1326
    %v1591 = vpack.c.b16 %v1335, %v1327
    %v1592 = vpack.c.b16 %v1336, %v1328
    %1849 = vmatprep.subr.bf16.mxu0 %v1394
    %1850 = vmatpush1.bf16.msra.mxu0 %v1393
    %1851 = vmatprep.subr.bf16.mxu0 %v1386
    %1852 = vmatpush1.bf16.msra.mxu0 %v1385
    %1853 = vmatprep.subr.bf16.mxu0 %v1378
    %1854 = vmatpush1.bf16.msra.mxu0 %v1377
    %1855 = vmatprep.subr.bf16.mxu0 %v1370
    %1856 = vmatpush1.bf16.msra.mxu0 %v1369
    %1857 = vmatprep.subr.bf16.mxu0 %v1362
    %1858 = vmatpush1.bf16.msra.mxu0 %v1361
    %1859 = vmatprep.subr.bf16.mxu0 %v1354
    %1860 = vmatpush1.bf16.msra.mxu0 %v1353
    %1861 = vmatprep.subr.bf16.mxu0 %v1346
    %1862 = vmatpush1.bf16.msra.mxu0 %v1345
    %1863 = vmatprep.subr.bf16.mxu0 %v1338
    %1864 = vmatpush1.bf16.msra.mxu0 %v1337
    %1865 = vmatprep.subr.bf16.mxu0 %v1458
    %1866 = vmatpush2.bf16.msra.mxu0 %v1457
    %1867 = vmatprep.subr.bf16.mxu0 %v1450
    %1868 = vmatpush2.bf16.msra.mxu0 %v1449
    %1869 = vmatprep.subr.bf16.mxu0 %v1442
    %1870 = vmatpush2.bf16.msra.mxu0 %v1441
    %1871 = vmatprep.subr.bf16.mxu0 %v1434
    %1872 = vmatpush2.bf16.msra.mxu0 %v1433
    %1873 = vmatprep.subr.bf16.mxu0 %v1426
    %1874 = vmatpush2.bf16.msra.mxu0 %v1425
    %1875 = vmatprep.subr.bf16.mxu0 %v1418
    %1876 = vmatpush2.bf16.msra.mxu0 %v1417
    %1877 = vmatprep.subr.bf16.mxu0 %v1410
    %1878 = vmatpush2.bf16.msra.mxu0 %v1409
    %1879 = vmatprep.subr.bf16.mxu0 %v1402
    %1880 = vmatpush2.bf16.msra.mxu0 %v1401
    %1881 = vmatprep.mubr.bf16.mxu0 %v268
    %1882 = vmatmul.mubr.bf16.gmra.mxu0 %v267
    %v1883 = vpop.f32.mrf.mxu0
    %v1884 = vadd.f32 %v532, %v1883
    %v1885 = vpop.f32.mrf.mxu0
    %v1886 = vadd.f32 %v536, %v1885
    %v1887 = vpop.f32.mrf.mxu0
    %v1888 = vadd.f32 %v532, %v1887
    %v1889 = vpop.f32.mrf.mxu0
    %v1890 = vadd.f32 %v536, %v1889
    %1891 = vdwg.mxu0
    %1892 = vmatprep.subr.bf16.mxu0 %v1522
    %1893 = vmatpush1.bf16.msra.mxu0 %v1521
    %1894 = vmatprep.subr.bf16.mxu0 %v1514
    %1895 = vmatpush1.bf16.msra.mxu0 %v1513
    %1896 = vmatprep.subr.bf16.mxu0 %v1506
    %1897 = vmatpush1.bf16.msra.mxu0 %v1505
    %1898 = vmatprep.subr.bf16.mxu0 %v1498
    %1899 = vmatpush1.bf16.msra.mxu0 %v1497
    %1900 = vmatprep.subr.bf16.mxu0 %v1490
    %1901 = vmatpush1.bf16.msra.mxu0 %v1489
    %1902 = vmatprep.subr.bf16.mxu0 %v1482
    %1903 = vmatpush1.bf16.msra.mxu0 %v1481
    %1904 = vmatprep.subr.bf16.mxu0 %v1474
    %1905 = vmatpush1.bf16.msra.mxu0 %v1473
    %1906 = vmatprep.subr.bf16.mxu0 %v1466
    %1907 = vmatpush1.bf16.msra.mxu0 %v1465
    %1908 = vmatprep.subr.bf16.mxu0 %v1586
    %1909 = vmatpush2.bf16.msra.mxu0 %v1585
    %1910 = vmatprep.subr.bf16.mxu0 %v1578
    %1911 = vmatpush2.bf16.msra.mxu0 %v1577
    %1912 = vmatprep.subr.bf16.mxu0 %v1570
    %1913 = vmatpush2.bf16.msra.mxu0 %v1569
    %1914 = vmatprep.subr.bf16.mxu0 %v1562
    %1915 = vmatpush2.bf16.msra.mxu0 %v1561
    %1916 = vmatprep.subr.bf16.mxu0 %v1554
    %1917 = vmatpush2.bf16.msra.mxu0 %v1553
    %1918 = vmatprep.subr.bf16.mxu0 %v1546
    %1919 = vmatpush2.bf16.msra.mxu0 %v1545
    %1920 = vmatprep.subr.bf16.mxu0 %v1538
    %1921 = vmatpush2.bf16.msra.mxu0 %v1537
    %1922 = vmatprep.subr.bf16.mxu0 %v1530
    %1923 = vmatpush2.bf16.msra.mxu0 %v1529
    %1924 = vmatprep.mubr.bf16.mxu0 %v270
    %1925 = vmatmul.mubr.bf16.gmra.mxu0 %v269
    %v1926 = vpop.f32.mrf.mxu0
    %v1927 = vadd.f32 %v1884, %v1926
    %v1928 = vpop.f32.mrf.mxu0
    %v1929 = vadd.f32 %v1886, %v1928
    %v1930 = vpop.f32.mrf.mxu0
    %v1931 = vadd.f32 %v1888, %v1930
    %v1932 = vpop.f32.mrf.mxu0
    %v1933 = vadd.f32 %v1890, %v1932
    %1934 = vdwg.mxu0
    %1935 = vmatprep.subr.bf16.mxu0 %v1396
    %1936 = vmatpush1.bf16.msra.mxu0 %v1395
    %1937 = vmatprep.subr.bf16.mxu0 %v1388
    %1938 = vmatpush1.bf16.msra.mxu0 %v1387
    %1939 = vmatprep.subr.bf16.mxu0 %v1380
    %1940 = vmatpush1.bf16.msra.mxu0 %v1379
    %1941 = vmatprep.subr.bf16.mxu0 %v1372
    %1942 = vmatpush1.bf16.msra.mxu0 %v1371
    %1943 = vmatprep.subr.bf16.mxu0 %v1364
    %1944 = vmatpush1.bf16.msra.mxu0 %v1363
    %1945 = vmatprep.subr.bf16.mxu0 %v1356
    %1946 = vmatpush1.bf16.msra.mxu0 %v1355
    %1947 = vmatprep.subr.bf16.mxu0 %v1348
    %1948 = vmatpush1.bf16.msra.mxu0 %v1347
    %1949 = vmatprep.subr.bf16.mxu0 %v1340
    %1950 = vmatpush1.bf16.msra.mxu0 %v1339
    %1951 = vmatprep.subr.bf16.mxu0 %v1460
    %1952 = vmatpush2.bf16.msra.mxu0 %v1459
    %1953 = vmatprep.subr.bf16.mxu0 %v1452
    %1954 = vmatpush2.bf16.msra.mxu0 %v1451
    %1955 = vmatprep.subr.bf16.mxu0 %v1444
    %1956 = vmatpush2.bf16.msra.mxu0 %v1443
    %1957 = vmatprep.subr.bf16.mxu0 %v1436
    %1958 = vmatpush2.bf16.msra.mxu0 %v1435
    %1959 = vmatprep.subr.bf16.mxu0 %v1428
    %1960 = vmatpush2.bf16.msra.mxu0 %v1427
    %1961 = vmatprep.subr.bf16.mxu0 %v1420
    %1962 = vmatpush2.bf16.msra.mxu0 %v1419
    %1963 = vmatprep.subr.bf16.mxu0 %v1412
    %1964 = vmatpush2.bf16.msra.mxu0 %v1411
    %1965 = vmatprep.subr.bf16.mxu0 %v1404
    %1966 = vmatpush2.bf16.msra.mxu0 %v1403
    %1967 = vmatprep.mubr.bf16.mxu0 %v268
    %1968 = vmatmul.mubr.bf16.gmra.mxu0 %v267
    %v1969 = vpop.f32.mrf.mxu0
    %v1970 = vadd.f32 %v540, %v1969
    %v1971 = vpop.f32.mrf.mxu0
    %v1972 = vadd.f32 %v544, %v1971
    %v1973 = vpop.f32.mrf.mxu0
    %v1974 = vadd.f32 %v540, %v1973
    %v1975 = vpop.f32.mrf.mxu0
    %v1976 = vadd.f32 %v544, %v1975
    %1977 = vdwg.mxu0
    %1978 = vmatprep.subr.bf16.mxu0 %v1524
    %1979 = vmatpush1.bf16.msra.mxu0 %v1523
    %1980 = vmatprep.subr.bf16.mxu0 %v1516
    %1981 = vmatpush1.bf16.msra.mxu0 %v1515
    %1982 = vmatprep.subr.bf16.mxu0 %v1508
    %1983 = vmatpush1.bf16.msra.mxu0 %v1507
    %1984 = vmatprep.subr.bf16.mxu0 %v1500
    %1985 = vmatpush1.bf16.msra.mxu0 %v1499
    %1986 = vmatprep.subr.bf16.mxu0 %v1492
    %1987 = vmatpush1.bf16.msra.mxu0 %v1491
    %1988 = vmatprep.subr.bf16.mxu0 %v1484
    %1989 = vmatpush1.bf16.msra.mxu0 %v1483
    %1990 = vmatprep.subr.bf16.mxu0 %v1476
    %1991 = vmatpush1.bf16.msra.mxu0 %v1475
    %1992 = vmatprep.subr.bf16.mxu0 %v1468
    %1993 = vmatpush1.bf16.msra.mxu0 %v1467
    %1994 = vmatprep.subr.bf16.mxu0 %v1588
    %1995 = vmatpush2.bf16.msra.mxu0 %v1587
    %1996 = vmatprep.subr.bf16.mxu0 %v1580
    %1997 = vmatpush2.bf16.msra.mxu0 %v1579
    %1998 = vmatprep.subr.bf16.mxu0 %v1572
    %1999 = vmatpush2.bf16.msra.mxu0 %v1571
    %2000 = vmatprep.subr.bf16.mxu0 %v1564
    %2001 = vmatpush2.bf16.msra.mxu0 %v1563
    %2002 = vmatprep.subr.bf16.mxu0 %v1556
    %2003 = vmatpush2.bf16.msra.mxu0 %v1555
    %2004 = vmatprep.subr.bf16.mxu0 %v1548
    %2005 = vmatpush2.bf16.msra.mxu0 %v1547
    %2006 = vmatprep.subr.bf16.mxu0 %v1540
    %2007 = vmatpush2.bf16.msra.mxu0 %v1539
    %2008 = vmatprep.subr.bf16.mxu0 %v1532
    %2009 = vmatpush2.bf16.msra.mxu0 %v1531
    %2010 = vmatprep.mubr.bf16.mxu0 %v270
    %2011 = vmatmul.mubr.bf16.gmra.mxu0 %v269
    %v2012 = vpop.f32.mrf.mxu0
    %v2013 = vadd.f32 %v1970, %v2012
    %v2014 = vpop.f32.mrf.mxu0
    %v2015 = vadd.f32 %v1972, %v2014
    %v2016 = vpop.f32.mrf.mxu0
    %v2017 = vadd.f32 %v1974, %v2016
    %v2018 = vpop.f32.mrf.mxu0
    %v2019 = vadd.f32 %v1976, %v2018
    %2020 = vdwg.mxu0
    %2021 = vmatprep.subr.bf16.mxu0 %v1398
    %2022 = vmatpush1.bf16.msra.mxu0 %v1397
    %2023 = vmatprep.subr.bf16.mxu0 %v1390
    %2024 = vmatpush1.bf16.msra.mxu0 %v1389
    %2025 = vmatprep.subr.bf16.mxu0 %v1382
    %2026 = vmatpush1.bf16.msra.mxu0 %v1381
    %2027 = vmatprep.subr.bf16.mxu0 %v1374
    %2028 = vmatpush1.bf16.msra.mxu0 %v1373
    %2029 = vmatprep.subr.bf16.mxu0 %v1366
    %2030 = vmatpush1.bf16.msra.mxu0 %v1365
    %2031 = vmatprep.subr.bf16.mxu0 %v1358
    %2032 = vmatpush1.bf16.msra.mxu0 %v1357
    %2033 = vmatprep.subr.bf16.mxu0 %v1350
    %2034 = vmatpush1.bf16.msra.mxu0 %v1349
    %2035 = vmatprep.subr.bf16.mxu0 %v1342
    %2036 = vmatpush1.bf16.msra.mxu0 %v1341
    %2037 = vmatprep.subr.bf16.mxu0 %v1462
    %2038 = vmatpush2.bf16.msra.mxu0 %v1461
    %2039 = vmatprep.subr.bf16.mxu0 %v1454
    %2040 = vmatpush2.bf16.msra.mxu0 %v1453
    %2041 = vmatprep.subr.bf16.mxu0 %v1446
    %2042 = vmatpush2.bf16.msra.mxu0 %v1445
    %2043 = vmatprep.subr.bf16.mxu0 %v1438
    %2044 = vmatpush2.bf16.msra.mxu0 %v1437
    %2045 = vmatprep.subr.bf16.mxu0 %v1430
    %2046 = vmatpush2.bf16.msra.mxu0 %v1429
    %2047 = vmatprep.subr.bf16.mxu0 %v1422
    %2048 = vmatpush2.bf16.msra.mxu0 %v1421
    %2049 = vmatprep.subr.bf16.mxu0 %v1414
    %2050 = vmatpush2.bf16.msra.mxu0 %v1413
    %2051 = vmatprep.subr.bf16.mxu0 %v1406
    %2052 = vmatpush2.bf16.msra.mxu0 %v1405
    %2053 = vmatprep.mubr.bf16.mxu0 %v268
    %2054 = vmatmul.mubr.bf16.gmra.mxu0 %v267
    %v2055 = vpop.f32.mrf.mxu0
    %v2056 = vadd.f32 %v548, %v2055
    %v2057 = vpop.f32.mrf.mxu0
    %v2058 = vadd.f32 %v552, %v2057
    %v2059 = vpop.f32.mrf.mxu0
    %v2060 = vadd.f32 %v548, %v2059
    %v2061 = vpop.f32.mrf.mxu0
    %v2062 = vadd.f32 %v552, %v2061
    %2063 = vdwg.mxu0
    %2064 = vmatprep.subr.bf16.mxu0 %v1526
    %2065 = vmatpush1.bf16.msra.mxu0 %v1525
    %2066 = vmatprep.subr.bf16.mxu0 %v1518
    %2067 = vmatpush1.bf16.msra.mxu0 %v1517
    %2068 = vmatprep.subr.bf16.mxu0 %v1510
    %2069 = vmatpush1.bf16.msra.mxu0 %v1509
    %2070 = vmatprep.subr.bf16.mxu0 %v1502
    %2071 = vmatpush1.bf16.msra.mxu0 %v1501
    %2072 = vmatprep.subr.bf16.mxu0 %v1494
    %2073 = vmatpush1.bf16.msra.mxu0 %v1493
    %2074 = vmatprep.subr.bf16.mxu0 %v1486
    %2075 = vmatpush1.bf16.msra.mxu0 %v1485
    %2076 = vmatprep.subr.bf16.mxu0 %v1478
    %2077 = vmatpush1.bf16.msra.mxu0 %v1477
    %2078 = vmatprep.subr.bf16.mxu0 %v1470
    %2079 = vmatpush1.bf16.msra.mxu0 %v1469
    %2080 = vmatprep.subr.bf16.mxu0 %v1590
    %2081 = vmatpush2.bf16.msra.mxu0 %v1589
    %2082 = vmatprep.subr.bf16.mxu0 %v1582
    %2083 = vmatpush2.bf16.msra.mxu0 %v1581
    %2084 = vmatprep.subr.bf16.mxu0 %v1574
    %2085 = vmatpush2.bf16.msra.mxu0 %v1573
    %2086 = vmatprep.subr.bf16.mxu0 %v1566
    %2087 = vmatpush2.bf16.msra.mxu0 %v1565
    %2088 = vmatprep.subr.bf16.mxu0 %v1558
    %2089 = vmatpush2.bf16.msra.mxu0 %v1557
    %2090 = vmatprep.subr.bf16.mxu0 %v1550
    %2091 = vmatpush2.bf16.msra.mxu0 %v1549
    %2092 = vmatprep.subr.bf16.mxu0 %v1542
    %2093 = vmatpush2.bf16.msra.mxu0 %v1541
    %2094 = vmatprep.subr.bf16.mxu0 %v1534
    %2095 = vmatpush2.bf16.msra.mxu0 %v1533
    %2096 = vmatprep.mubr.bf16.mxu0 %v270
    %2097 = vmatmul.mubr.bf16.gmra.mxu0 %v269
    %v2098 = vpop.f32.mrf.mxu0
    %v2099 = vadd.f32 %v2056, %v2098
    %v2100 = vpop.f32.mrf.mxu0
    %v2101 = vadd.f32 %v2058, %v2100
    %v2102 = vpop.f32.mrf.mxu0
    %v2103 = vadd.f32 %v2060, %v2102
    %v2104 = vpop.f32.mrf.mxu0
    %v2105 = vadd.f32 %v2062, %v2104
    %2106 = vdwg.mxu0
    %2107 = vmatprep.subr.bf16.mxu0 %v1400
    %2108 = vmatpush1.bf16.msra.mxu0 %v1399
    %2109 = vmatprep.subr.bf16.mxu0 %v1392
    %2110 = vmatpush1.bf16.msra.mxu0 %v1391
    %2111 = vmatprep.subr.bf16.mxu0 %v1384
    %2112 = vmatpush1.bf16.msra.mxu0 %v1383
    %2113 = vmatprep.subr.bf16.mxu0 %v1376
    %2114 = vmatpush1.bf16.msra.mxu0 %v1375
    %2115 = vmatprep.subr.bf16.mxu0 %v1368
    %2116 = vmatpush1.bf16.msra.mxu0 %v1367
    %2117 = vmatprep.subr.bf16.mxu0 %v1360
    %2118 = vmatpush1.bf16.msra.mxu0 %v1359
    %2119 = vmatprep.subr.bf16.mxu0 %v1352
    %2120 = vmatpush1.bf16.msra.mxu0 %v1351
    %2121 = vmatprep.subr.bf16.mxu0 %v1344
    %2122 = vmatpush1.bf16.msra.mxu0 %v1343
    %2123 = vmatprep.subr.bf16.mxu0 %v1464
    %2124 = vmatpush2.bf16.msra.mxu0 %v1463
    %2125 = vmatprep.subr.bf16.mxu0 %v1456
    %2126 = vmatpush2.bf16.msra.mxu0 %v1455
    %2127 = vmatprep.subr.bf16.mxu0 %v1448
    %2128 = vmatpush2.bf16.msra.mxu0 %v1447
    %2129 = vmatprep.subr.bf16.mxu0 %v1440
    %2130 = vmatpush2.bf16.msra.mxu0 %v1439
    %2131 = vmatprep.subr.bf16.mxu0 %v1432
    %2132 = vmatpush2.bf16.msra.mxu0 %v1431
    %2133 = vmatprep.subr.bf16.mxu0 %v1424
    %2134 = vmatpush2.bf16.msra.mxu0 %v1423
    %2135 = vmatprep.subr.bf16.mxu0 %v1416
    %2136 = vmatpush2.bf16.msra.mxu0 %v1415
    %2137 = vmatprep.subr.bf16.mxu0 %v1408
    %2138 = vmatpush2.bf16.msra.mxu0 %v1407
    %2139 = vmatprep.mubr.bf16.mxu0 %v268
    %2140 = vmatmul.mubr.bf16.gmra.mxu0 %v267
    %v2141 = vpop.f32.mrf.mxu0
    %v2142 = vadd.f32 %v556, %v2141
    %v2143 = vpop.f32.mrf.mxu0
    %v2144 = vadd.f32 %v560, %v2143
    %v2145 = vpop.f32.mrf.mxu0
    %v2146 = vadd.f32 %v556, %v2145
    %v2147 = vpop.f32.mrf.mxu0
    %v2148 = vadd.f32 %v560, %v2147
    %2149 = vdwg.mxu0
    %2150 = vmatprep.subr.bf16.mxu0 %v1528
    %2151 = vmatpush1.bf16.msra.mxu0 %v1527
    %2152 = vmatprep.subr.bf16.mxu0 %v1520
    %2153 = vmatpush1.bf16.msra.mxu0 %v1519
    %2154 = vmatprep.subr.bf16.mxu0 %v1512
    %2155 = vmatpush1.bf16.msra.mxu0 %v1511
    %2156 = vmatprep.subr.bf16.mxu0 %v1504
    %2157 = vmatpush1.bf16.msra.mxu0 %v1503
    %2158 = vmatprep.subr.bf16.mxu0 %v1496
    %2159 = vmatpush1.bf16.msra.mxu0 %v1495
    %2160 = vmatprep.subr.bf16.mxu0 %v1488
    %2161 = vmatpush1.bf16.msra.mxu0 %v1487
    %2162 = vmatprep.subr.bf16.mxu0 %v1480
    %2163 = vmatpush1.bf16.msra.mxu0 %v1479
    %2164 = vmatprep.subr.bf16.mxu0 %v1472
    %2165 = vmatpush1.bf16.msra.mxu0 %v1471
    %2166 = vmatprep.subr.bf16.mxu0 %v1592
    %2167 = vmatpush2.bf16.msra.mxu0 %v1591
    %2168 = vmatprep.subr.bf16.mxu0 %v1584
    %2169 = vmatpush2.bf16.msra.mxu0 %v1583
    %2170 = vmatprep.subr.bf16.mxu0 %v1576
    %2171 = vmatpush2.bf16.msra.mxu0 %v1575
    %2172 = vmatprep.subr.bf16.mxu0 %v1568
    %2173 = vmatpush2.bf16.msra.mxu0 %v1567
    %2174 = vmatprep.subr.bf16.mxu0 %v1560
    %2175 = vmatpush2.bf16.msra.mxu0 %v1559
    %2176 = vmatprep.subr.bf16.mxu0 %v1552
    %2177 = vmatpush2.bf16.msra.mxu0 %v1551
    %2178 = vmatprep.subr.bf16.mxu0 %v1544
    %2179 = vmatpush2.bf16.msra.mxu0 %v1543
    %2180 = vmatprep.subr.bf16.mxu0 %v1536
    %2181 = vmatpush2.bf16.msra.mxu0 %v1535
    %2182 = vmatprep.mubr.bf16.mxu0 %v270
    %2183 = vmatmul.mubr.bf16.gmra.mxu0 %v269
    %v2184 = vpop.f32.mrf.mxu0
    %v2185 = vadd.f32 %v2142, %v2184
    %v2186 = vpop.f32.mrf.mxu0
    %v2187 = vadd.f32 %v2144, %v2186
    %v2188 = vpop.f32.mrf.mxu0
    %v2189 = vadd.f32 %v2146, %v2188
    %v2190 = vpop.f32.mrf.mxu0
    %v2191 = vadd.f32 %v2148, %v2190
    %2192 = vdwg.mxu0
    %v2193 = vmax.f32 %v1927, 0.0
    %v2194 = vmax.f32 %v1929, 0.0
    %v2195 = vmax.f32 %v2013, 0.0
    %v2196 = vmax.f32 %v2015, 0.0
    %v2197 = vmax.f32 %v2099, 0.0
    %v2198 = vmax.f32 %v2101, 0.0
    %v2199 = vmax.f32 %v2185, 0.0
    %v2200 = vmax.f32 %v2187, 0.0
    %v2201 = vmax.f32 %v1931, 0.0
    %v2202 = vmax.f32 %v1933, 0.0
    %v2203 = vmax.f32 %v2017, 0.0
    %v2204 = vmax.f32 %v2019, 0.0
    %v2205 = vmax.f32 %v2103, 0.0
    %v2206 = vmax.f32 %v2105, 0.0
    %v2207 = vmax.f32 %v2189, 0.0
    %v2208 = vmax.f32 %v2191, 0.0
    %v2209 = vpack.c.bf16 %v2201, %v2193
    %v2210 = vpack.c.bf16 %v2202, %v2194
    %v2211 = vpack.c.bf16 %v2203, %v2195
    %v2212 = vpack.c.bf16 %v2204, %v2196
    %v2213 = vpack.c.bf16 %v2205, %v2197
    %v2214 = vpack.c.bf16 %v2206, %v2198
    %v2215 = vpack.c.bf16 %v2207, %v2199
    %v2216 = vpack.c.bf16 %v2208, %v2200
    %v2217 = vld [vmem:[#allocation5] sm:$0xff]
    %v2218 = vld [vmem:[#allocation5 + $0x8] sm:$0xff]
    %v2219 = vld [vmem:[#allocation5 + $0x10] sm:$0xff]
    %v2220 = vld [vmem:[#allocation5 + $0x18] sm:$0xff]
    %v2221 = vld [vmem:[#allocation5 + $0x20] sm:$0xff]
    %v2222 = vld [vmem:[#allocation5 + $0x28] sm:$0xff]
    %v2223 = vld [vmem:[#allocation5 + $0x30] sm:$0xff]
    %v2224 = vld [vmem:[#allocation5 + $0x38] sm:$0xff]
    %v2225 = vld [vmem:[#allocation5 + $0x40] sm:$0xff]
    %v2226 = vld [vmem:[#allocation5 + $0x48] sm:$0xff]
    %v2227 = vld [vmem:[#allocation5 + $0x50] sm:$0xff]
    %v2228 = vld [vmem:[#allocation5 + $0x58] sm:$0xff]
    %v2229 = vld [vmem:[#allocation5 + $0x60] sm:$0xff]
    %v2230 = vld [vmem:[#allocation5 + $0x68] sm:$0xff]
    %v2231 = vld [vmem:[#allocation5 + $0x70] sm:$0xff]
    %v2232 = vld [vmem:[#allocation5 + $0x78] sm:$0xff]
    %v2233 = vld [vmem:[#allocation5 + $0x80] sm:$0xff]
    %v2234 = vld [vmem:[#allocation5 + $0x88] sm:$0xff]
    %v2235 = vld [vmem:[#allocation5 + $0x90] sm:$0xff]
    %v2236 = vld [vmem:[#allocation5 + $0x98] sm:$0xff]
    %v2237 = vld [vmem:[#allocation5 + $0xa0] sm:$0xff]
    %v2238 = vld [vmem:[#allocation5 + $0xa8] sm:$0xff]
    %v2239 = vld [vmem:[#allocation5 + $0xb0] sm:$0xff]
    %v2240 = vld [vmem:[#allocation5 + $0xb8] sm:$0xff]
    %v2241 = vld [vmem:[#allocation5 + $0xc0] sm:$0xff]
    %v2242 = vld [vmem:[#allocation5 + $0xc8] sm:$0xff]
    %v2243 = vld [vmem:[#allocation5 + $0xd0] sm:$0xff]
    %v2244 = vld [vmem:[#allocation5 + $0xd8] sm:$0xff]
    %v2245 = vld [vmem:[#allocation5 + $0xe0] sm:$0xff]
    %v2246 = vld [vmem:[#allocation5 + $0xe8] sm:$0xff]
    %v2247 = vld [vmem:[#allocation5 + $0xf0] sm:$0xff]
    %v2248 = vld [vmem:[#allocation5 + $0xf8] sm:$0xff]
    %v2249 = vld [vmem:[#allocation5 + $0x100] sm:$0xff]
    %v2250 = vld [vmem:[#allocation5 + $0x108] sm:$0xff]
    %v2251 = vld [vmem:[#allocation5 + $0x110] sm:$0xff]
    %v2252 = vld [vmem:[#allocation5 + $0x118] sm:$0xff]
    %v2253 = vld [vmem:[#allocation5 + $0x120] sm:$0xff]
    %v2254 = vld [vmem:[#allocation5 + $0x128] sm:$0xff]
    %v2255 = vld [vmem:[#allocation5 + $0x130] sm:$0xff]
    %v2256 = vld [vmem:[#allocation5 + $0x138] sm:$0xff]
    %v2257 = vld [vmem:[#allocation5 + $0x140] sm:$0xff]
    %v2258 = vld [vmem:[#allocation5 + $0x148] sm:$0xff]
    %v2259 = vld [vmem:[#allocation5 + $0x150] sm:$0xff]
    %v2260 = vld [vmem:[#allocation5 + $0x158] sm:$0xff]
    %v2261 = vld [vmem:[#allocation5 + $0x160] sm:$0xff]
    %v2262 = vld [vmem:[#allocation5 + $0x168] sm:$0xff]
    %v2263 = vld [vmem:[#allocation5 + $0x170] sm:$0xff]
    %v2264 = vld [vmem:[#allocation5 + $0x178] sm:$0xff]
    %v2265 = vld [vmem:[#allocation5 + $0x180] sm:$0xff]
    %v2266 = vld [vmem:[#allocation5 + $0x188] sm:$0xff]
    %v2267 = vld [vmem:[#allocation5 + $0x190] sm:$0xff]
    %v2268 = vld [vmem:[#allocation5 + $0x198] sm:$0xff]
    %v2269 = vld [vmem:[#allocation5 + $0x1a0] sm:$0xff]
    %v2270 = vld [vmem:[#allocation5 + $0x1a8] sm:$0xff]
    %v2271 = vld [vmem:[#allocation5 + $0x1b0] sm:$0xff]
    %v2272 = vld [vmem:[#allocation5 + $0x1b8] sm:$0xff]
    %v2273 = vld [vmem:[#allocation5 + $0x1c0] sm:$0xff]
    %v2274 = vld [vmem:[#allocation5 + $0x1c8] sm:$0xff]
    %v2275 = vld [vmem:[#allocation5 + $0x1d0] sm:$0xff]
    %v2276 = vld [vmem:[#allocation5 + $0x1d8] sm:$0xff]
    %v2277 = vld [vmem:[#allocation5 + $0x1e0] sm:$0xff]
    %v2278 = vld [vmem:[#allocation5 + $0x1e8] sm:$0xff]
    %v2279 = vld [vmem:[#allocation5 + $0x1f0] sm:$0xff]
    %v2280 = vld [vmem:[#allocation5 + $0x1f8] sm:$0xff]
    %v2281 = vld [vmem:[#allocation5 + $0x200] sm:$0xff]
    %v2282 = vld [vmem:[#allocation5 + $0x208] sm:$0xff]
    %v2283 = vld [vmem:[#allocation5 + $0x210] sm:$0xff]
    %v2284 = vld [vmem:[#allocation5 + $0x218] sm:$0xff]
    %v2285 = vld [vmem:[#allocation5 + $0x220] sm:$0xff]
    %v2286 = vld [vmem:[#allocation5 + $0x228] sm:$0xff]
    %v2287 = vld [vmem:[#allocation5 + $0x230] sm:$0xff]
    %v2288 = vld [vmem:[#allocation5 + $0x238] sm:$0xff]
    %v2289 = vld [vmem:[#allocation5 + $0x240] sm:$0xff]
    %v2290 = vld [vmem:[#allocation5 + $0x248] sm:$0xff]
    %v2291 = vld [vmem:[#allocation5 + $0x250] sm:$0xff]
    %v2292 = vld [vmem:[#allocation5 + $0x258] sm:$0xff]
    %v2293 = vld [vmem:[#allocation5 + $0x260] sm:$0xff]
    %v2294 = vld [vmem:[#allocation5 + $0x268] sm:$0xff]
    %v2295 = vld [vmem:[#allocation5 + $0x270] sm:$0xff]
    %v2296 = vld [vmem:[#allocation5 + $0x278] sm:$0xff]
    %v2297 = vld [vmem:[#allocation5 + $0x280] sm:$0xff]
    %v2298 = vld [vmem:[#allocation5 + $0x288] sm:$0xff]
    %v2299 = vld [vmem:[#allocation5 + $0x290] sm:$0xff]
    %v2300 = vld [vmem:[#allocation5 + $0x298] sm:$0xff]
    %v2301 = vld [vmem:[#allocation5 + $0x2a0] sm:$0xff]
    %v2302 = vld [vmem:[#allocation5 + $0x2a8] sm:$0xff]
    %v2303 = vld [vmem:[#allocation5 + $0x2b0] sm:$0xff]
    %v2304 = vld [vmem:[#allocation5 + $0x2b8] sm:$0xff]
    %v2305 = vld [vmem:[#allocation5 + $0x2c0] sm:$0xff]
    %v2306 = vld [vmem:[#allocation5 + $0x2c8] sm:$0xff]
    %v2307 = vld [vmem:[#allocation5 + $0x2d0] sm:$0xff]
    %v2308 = vld [vmem:[#allocation5 + $0x2d8] sm:$0xff]
    %v2309 = vld [vmem:[#allocation5 + $0x2e0] sm:$0xff]
    %v2310 = vld [vmem:[#allocation5 + $0x2e8] sm:$0xff]
    %v2311 = vld [vmem:[#allocation5 + $0x2f0] sm:$0xff]
    %v2312 = vld [vmem:[#allocation5 + $0x2f8] sm:$0xff]
    %v2313 = vld [vmem:[#allocation5 + $0x300] sm:$0xff]
    %v2314 = vld [vmem:[#allocation5 + $0x308] sm:$0xff]
    %v2315 = vld [vmem:[#allocation5 + $0x310] sm:$0xff]
    %v2316 = vld [vmem:[#allocation5 + $0x318] sm:$0xff]
    %v2317 = vld [vmem:[#allocation5 + $0x320] sm:$0xff]
    %v2318 = vld [vmem:[#allocation5 + $0x328] sm:$0xff]
    %v2319 = vld [vmem:[#allocation5 + $0x330] sm:$0xff]
    %v2320 = vld [vmem:[#allocation5 + $0x338] sm:$0xff]
    %v2321 = vld [vmem:[#allocation5 + $0x340] sm:$0xff]
    %v2322 = vld [vmem:[#allocation5 + $0x348] sm:$0xff]
    %v2323 = vld [vmem:[#allocation5 + $0x350] sm:$0xff]
    %v2324 = vld [vmem:[#allocation5 + $0x358] sm:$0xff]
    %v2325 = vld [vmem:[#allocation5 + $0x360] sm:$0xff]
    %v2326 = vld [vmem:[#allocation5 + $0x368] sm:$0xff]
    %v2327 = vld [vmem:[#allocation5 + $0x370] sm:$0xff]
    %v2328 = vld [vmem:[#allocation5 + $0x378] sm:$0xff]
    %v2329 = vld [vmem:[#allocation5 + $0x380] sm:$0xff]
    %v2330 = vld [vmem:[#allocation5 + $0x388] sm:$0xff]
    %v2331 = vld [vmem:[#allocation5 + $0x390] sm:$0xff]
    %v2332 = vld [vmem:[#allocation5 + $0x398] sm:$0xff]
    %v2333 = vld [vmem:[#allocation5 + $0x3a0] sm:$0xff]
    %v2334 = vld [vmem:[#allocation5 + $0x3a8] sm:$0xff]
    %v2335 = vld [vmem:[#allocation5 + $0x3b0] sm:$0xff]
    %v2336 = vld [vmem:[#allocation5 + $0x3b8] sm:$0xff]
    %v2337 = vld [vmem:[#allocation5 + $0x3c0] sm:$0xff]
    %v2338 = vld [vmem:[#allocation5 + $0x3c8] sm:$0xff]
    %v2339 = vld [vmem:[#allocation5 + $0x3d0] sm:$0xff]
    %v2340 = vld [vmem:[#allocation5 + $0x3d8] sm:$0xff]
    %v2341 = vld [vmem:[#allocation5 + $0x3e0] sm:$0xff]
    %v2342 = vld [vmem:[#allocation5 + $0x3e8] sm:$0xff]
    %v2343 = vld [vmem:[#allocation5 + $0x3f0] sm:$0xff]
    %v2344 = vld [vmem:[#allocation5 + $0x3f8] sm:$0xff]
    %v2345 = vld [vmem:[#allocation5 + $0x400] sm:$0xff]
    %v2346 = vld [vmem:[#allocation5 + $0x408] sm:$0xff]
    %v2347 = vld [vmem:[#allocation5 + $0x410] sm:$0xff]
    %v2348 = vld [vmem:[#allocation5 + $0x418] sm:$0xff]
    %v2349 = vld [vmem:[#allocation5 + $0x420] sm:$0xff]
    %v2350 = vld [vmem:[#allocation5 + $0x428] sm:$0xff]
    %v2351 = vld [vmem:[#allocation5 + $0x430] sm:$0xff]
    %v2352 = vld [vmem:[#allocation5 + $0x438] sm:$0xff]
    %v2353 = vld [vmem:[#allocation5 + $0x440] sm:$0xff]
    %v2354 = vld [vmem:[#allocation5 + $0x448] sm:$0xff]
    %v2355 = vld [vmem:[#allocation5 + $0x450] sm:$0xff]
    %v2356 = vld [vmem:[#allocation5 + $0x458] sm:$0xff]
    %v2357 = vld [vmem:[#allocation5 + $0x460] sm:$0xff]
    %v2358 = vld [vmem:[#allocation5 + $0x468] sm:$0xff]
    %v2359 = vld [vmem:[#allocation5 + $0x470] sm:$0xff]
    %v2360 = vld [vmem:[#allocation5 + $0x478] sm:$0xff]
    %v2361 = vld [vmem:[#allocation5 + $0x480] sm:$0xff]
    %v2362 = vld [vmem:[#allocation5 + $0x488] sm:$0xff]
    %v2363 = vld [vmem:[#allocation5 + $0x490] sm:$0xff]
    %v2364 = vld [vmem:[#allocation5 + $0x498] sm:$0xff]
    %v2365 = vld [vmem:[#allocation5 + $0x4a0] sm:$0xff]
    %v2366 = vld [vmem:[#allocation5 + $0x4a8] sm:$0xff]
    %v2367 = vld [vmem:[#allocation5 + $0x4b0] sm:$0xff]
    %v2368 = vld [vmem:[#allocation5 + $0x4b8] sm:$0xff]
    %v2369 = vld [vmem:[#allocation5 + $0x4c0] sm:$0xff]
    %v2370 = vld [vmem:[#allocation5 + $0x4c8] sm:$0xff]
    %v2371 = vld [vmem:[#allocation5 + $0x4d0] sm:$0xff]
    %v2372 = vld [vmem:[#allocation5 + $0x4d8] sm:$0xff]
    %v2373 = vld [vmem:[#allocation5 + $0x4e0] sm:$0xff]
    %v2374 = vld [vmem:[#allocation5 + $0x4e8] sm:$0xff]
    %v2375 = vld [vmem:[#allocation5 + $0x4f0] sm:$0xff]
    %v2376 = vld [vmem:[#allocation5 + $0x4f8] sm:$0xff]
    %v2377 = vld [vmem:[#allocation5 + $0x500] sm:$0xff]
    %v2378 = vld [vmem:[#allocation5 + $0x508] sm:$0xff]
    %v2379 = vld [vmem:[#allocation5 + $0x510] sm:$0xff]
    %v2380 = vld [vmem:[#allocation5 + $0x518] sm:$0xff]
    %v2381 = vld [vmem:[#allocation5 + $0x520] sm:$0xff]
    %v2382 = vld [vmem:[#allocation5 + $0x528] sm:$0xff]
    %v2383 = vld [vmem:[#allocation5 + $0x530] sm:$0xff]
    %v2384 = vld [vmem:[#allocation5 + $0x538] sm:$0xff]
    %v2385 = vld [vmem:[#allocation5 + $0x540] sm:$0xff]
    %v2386 = vld [vmem:[#allocation5 + $0x548] sm:$0xff]
    %v2387 = vld [vmem:[#allocation5 + $0x550] sm:$0xff]
    %v2388 = vld [vmem:[#allocation5 + $0x558] sm:$0xff]
    %v2389 = vld [vmem:[#allocation5 + $0x560] sm:$0xff]
    %v2390 = vld [vmem:[#allocation5 + $0x568] sm:$0xff]
    %v2391 = vld [vmem:[#allocation5 + $0x570] sm:$0xff]
    %v2392 = vld [vmem:[#allocation5 + $0x578] sm:$0xff]
    %v2393 = vld [vmem:[#allocation5 + $0x580] sm:$0xff]
    %v2394 = vld [vmem:[#allocation5 + $0x588] sm:$0xff]
    %v2395 = vld [vmem:[#allocation5 + $0x590] sm:$0xff]
    %v2396 = vld [vmem:[#allocation5 + $0x598] sm:$0xff]
    %v2397 = vld [vmem:[#allocation5 + $0x5a0] sm:$0xff]
    %v2398 = vld [vmem:[#allocation5 + $0x5a8] sm:$0xff]
    %v2399 = vld [vmem:[#allocation5 + $0x5b0] sm:$0xff]
    %v2400 = vld [vmem:[#allocation5 + $0x5b8] sm:$0xff]
    %v2401 = vld [vmem:[#allocation5 + $0x5c0] sm:$0xff]
    %v2402 = vld [vmem:[#allocation5 + $0x5c8] sm:$0xff]
    %v2403 = vld [vmem:[#allocation5 + $0x5d0] sm:$0xff]
    %v2404 = vld [vmem:[#allocation5 + $0x5d8] sm:$0xff]
    %v2405 = vld [vmem:[#allocation5 + $0x5e0] sm:$0xff]
    %v2406 = vld [vmem:[#allocation5 + $0x5e8] sm:$0xff]
    %v2407 = vld [vmem:[#allocation5 + $0x5f0] sm:$0xff]
    %v2408 = vld [vmem:[#allocation5 + $0x5f8] sm:$0xff]
    %v2409 = vld [vmem:[#allocation5 + $0x600] sm:$0xff]
    %v2410 = vld [vmem:[#allocation5 + $0x608] sm:$0xff]
    %v2411 = vld [vmem:[#allocation5 + $0x610] sm:$0xff]
    %v2412 = vld [vmem:[#allocation5 + $0x618] sm:$0xff]
    %v2413 = vld [vmem:[#allocation5 + $0x620] sm:$0xff]
    %v2414 = vld [vmem:[#allocation5 + $0x628] sm:$0xff]
    %v2415 = vld [vmem:[#allocation5 + $0x630] sm:$0xff]
    %v2416 = vld [vmem:[#allocation5 + $0x638] sm:$0xff]
    %v2417 = vld [vmem:[#allocation5 + $0x640] sm:$0xff]
    %v2418 = vld [vmem:[#allocation5 + $0x648] sm:$0xff]
    %v2419 = vld [vmem:[#allocation5 + $0x650] sm:$0xff]
    %v2420 = vld [vmem:[#allocation5 + $0x658] sm:$0xff]
    %v2421 = vld [vmem:[#allocation5 + $0x660] sm:$0xff]
    %v2422 = vld [vmem:[#allocation5 + $0x668] sm:$0xff]
    %v2423 = vld [vmem:[#allocation5 + $0x670] sm:$0xff]
    %v2424 = vld [vmem:[#allocation5 + $0x678] sm:$0xff]
    %v2425 = vld [vmem:[#allocation5 + $0x680] sm:$0xff]
    %v2426 = vld [vmem:[#allocation5 + $0x688] sm:$0xff]
    %v2427 = vld [vmem:[#allocation5 + $0x690] sm:$0xff]
    %v2428 = vld [vmem:[#allocation5 + $0x698] sm:$0xff]
    %v2429 = vld [vmem:[#allocation5 + $0x6a0] sm:$0xff]
    %v2430 = vld [vmem:[#allocation5 + $0x6a8] sm:$0xff]
    %v2431 = vld [vmem:[#allocation5 + $0x6b0] sm:$0xff]
    %v2432 = vld [vmem:[#allocation5 + $0x6b8] sm:$0xff]
    %v2433 = vld [vmem:[#allocation5 + $0x6c0] sm:$0xff]
    %v2434 = vld [vmem:[#allocation5 + $0x6c8] sm:$0xff]
    %v2435 = vld [vmem:[#allocation5 + $0x6d0] sm:$0xff]
    %v2436 = vld [vmem:[#allocation5 + $0x6d8] sm:$0xff]
    %v2437 = vld [vmem:[#allocation5 + $0x6e0] sm:$0xff]
    %v2438 = vld [vmem:[#allocation5 + $0x6e8] sm:$0xff]
    %v2439 = vld [vmem:[#allocation5 + $0x6f0] sm:$0xff]
    %v2440 = vld [vmem:[#allocation5 + $0x6f8] sm:$0xff]
    %v2441 = vld [vmem:[#allocation5 + $0x700] sm:$0xff]
    %v2442 = vld [vmem:[#allocation5 + $0x708] sm:$0xff]
    %v2443 = vld [vmem:[#allocation5 + $0x710] sm:$0xff]
    %v2444 = vld [vmem:[#allocation5 + $0x718] sm:$0xff]
    %v2445 = vld [vmem:[#allocation5 + $0x720] sm:$0xff]
    %v2446 = vld [vmem:[#allocation5 + $0x728] sm:$0xff]
    %v2447 = vld [vmem:[#allocation5 + $0x730] sm:$0xff]
    %v2448 = vld [vmem:[#allocation5 + $0x738] sm:$0xff]
    %v2449 = vld [vmem:[#allocation5 + $0x740] sm:$0xff]
    %v2450 = vld [vmem:[#allocation5 + $0x748] sm:$0xff]
    %v2451 = vld [vmem:[#allocation5 + $0x750] sm:$0xff]
    %v2452 = vld [vmem:[#allocation5 + $0x758] sm:$0xff]
    %v2453 = vld [vmem:[#allocation5 + $0x760] sm:$0xff]
    %v2454 = vld [vmem:[#allocation5 + $0x768] sm:$0xff]
    %v2455 = vld [vmem:[#allocation5 + $0x770] sm:$0xff]
    %v2456 = vld [vmem:[#allocation5 + $0x778] sm:$0xff]
    %v2457 = vld [vmem:[#allocation5 + $0x780] sm:$0xff]
    %v2458 = vld [vmem:[#allocation5 + $0x788] sm:$0xff]
    %v2459 = vld [vmem:[#allocation5 + $0x790] sm:$0xff]
    %v2460 = vld [vmem:[#allocation5 + $0x798] sm:$0xff]
    %v2461 = vld [vmem:[#allocation5 + $0x7a0] sm:$0xff]
    %v2462 = vld [vmem:[#allocation5 + $0x7a8] sm:$0xff]
    %v2463 = vld [vmem:[#allocation5 + $0x7b0] sm:$0xff]
    %v2464 = vld [vmem:[#allocation5 + $0x7b8] sm:$0xff]
    %v2465 = vld [vmem:[#allocation5 + $0x7c0] sm:$0xff]
    %v2466 = vld [vmem:[#allocation5 + $0x7c8] sm:$0xff]
    %v2467 = vld [vmem:[#allocation5 + $0x7d0] sm:$0xff]
    %v2468 = vld [vmem:[#allocation5 + $0x7d8] sm:$0xff]
    %v2469 = vld [vmem:[#allocation5 + $0x7e0] sm:$0xff]
    %v2470 = vld [vmem:[#allocation5 + $0x7e8] sm:$0xff]
    %v2471 = vld [vmem:[#allocation5 + $0x7f0] sm:$0xff]
    %v2472 = vld [vmem:[#allocation5 + $0x7f8] sm:$0xff]
    %v2473 = vld [vmem:[%s6] sm:$0xf]
    %v2475 = vlaneseq
    %v2476 = vshrl.u32 %v2475, 7
    %v2477 = vsub.s32 0, %v2476
    %v2478 = vrot.slane %v2473, %v2477
    %v2479 = vlaneseq
    %v2480 = vshrl.u32 %v2479, 7
    %v2481 = vsub.s32 1, %v2480
    %v2482 = vrot.slane %v2473, %v2481
    %v2483 = vlaneseq
    %v2484 = vshrl.u32 %v2483, 7
    %v2485 = vsub.s32 2, %v2484
    %v2486 = vrot.slane %v2473, %v2485
    %v2487 = vlaneseq
    %v2488 = vshrl.u32 %v2487, 7
    %v2489 = vsub.s32 3, %v2488
    %v2490 = vrot.slane %v2473, %v2489
    %v2751 = vunpack.c.l.b16 %v2217
    %v2752 = vunpack.c.h.b16 %v2217
    %v2753 = vunpack.c.l.b16 %v2218
    %v2754 = vunpack.c.h.b16 %v2218
    %v2755 = vunpack.c.l.b16 %v2219
    %v2756 = vunpack.c.h.b16 %v2219
    %v2757 = vunpack.c.l.b16 %v2220
    %v2758 = vunpack.c.h.b16 %v2220
    %v2759 = vunpack.c.l.b16 %v2221
    %v2760 = vunpack.c.h.b16 %v2221
    %v2761 = vunpack.c.l.b16 %v2222
    %v2762 = vunpack.c.h.b16 %v2222
    %v2763 = vunpack.c.l.b16 %v2223
    %v2764 = vunpack.c.h.b16 %v2223
    %v2765 = vunpack.c.l.b16 %v2224
    %v2766 = vunpack.c.h.b16 %v2224
    %v2767 = vunpack.c.l.b16 %v2225
    %v2768 = vunpack.c.h.b16 %v2225
    %v2769 = vunpack.c.l.b16 %v2226
    %v2770 = vunpack.c.h.b16 %v2226
    %v2771 = vunpack.c.l.b16 %v2227
    %v2772 = vunpack.c.h.b16 %v2227
    %v2773 = vunpack.c.l.b16 %v2228
    %v2774 = vunpack.c.h.b16 %v2228
    %v2775 = vunpack.c.l.b16 %v2229
    %v2776 = vunpack.c.h.b16 %v2229
    %v2777 = vunpack.c.l.b16 %v2230
    %v2778 = vunpack.c.h.b16 %v2230
    %v2779 = vunpack.c.l.b16 %v2231
    %v2780 = vunpack.c.h.b16 %v2231
    %v2781 = vunpack.c.l.b16 %v2232
    %v2782 = vunpack.c.h.b16 %v2232
    %v2783 = vunpack.c.l.b16 %v2233
    %v2784 = vunpack.c.h.b16 %v2233
    %v2785 = vunpack.c.l.b16 %v2234
    %v2786 = vunpack.c.h.b16 %v2234
    %v2787 = vunpack.c.l.b16 %v2235
    %v2788 = vunpack.c.h.b16 %v2235
    %v2789 = vunpack.c.l.b16 %v2236
    %v2790 = vunpack.c.h.b16 %v2236
    %v2791 = vunpack.c.l.b16 %v2237
    %v2792 = vunpack.c.h.b16 %v2237
    %v2793 = vunpack.c.l.b16 %v2238
    %v2794 = vunpack.c.h.b16 %v2238
    %v2795 = vunpack.c.l.b16 %v2239
    %v2796 = vunpack.c.h.b16 %v2239
    %v2797 = vunpack.c.l.b16 %v2240
    %v2798 = vunpack.c.h.b16 %v2240
    %v2799 = vunpack.c.l.b16 %v2241
    %v2800 = vunpack.c.h.b16 %v2241
    %v2801 = vunpack.c.l.b16 %v2242
    %v2802 = vunpack.c.h.b16 %v2242
    %v2803 = vunpack.c.l.b16 %v2243
    %v2804 = vunpack.c.h.b16 %v2243
    %v2805 = vunpack.c.l.b16 %v2244
    %v2806 = vunpack.c.h.b16 %v2244
    %v2807 = vunpack.c.l.b16 %v2245
    %v2808 = vunpack.c.h.b16 %v2245
    %v2809 = vunpack.c.l.b16 %v2246
    %v2810 = vunpack.c.h.b16 %v2246
    %v2811 = vunpack.c.l.b16 %v2247
    %v2812 = vunpack.c.h.b16 %v2247
    %v2813 = vunpack.c.l.b16 %v2248
    %v2814 = vunpack.c.h.b16 %v2248
    %v2815 = vunpack.c.l.b16 %v2249
    %v2816 = vunpack.c.h.b16 %v2249
    %v2817 = vunpack.c.l.b16 %v2250
    %v2818 = vunpack.c.h.b16 %v2250
    %v2819 = vunpack.c.l.b16 %v2251
    %v2820 = vunpack.c.h.b16 %v2251
    %v2821 = vunpack.c.l.b16 %v2252
    %v2822 = vunpack.c.h.b16 %v2252
    %v2823 = vunpack.c.l.b16 %v2253
    %v2824 = vunpack.c.h.b16 %v2253
    %v2825 = vunpack.c.l.b16 %v2254
    %v2826 = vunpack.c.h.b16 %v2254
    %v2827 = vunpack.c.l.b16 %v2255
    %v2828 = vunpack.c.h.b16 %v2255
    %v2829 = vunpack.c.l.b16 %v2256
    %v2830 = vunpack.c.h.b16 %v2256
    %v2831 = vunpack.c.l.b16 %v2257
    %v2832 = vunpack.c.h.b16 %v2257
    %v2833 = vunpack.c.l.b16 %v2258
    %v2834 = vunpack.c.h.b16 %v2258
    %v2835 = vunpack.c.l.b16 %v2259
    %v2836 = vunpack.c.h.b16 %v2259
    %v2837 = vunpack.c.l.b16 %v2260
    %v2838 = vunpack.c.h.b16 %v2260
    %v2839 = vunpack.c.l.b16 %v2261
    %v2840 = vunpack.c.h.b16 %v2261
    %v2841 = vunpack.c.l.b16 %v2262
    %v2842 = vunpack.c.h.b16 %v2262
    %v2843 = vunpack.c.l.b16 %v2263
    %v2844 = vunpack.c.h.b16 %v2263
    %v2845 = vunpack.c.l.b16 %v2264
    %v2846 = vunpack.c.h.b16 %v2264
    %v2847 = vunpack.c.l.b16 %v2265
    %v2848 = vunpack.c.h.b16 %v2265
    %v2849 = vunpack.c.l.b16 %v2266
    %v2850 = vunpack.c.h.b16 %v2266
    %v2851 = vunpack.c.l.b16 %v2267
    %v2852 = vunpack.c.h.b16 %v2267
    %v2853 = vunpack.c.l.b16 %v2268
    %v2854 = vunpack.c.h.b16 %v2268
    %v2855 = vunpack.c.l.b16 %v2269
    %v2856 = vunpack.c.h.b16 %v2269
    %v2857 = vunpack.c.l.b16 %v2270
    %v2858 = vunpack.c.h.b16 %v2270
    %v2859 = vunpack.c.l.b16 %v2271
    %v2860 = vunpack.c.h.b16 %v2271
    %v2861 = vunpack.c.l.b16 %v2272
    %v2862 = vunpack.c.h.b16 %v2272
    %v2863 = vunpack.c.l.b16 %v2273
    %v2864 = vunpack.c.h.b16 %v2273
    %v2865 = vunpack.c.l.b16 %v2274
    %v2866 = vunpack.c.h.b16 %v2274
    %v2867 = vunpack.c.l.b16 %v2275
    %v2868 = vunpack.c.h.b16 %v2275
    %v2869 = vunpack.c.l.b16 %v2276
    %v2870 = vunpack.c.h.b16 %v2276
    %v2871 = vunpack.c.l.b16 %v2277
    %v2872 = vunpack.c.h.b16 %v2277
    %v2873 = vunpack.c.l.b16 %v2278
    %v2874 = vunpack.c.h.b16 %v2278
    %v2875 = vunpack.c.l.b16 %v2279
    %v2876 = vunpack.c.h.b16 %v2279
    %v2877 = vunpack.c.l.b16 %v2280
    %v2878 = vunpack.c.h.b16 %v2280
    %v2879 = vunpack.c.l.b16 %v2281
    %v2880 = vunpack.c.h.b16 %v2281
    %v2881 = vunpack.c.l.b16 %v2282
    %v2882 = vunpack.c.h.b16 %v2282
    %v2883 = vunpack.c.l.b16 %v2283
    %v2884 = vunpack.c.h.b16 %v2283
    %v2885 = vunpack.c.l.b16 %v2284
    %v2886 = vunpack.c.h.b16 %v2284
    %v2887 = vunpack.c.l.b16 %v2285
    %v2888 = vunpack.c.h.b16 %v2285
    %v2889 = vunpack.c.l.b16 %v2286
    %v2890 = vunpack.c.h.b16 %v2286
    %v2891 = vunpack.c.l.b16 %v2287
    %v2892 = vunpack.c.h.b16 %v2287
    %v2893 = vunpack.c.l.b16 %v2288
    %v2894 = vunpack.c.h.b16 %v2288
    %v2895 = vunpack.c.l.b16 %v2289
    %v2896 = vunpack.c.h.b16 %v2289
    %v2897 = vunpack.c.l.b16 %v2290
    %v2898 = vunpack.c.h.b16 %v2290
    %v2899 = vunpack.c.l.b16 %v2291
    %v2900 = vunpack.c.h.b16 %v2291
    %v2901 = vunpack.c.l.b16 %v2292
    %v2902 = vunpack.c.h.b16 %v2292
    %v2903 = vunpack.c.l.b16 %v2293
    %v2904 = vunpack.c.h.b16 %v2293
    %v2905 = vunpack.c.l.b16 %v2294
    %v2906 = vunpack.c.h.b16 %v2294
    %v2907 = vunpack.c.l.b16 %v2295
    %v2908 = vunpack.c.h.b16 %v2295
    %v2909 = vunpack.c.l.b16 %v2296
    %v2910 = vunpack.c.h.b16 %v2296
    %v2911 = vunpack.c.l.b16 %v2297
    %v2912 = vunpack.c.h.b16 %v2297
    %v2913 = vunpack.c.l.b16 %v2298
    %v2914 = vunpack.c.h.b16 %v2298
    %v2915 = vunpack.c.l.b16 %v2299
    %v2916 = vunpack.c.h.b16 %v2299
    %v2917 = vunpack.c.l.b16 %v2300
    %v2918 = vunpack.c.h.b16 %v2300
    %v2919 = vunpack.c.l.b16 %v2301
    %v2920 = vunpack.c.h.b16 %v2301
    %v2921 = vunpack.c.l.b16 %v2302
    %v2922 = vunpack.c.h.b16 %v2302
    %v2923 = vunpack.c.l.b16 %v2303
    %v2924 = vunpack.c.h.b16 %v2303
    %v2925 = vunpack.c.l.b16 %v2304
    %v2926 = vunpack.c.h.b16 %v2304
    %v2927 = vunpack.c.l.b16 %v2305
    %v2928 = vunpack.c.h.b16 %v2305
    %v2929 = vunpack.c.l.b16 %v2306
    %v2930 = vunpack.c.h.b16 %v2306
    %v2931 = vunpack.c.l.b16 %v2307
    %v2932 = vunpack.c.h.b16 %v2307
    %v2933 = vunpack.c.l.b16 %v2308
    %v2934 = vunpack.c.h.b16 %v2308
    %v2935 = vunpack.c.l.b16 %v2309
    %v2936 = vunpack.c.h.b16 %v2309
    %v2937 = vunpack.c.l.b16 %v2310
    %v2938 = vunpack.c.h.b16 %v2310
    %v2939 = vunpack.c.l.b16 %v2311
    %v2940 = vunpack.c.h.b16 %v2311
    %v2941 = vunpack.c.l.b16 %v2312
    %v2942 = vunpack.c.h.b16 %v2312
    %v2943 = vunpack.c.l.b16 %v2313
    %v2944 = vunpack.c.h.b16 %v2313
    %v2945 = vunpack.c.l.b16 %v2314
    %v2946 = vunpack.c.h.b16 %v2314
    %v2947 = vunpack.c.l.b16 %v2315
    %v2948 = vunpack.c.h.b16 %v2315
    %v2949 = vunpack.c.l.b16 %v2316
    %v2950 = vunpack.c.h.b16 %v2316
    %v2951 = vunpack.c.l.b16 %v2317
    %v2952 = vunpack.c.h.b16 %v2317
    %v2953 = vunpack.c.l.b16 %v2318
    %v2954 = vunpack.c.h.b16 %v2318
    %v2955 = vunpack.c.l.b16 %v2319
    %v2956 = vunpack.c.h.b16 %v2319
    %v2957 = vunpack.c.l.b16 %v2320
    %v2958 = vunpack.c.h.b16 %v2320
    %v2959 = vunpack.c.l.b16 %v2321
    %v2960 = vunpack.c.h.b16 %v2321
    %v2961 = vunpack.c.l.b16 %v2322
    %v2962 = vunpack.c.h.b16 %v2322
    %v2963 = vunpack.c.l.b16 %v2323
    %v2964 = vunpack.c.h.b16 %v2323
    %v2965 = vunpack.c.l.b16 %v2324
    %v2966 = vunpack.c.h.b16 %v2324
    %v2967 = vunpack.c.l.b16 %v2325
    %v2968 = vunpack.c.h.b16 %v2325
    %v2969 = vunpack.c.l.b16 %v2326
    %v2970 = vunpack.c.h.b16 %v2326
    %v2971 = vunpack.c.l.b16 %v2327
    %v2972 = vunpack.c.h.b16 %v2327
    %v2973 = vunpack.c.l.b16 %v2328
    %v2974 = vunpack.c.h.b16 %v2328
    %v2975 = vunpack.c.l.b16 %v2329
    %v2976 = vunpack.c.h.b16 %v2329
    %v2977 = vunpack.c.l.b16 %v2330
    %v2978 = vunpack.c.h.b16 %v2330
    %v2979 = vunpack.c.l.b16 %v2331
    %v2980 = vunpack.c.h.b16 %v2331
    %v2981 = vunpack.c.l.b16 %v2332
    %v2982 = vunpack.c.h.b16 %v2332
    %v2983 = vunpack.c.l.b16 %v2333
    %v2984 = vunpack.c.h.b16 %v2333
    %v2985 = vunpack.c.l.b16 %v2334
    %v2986 = vunpack.c.h.b16 %v2334
    %v2987 = vunpack.c.l.b16 %v2335
    %v2988 = vunpack.c.h.b16 %v2335
    %v2989 = vunpack.c.l.b16 %v2336
    %v2990 = vunpack.c.h.b16 %v2336
    %v2991 = vunpack.c.l.b16 %v2337
    %v2992 = vunpack.c.h.b16 %v2337
    %v2993 = vunpack.c.l.b16 %v2338
    %v2994 = vunpack.c.h.b16 %v2338
    %v2995 = vunpack.c.l.b16 %v2339
    %v2996 = vunpack.c.h.b16 %v2339
    %v2997 = vunpack.c.l.b16 %v2340
    %v2998 = vunpack.c.h.b16 %v2340
    %v2999 = vunpack.c.l.b16 %v2341
    %v3000 = vunpack.c.h.b16 %v2341
    %v3001 = vunpack.c.l.b16 %v2342
    %v3002 = vunpack.c.h.b16 %v2342
    %v3003 = vunpack.c.l.b16 %v2343
    %v3004 = vunpack.c.h.b16 %v2343
    %v3005 = vunpack.c.l.b16 %v2344
    %v3006 = vunpack.c.h.b16 %v2344
    %v3007 = vunpack.c.l.b16 %v2345
    %v3008 = vunpack.c.h.b16 %v2345
    %v3009 = vunpack.c.l.b16 %v2346
    %v3010 = vunpack.c.h.b16 %v2346
    %v3011 = vunpack.c.l.b16 %v2347
    %v3012 = vunpack.c.h.b16 %v2347
    %v3013 = vunpack.c.l.b16 %v2348
    %v3014 = vunpack.c.h.b16 %v2348
    %v3015 = vunpack.c.l.b16 %v2349
    %v3016 = vunpack.c.h.b16 %v2349
    %v3017 = vunpack.c.l.b16 %v2350
    %v3018 = vunpack.c.h.b16 %v2350
    %v3019 = vunpack.c.l.b16 %v2351
    %v3020 = vunpack.c.h.b16 %v2351
    %v3021 = vunpack.c.l.b16 %v2352
    %v3022 = vunpack.c.h.b16 %v2352
    %v3023 = vunpack.c.l.b16 %v2353
    %v3024 = vunpack.c.h.b16 %v2353
    %v3025 = vunpack.c.l.b16 %v2354
    %v3026 = vunpack.c.h.b16 %v2354
    %v3027 = vunpack.c.l.b16 %v2355
    %v3028 = vunpack.c.h.b16 %v2355
    %v3029 = vunpack.c.l.b16 %v2356
    %v3030 = vunpack.c.h.b16 %v2356
    %v3031 = vunpack.c.l.b16 %v2357
    %v3032 = vunpack.c.h.b16 %v2357
    %v3033 = vunpack.c.l.b16 %v2358
    %v3034 = vunpack.c.h.b16 %v2358
    %v3035 = vunpack.c.l.b16 %v2359
    %v3036 = vunpack.c.h.b16 %v2359
    %v3037 = vunpack.c.l.b16 %v2360
    %v3038 = vunpack.c.h.b16 %v2360
    %v3039 = vunpack.c.l.b16 %v2361
    %v3040 = vunpack.c.h.b16 %v2361
    %v3041 = vunpack.c.l.b16 %v2362
    %v3042 = vunpack.c.h.b16 %v2362
    %v3043 = vunpack.c.l.b16 %v2363
    %v3044 = vunpack.c.h.b16 %v2363
    %v3045 = vunpack.c.l.b16 %v2364
    %v3046 = vunpack.c.h.b16 %v2364
    %v3047 = vunpack.c.l.b16 %v2365
    %v3048 = vunpack.c.h.b16 %v2365
    %v3049 = vunpack.c.l.b16 %v2366
    %v3050 = vunpack.c.h.b16 %v2366
    %v3051 = vunpack.c.l.b16 %v2367
    %v3052 = vunpack.c.h.b16 %v2367
    %v3053 = vunpack.c.l.b16 %v2368
    %v3054 = vunpack.c.h.b16 %v2368
    %v3055 = vunpack.c.l.b16 %v2369
    %v3056 = vunpack.c.h.b16 %v2369
    %v3057 = vunpack.c.l.b16 %v2370
    %v3058 = vunpack.c.h.b16 %v2370
    %v3059 = vunpack.c.l.b16 %v2371
    %v3060 = vunpack.c.h.b16 %v2371
    %v3061 = vunpack.c.l.b16 %v2372
    %v3062 = vunpack.c.h.b16 %v2372
    %v3063 = vunpack.c.l.b16 %v2373
    %v3064 = vunpack.c.h.b16 %v2373
    %v3065 = vunpack.c.l.b16 %v2374
    %v3066 = vunpack.c.h.b16 %v2374
    %v3067 = vunpack.c.l.b16 %v2375
    %v3068 = vunpack.c.h.b16 %v2375
    %v3069 = vunpack.c.l.b16 %v2376
    %v3070 = vunpack.c.h.b16 %v2376
    %v3071 = vunpack.c.l.b16 %v2377
    %v3072 = vunpack.c.h.b16 %v2377
    %v3073 = vunpack.c.l.b16 %v2378
    %v3074 = vunpack.c.h.b16 %v2378
    %v3075 = vunpack.c.l.b16 %v2379
    %v3076 = vunpack.c.h.b16 %v2379
    %v3077 = vunpack.c.l.b16 %v2380
    %v3078 = vunpack.c.h.b16 %v2380
    %v3079 = vunpack.c.l.b16 %v2381
    %v3080 = vunpack.c.h.b16 %v2381
    %v3081 = vunpack.c.l.b16 %v2382
    %v3082 = vunpack.c.h.b16 %v2382
    %v3083 = vunpack.c.l.b16 %v2383
    %v3084 = vunpack.c.h.b16 %v2383
    %v3085 = vunpack.c.l.b16 %v2384
    %v3086 = vunpack.c.h.b16 %v2384
    %v3087 = vunpack.c.l.b16 %v2385
    %v3088 = vunpack.c.h.b16 %v2385
    %v3089 = vunpack.c.l.b16 %v2386
    %v3090 = vunpack.c.h.b16 %v2386
    %v3091 = vunpack.c.l.b16 %v2387
    %v3092 = vunpack.c.h.b16 %v2387
    %v3093 = vunpack.c.l.b16 %v2388
    %v3094 = vunpack.c.h.b16 %v2388
    %v3095 = vunpack.c.l.b16 %v2389
    %v3096 = vunpack.c.h.b16 %v2389
    %v3097 = vunpack.c.l.b16 %v2390
    %v3098 = vunpack.c.h.b16 %v2390
    %v3099 = vunpack.c.l.b16 %v2391
    %v3100 = vunpack.c.h.b16 %v2391
    %v3101 = vunpack.c.l.b16 %v2392
    %v3102 = vunpack.c.h.b16 %v2392
    %v3103 = vunpack.c.l.b16 %v2393
    %v3104 = vunpack.c.h.b16 %v2393
    %v3105 = vunpack.c.l.b16 %v2394
    %v3106 = vunpack.c.h.b16 %v2394
    %v3107 = vunpack.c.l.b16 %v2395
    %v3108 = vunpack.c.h.b16 %v2395
    %v3109 = vunpack.c.l.b16 %v2396
    %v3110 = vunpack.c.h.b16 %v2396
    %v3111 = vunpack.c.l.b16 %v2397
    %v3112 = vunpack.c.h.b16 %v2397
    %v3113 = vunpack.c.l.b16 %v2398
    %v3114 = vunpack.c.h.b16 %v2398
    %v3115 = vunpack.c.l.b16 %v2399
    %v3116 = vunpack.c.h.b16 %v2399
    %v3117 = vunpack.c.l.b16 %v2400
    %v3118 = vunpack.c.h.b16 %v2400
    %v3119 = vunpack.c.l.b16 %v2401
    %v3120 = vunpack.c.h.b16 %v2401
    %v3121 = vunpack.c.l.b16 %v2402
    %v3122 = vunpack.c.h.b16 %v2402
    %v3123 = vunpack.c.l.b16 %v2403
    %v3124 = vunpack.c.h.b16 %v2403
    %v3125 = vunpack.c.l.b16 %v2404
    %v3126 = vunpack.c.h.b16 %v2404
    %v3127 = vunpack.c.l.b16 %v2405
    %v3128 = vunpack.c.h.b16 %v2405
    %v3129 = vunpack.c.l.b16 %v2406
    %v3130 = vunpack.c.h.b16 %v2406
    %v3131 = vunpack.c.l.b16 %v2407
    %v3132 = vunpack.c.h.b16 %v2407
    %v3133 = vunpack.c.l.b16 %v2408
    %v3134 = vunpack.c.h.b16 %v2408
    %v3135 = vunpack.c.l.b16 %v2409
    %v3136 = vunpack.c.h.b16 %v2409
    %v3137 = vunpack.c.l.b16 %v2410
    %v3138 = vunpack.c.h.b16 %v2410
    %v3139 = vunpack.c.l.b16 %v2411
    %v3140 = vunpack.c.h.b16 %v2411
    %v3141 = vunpack.c.l.b16 %v2412
    %v3142 = vunpack.c.h.b16 %v2412
    %v3143 = vunpack.c.l.b16 %v2413
    %v3144 = vunpack.c.h.b16 %v2413
    %v3145 = vunpack.c.l.b16 %v2414
    %v3146 = vunpack.c.h.b16 %v2414
    %v3147 = vunpack.c.l.b16 %v2415
    %v3148 = vunpack.c.h.b16 %v2415
    %v3149 = vunpack.c.l.b16 %v2416
    %v3150 = vunpack.c.h.b16 %v2416
    %v3151 = vunpack.c.l.b16 %v2417
    %v3152 = vunpack.c.h.b16 %v2417
    %v3153 = vunpack.c.l.b16 %v2418
    %v3154 = vunpack.c.h.b16 %v2418
    %v3155 = vunpack.c.l.b16 %v2419
    %v3156 = vunpack.c.h.b16 %v2419
    %v3157 = vunpack.c.l.b16 %v2420
    %v3158 = vunpack.c.h.b16 %v2420
    %v3159 = vunpack.c.l.b16 %v2421
    %v3160 = vunpack.c.h.b16 %v2421
    %v3161 = vunpack.c.l.b16 %v2422
    %v3162 = vunpack.c.h.b16 %v2422
    %v3163 = vunpack.c.l.b16 %v2423
    %v3164 = vunpack.c.h.b16 %v2423
    %v3165 = vunpack.c.l.b16 %v2424
    %v3166 = vunpack.c.h.b16 %v2424
    %v3167 = vunpack.c.l.b16 %v2425
    %v3168 = vunpack.c.h.b16 %v2425
    %v3169 = vunpack.c.l.b16 %v2426
    %v3170 = vunpack.c.h.b16 %v2426
    %v3171 = vunpack.c.l.b16 %v2427
    %v3172 = vunpack.c.h.b16 %v2427
    %v3173 = vunpack.c.l.b16 %v2428
    %v3174 = vunpack.c.h.b16 %v2428
    %v3175 = vunpack.c.l.b16 %v2429
    %v3176 = vunpack.c.h.b16 %v2429
    %v3177 = vunpack.c.l.b16 %v2430
    %v3178 = vunpack.c.h.b16 %v2430
    %v3179 = vunpack.c.l.b16 %v2431
    %v3180 = vunpack.c.h.b16 %v2431
    %v3181 = vunpack.c.l.b16 %v2432
    %v3182 = vunpack.c.h.b16 %v2432
    %v3183 = vunpack.c.l.b16 %v2433
    %v3184 = vunpack.c.h.b16 %v2433
    %v3185 = vunpack.c.l.b16 %v2434
    %v3186 = vunpack.c.h.b16 %v2434
    %v3187 = vunpack.c.l.b16 %v2435
    %v3188 = vunpack.c.h.b16 %v2435
    %v3189 = vunpack.c.l.b16 %v2436
    %v3190 = vunpack.c.h.b16 %v2436
    %v3191 = vunpack.c.l.b16 %v2437
    %v3192 = vunpack.c.h.b16 %v2437
    %v3193 = vunpack.c.l.b16 %v2438
    %v3194 = vunpack.c.h.b16 %v2438
    %v3195 = vunpack.c.l.b16 %v2439
    %v3196 = vunpack.c.h.b16 %v2439
    %v3197 = vunpack.c.l.b16 %v2440
    %v3198 = vunpack.c.h.b16 %v2440
    %v3199 = vunpack.c.l.b16 %v2441
    %v3200 = vunpack.c.h.b16 %v2441
    %v3201 = vunpack.c.l.b16 %v2442
    %v3202 = vunpack.c.h.b16 %v2442
    %v3203 = vunpack.c.l.b16 %v2443
    %v3204 = vunpack.c.h.b16 %v2443
    %v3205 = vunpack.c.l.b16 %v2444
    %v3206 = vunpack.c.h.b16 %v2444
    %v3207 = vunpack.c.l.b16 %v2445
    %v3208 = vunpack.c.h.b16 %v2445
    %v3209 = vunpack.c.l.b16 %v2446
    %v3210 = vunpack.c.h.b16 %v2446
    %v3211 = vunpack.c.l.b16 %v2447
    %v3212 = vunpack.c.h.b16 %v2447
    %v3213 = vunpack.c.l.b16 %v2448
    %v3214 = vunpack.c.h.b16 %v2448
    %v3215 = vunpack.c.l.b16 %v2449
    %v3216 = vunpack.c.h.b16 %v2449
    %v3217 = vunpack.c.l.b16 %v2450
    %v3218 = vunpack.c.h.b16 %v2450
    %v3219 = vunpack.c.l.b16 %v2451
    %v3220 = vunpack.c.h.b16 %v2451
    %v3221 = vunpack.c.l.b16 %v2452
    %v3222 = vunpack.c.h.b16 %v2452
    %v3223 = vunpack.c.l.b16 %v2453
    %v3224 = vunpack.c.h.b16 %v2453
    %v3225 = vunpack.c.l.b16 %v2454
    %v3226 = vunpack.c.h.b16 %v2454
    %v3227 = vunpack.c.l.b16 %v2455
    %v3228 = vunpack.c.h.b16 %v2455
    %v3229 = vunpack.c.l.b16 %v2456
    %v3230 = vunpack.c.h.b16 %v2456
    %v3231 = vunpack.c.l.b16 %v2457
    %v3232 = vunpack.c.h.b16 %v2457
    %v3233 = vunpack.c.l.b16 %v2458
    %v3234 = vunpack.c.h.b16 %v2458
    %v3235 = vunpack.c.l.b16 %v2459
    %v3236 = vunpack.c.h.b16 %v2459
    %v3237 = vunpack.c.l.b16 %v2460
    %v3238 = vunpack.c.h.b16 %v2460
    %v3239 = vunpack.c.l.b16 %v2461
    %v3240 = vunpack.c.h.b16 %v2461
    %v3241 = vunpack.c.l.b16 %v2462
    %v3242 = vunpack.c.h.b16 %v2462
    %v3243 = vunpack.c.l.b16 %v2463
    %v3244 = vunpack.c.h.b16 %v2463
    %v3245 = vunpack.c.l.b16 %v2464
    %v3246 = vunpack.c.h.b16 %v2464
    %v3247 = vunpack.c.l.b16 %v2465
    %v3248 = vunpack.c.h.b16 %v2465
    %v3249 = vunpack.c.l.b16 %v2466
    %v3250 = vunpack.c.h.b16 %v2466
    %v3251 = vunpack.c.l.b16 %v2467
    %v3252 = vunpack.c.h.b16 %v2467
    %v3253 = vunpack.c.l.b16 %v2468
    %v3254 = vunpack.c.h.b16 %v2468
    %v3255 = vunpack.c.l.b16 %v2469
    %v3256 = vunpack.c.h.b16 %v2469
    %v3257 = vunpack.c.l.b16 %v2470
    %v3258 = vunpack.c.h.b16 %v2470
    %v3259 = vunpack.c.l.b16 %v2471
    %v3260 = vunpack.c.h.b16 %v2471
    %v3261 = vunpack.c.l.b16 %v2472
    %v3262 = vunpack.c.h.b16 %v2472
    %v3263 = vpack.c.b16 %v2755, %v2751
    %v3264 = vpack.c.b16 %v2756, %v2752
    %v3265 = vpack.c.b16 %v2757, %v2753
    %v3266 = vpack.c.b16 %v2758, %v2754
    %v3267 = vpack.c.b16 %v2763, %v2759
    %v3268 = vpack.c.b16 %v2764, %v2760
    %v3269 = vpack.c.b16 %v2765, %v2761
    %v3270 = vpack.c.b16 %v2766, %v2762
    %v3271 = vpack.c.b16 %v2771, %v2767
    %v3272 = vpack.c.b16 %v2772, %v2768
    %v3273 = vpack.c.b16 %v2773, %v2769
    %v3274 = vpack.c.b16 %v2774, %v2770
    %v3275 = vpack.c.b16 %v2779, %v2775
    %v3276 = vpack.c.b16 %v2780, %v2776
    %v3277 = vpack.c.b16 %v2781, %v2777
    %v3278 = vpack.c.b16 %v2782, %v2778
    %v3279 = vpack.c.b16 %v2787, %v2783
    %v3280 = vpack.c.b16 %v2788, %v2784
    %v3281 = vpack.c.b16 %v2789, %v2785
    %v3282 = vpack.c.b16 %v2790, %v2786
    %v3283 = vpack.c.b16 %v2795, %v2791
    %v3284 = vpack.c.b16 %v2796, %v2792
    %v3285 = vpack.c.b16 %v2797, %v2793
    %v3286 = vpack.c.b16 %v2798, %v2794
    %v3287 = vpack.c.b16 %v2803, %v2799
    %v3288 = vpack.c.b16 %v2804, %v2800
    %v3289 = vpack.c.b16 %v2805, %v2801
    %v3290 = vpack.c.b16 %v2806, %v2802
    %v3291 = vpack.c.b16 %v2811, %v2807
    %v3292 = vpack.c.b16 %v2812, %v2808
    %v3293 = vpack.c.b16 %v2813, %v2809
    %v3294 = vpack.c.b16 %v2814, %v2810
    %v3295 = vpack.c.b16 %v2819, %v2815
    %v3296 = vpack.c.b16 %v2820, %v2816
    %v3297 = vpack.c.b16 %v2821, %v2817
    %v3298 = vpack.c.b16 %v2822, %v2818
    %v3299 = vpack.c.b16 %v2827, %v2823
    %v3300 = vpack.c.b16 %v2828, %v2824
    %v3301 = vpack.c.b16 %v2829, %v2825
    %v3302 = vpack.c.b16 %v2830, %v2826
    %v3303 = vpack.c.b16 %v2835, %v2831
    %v3304 = vpack.c.b16 %v2836, %v2832
    %v3305 = vpack.c.b16 %v2837, %v2833
    %v3306 = vpack.c.b16 %v2838, %v2834
    %v3307 = vpack.c.b16 %v2843, %v2839
    %v3308 = vpack.c.b16 %v2844, %v2840
    %v3309 = vpack.c.b16 %v2845, %v2841
    %v3310 = vpack.c.b16 %v2846, %v2842
    %v3311 = vpack.c.b16 %v2851, %v2847
    %v3312 = vpack.c.b16 %v2852, %v2848
    %v3313 = vpack.c.b16 %v2853, %v2849
    %v3314 = vpack.c.b16 %v2854, %v2850
    %v3315 = vpack.c.b16 %v2859, %v2855
    %v3316 = vpack.c.b16 %v2860, %v2856
    %v3317 = vpack.c.b16 %v2861, %v2857
    %v3318 = vpack.c.b16 %v2862, %v2858
    %v3319 = vpack.c.b16 %v2867, %v2863
    %v3320 = vpack.c.b16 %v2868, %v2864
    %v3321 = vpack.c.b16 %v2869, %v2865
    %v3322 = vpack.c.b16 %v2870, %v2866
    %v3323 = vpack.c.b16 %v2875, %v2871
    %v3324 = vpack.c.b16 %v2876, %v2872
    %v3325 = vpack.c.b16 %v2877, %v2873
    %v3326 = vpack.c.b16 %v2878, %v2874
    %v3327 = vpack.c.b16 %v2883, %v2879
    %v3328 = vpack.c.b16 %v2884, %v2880
    %v3329 = vpack.c.b16 %v2885, %v2881
    %v3330 = vpack.c.b16 %v2886, %v2882
    %v3331 = vpack.c.b16 %v2891, %v2887
    %v3332 = vpack.c.b16 %v2892, %v2888
    %v3333 = vpack.c.b16 %v2893, %v2889
    %v3334 = vpack.c.b16 %v2894, %v2890
    %v3335 = vpack.c.b16 %v2899, %v2895
    %v3336 = vpack.c.b16 %v2900, %v2896
    %v3337 = vpack.c.b16 %v2901, %v2897
    %v3338 = vpack.c.b16 %v2902, %v2898
    %v3339 = vpack.c.b16 %v2907, %v2903
    %v3340 = vpack.c.b16 %v2908, %v2904
    %v3341 = vpack.c.b16 %v2909, %v2905
    %v3342 = vpack.c.b16 %v2910, %v2906
    %v3343 = vpack.c.b16 %v2915, %v2911
    %v3344 = vpack.c.b16 %v2916, %v2912
    %v3345 = vpack.c.b16 %v2917, %v2913
    %v3346 = vpack.c.b16 %v2918, %v2914
    %v3347 = vpack.c.b16 %v2923, %v2919
    %v3348 = vpack.c.b16 %v2924, %v2920
    %v3349 = vpack.c.b16 %v2925, %v2921
    %v3350 = vpack.c.b16 %v2926, %v2922
    %v3351 = vpack.c.b16 %v2931, %v2927
    %v3352 = vpack.c.b16 %v2932, %v2928
    %v3353 = vpack.c.b16 %v2933, %v2929
    %v3354 = vpack.c.b16 %v2934, %v2930
    %v3355 = vpack.c.b16 %v2939, %v2935
    %v3356 = vpack.c.b16 %v2940, %v2936
    %v3357 = vpack.c.b16 %v2941, %v2937
    %v3358 = vpack.c.b16 %v2942, %v2938
    %v3359 = vpack.c.b16 %v2947, %v2943
    %v3360 = vpack.c.b16 %v2948, %v2944
    %v3361 = vpack.c.b16 %v2949, %v2945
    %v3362 = vpack.c.b16 %v2950, %v2946
    %v3363 = vpack.c.b16 %v2955, %v2951
    %v3364 = vpack.c.b16 %v2956, %v2952
    %v3365 = vpack.c.b16 %v2957, %v2953
    %v3366 = vpack.c.b16 %v2958, %v2954
    %v3367 = vpack.c.b16 %v2963, %v2959
    %v3368 = vpack.c.b16 %v2964, %v2960
    %v3369 = vpack.c.b16 %v2965, %v2961
    %v3370 = vpack.c.b16 %v2966, %v2962
    %v3371 = vpack.c.b16 %v2971, %v2967
    %v3372 = vpack.c.b16 %v2972, %v2968
    %v3373 = vpack.c.b16 %v2973, %v2969
    %v3374 = vpack.c.b16 %v2974, %v2970
    %v3375 = vpack.c.b16 %v2979, %v2975
    %v3376 = vpack.c.b16 %v2980, %v2976
    %v3377 = vpack.c.b16 %v2981, %v2977
    %v3378 = vpack.c.b16 %v2982, %v2978
    %v3379 = vpack.c.b16 %v2987, %v2983
    %v3380 = vpack.c.b16 %v2988, %v2984
    %v3381 = vpack.c.b16 %v2989, %v2985
    %v3382 = vpack.c.b16 %v2990, %v2986
    %v3383 = vpack.c.b16 %v2995, %v2991
    %v3384 = vpack.c.b16 %v2996, %v2992
    %v3385 = vpack.c.b16 %v2997, %v2993
    %v3386 = vpack.c.b16 %v2998, %v2994
    %v3387 = vpack.c.b16 %v3003, %v2999
    %v3388 = vpack.c.b16 %v3004, %v3000
    %v3389 = vpack.c.b16 %v3005, %v3001
    %v3390 = vpack.c.b16 %v3006, %v3002
    %v3391 = vpack.c.b16 %v3011, %v3007
    %v3392 = vpack.c.b16 %v3012, %v3008
    %v3393 = vpack.c.b16 %v3013, %v3009
    %v3394 = vpack.c.b16 %v3014, %v3010
    %v3395 = vpack.c.b16 %v3019, %v3015
    %v3396 = vpack.c.b16 %v3020, %v3016
    %v3397 = vpack.c.b16 %v3021, %v3017
    %v3398 = vpack.c.b16 %v3022, %v3018
    %v3399 = vpack.c.b16 %v3027, %v3023
    %v3400 = vpack.c.b16 %v3028, %v3024
    %v3401 = vpack.c.b16 %v3029, %v3025
    %v3402 = vpack.c.b16 %v3030, %v3026
    %v3403 = vpack.c.b16 %v3035, %v3031
    %v3404 = vpack.c.b16 %v3036, %v3032
    %v3405 = vpack.c.b16 %v3037, %v3033
    %v3406 = vpack.c.b16 %v3038, %v3034
    %v3407 = vpack.c.b16 %v3043, %v3039
    %v3408 = vpack.c.b16 %v3044, %v3040
    %v3409 = vpack.c.b16 %v3045, %v3041
    %v3410 = vpack.c.b16 %v3046, %v3042
    %v3411 = vpack.c.b16 %v3051, %v3047
    %v3412 = vpack.c.b16 %v3052, %v3048
    %v3413 = vpack.c.b16 %v3053, %v3049
    %v3414 = vpack.c.b16 %v3054, %v3050
    %v3415 = vpack.c.b16 %v3059, %v3055
    %v3416 = vpack.c.b16 %v3060, %v3056
    %v3417 = vpack.c.b16 %v3061, %v3057
    %v3418 = vpack.c.b16 %v3062, %v3058
    %v3419 = vpack.c.b16 %v3067, %v3063
    %v3420 = vpack.c.b16 %v3068, %v3064
    %v3421 = vpack.c.b16 %v3069, %v3065
    %v3422 = vpack.c.b16 %v3070, %v3066
    %v3423 = vpack.c.b16 %v3075, %v3071
    %v3424 = vpack.c.b16 %v3076, %v3072
    %v3425 = vpack.c.b16 %v3077, %v3073
    %v3426 = vpack.c.b16 %v3078, %v3074
    %v3427 = vpack.c.b16 %v3083, %v3079
    %v3428 = vpack.c.b16 %v3084, %v3080
    %v3429 = vpack.c.b16 %v3085, %v3081
    %v3430 = vpack.c.b16 %v3086, %v3082
    %v3431 = vpack.c.b16 %v3091, %v3087
    %v3432 = vpack.c.b16 %v3092, %v3088
    %v3433 = vpack.c.b16 %v3093, %v3089
    %v3434 = vpack.c.b16 %v3094, %v3090
    %v3435 = vpack.c.b16 %v3099, %v3095
    %v3436 = vpack.c.b16 %v3100, %v3096
    %v3437 = vpack.c.b16 %v3101, %v3097
    %v3438 = vpack.c.b16 %v3102, %v3098
    %v3439 = vpack.c.b16 %v3107, %v3103
    %v3440 = vpack.c.b16 %v3108, %v3104
    %v3441 = vpack.c.b16 %v3109, %v3105
    %v3442 = vpack.c.b16 %v3110, %v3106
    %v3443 = vpack.c.b16 %v3115, %v3111
    %v3444 = vpack.c.b16 %v3116, %v3112
    %v3445 = vpack.c.b16 %v3117, %v3113
    %v3446 = vpack.c.b16 %v3118, %v3114
    %v3447 = vpack.c.b16 %v3123, %v3119
    %v3448 = vpack.c.b16 %v3124, %v3120
    %v3449 = vpack.c.b16 %v3125, %v3121
    %v3450 = vpack.c.b16 %v3126, %v3122
    %v3451 = vpack.c.b16 %v3131, %v3127
    %v3452 = vpack.c.b16 %v3132, %v3128
    %v3453 = vpack.c.b16 %v3133, %v3129
    %v3454 = vpack.c.b16 %v3134, %v3130
    %v3455 = vpack.c.b16 %v3139, %v3135
    %v3456 = vpack.c.b16 %v3140, %v3136
    %v3457 = vpack.c.b16 %v3141, %v3137
    %v3458 = vpack.c.b16 %v3142, %v3138
    %v3459 = vpack.c.b16 %v3147, %v3143
    %v3460 = vpack.c.b16 %v3148, %v3144
    %v3461 = vpack.c.b16 %v3149, %v3145
    %v3462 = vpack.c.b16 %v3150, %v3146
    %v3463 = vpack.c.b16 %v3155, %v3151
    %v3464 = vpack.c.b16 %v3156, %v3152
    %v3465 = vpack.c.b16 %v3157, %v3153
    %v3466 = vpack.c.b16 %v3158, %v3154
    %v3467 = vpack.c.b16 %v3163, %v3159
    %v3468 = vpack.c.b16 %v3164, %v3160
    %v3469 = vpack.c.b16 %v3165, %v3161
    %v3470 = vpack.c.b16 %v3166, %v3162
    %v3471 = vpack.c.b16 %v3171, %v3167
    %v3472 = vpack.c.b16 %v3172, %v3168
    %v3473 = vpack.c.b16 %v3173, %v3169
    %v3474 = vpack.c.b16 %v3174, %v3170
    %v3475 = vpack.c.b16 %v3179, %v3175
    %v3476 = vpack.c.b16 %v3180, %v3176
    %v3477 = vpack.c.b16 %v3181, %v3177
    %v3478 = vpack.c.b16 %v3182, %v3178
    %v3479 = vpack.c.b16 %v3187, %v3183
    %v3480 = vpack.c.b16 %v3188, %v3184
    %v3481 = vpack.c.b16 %v3189, %v3185
    %v3482 = vpack.c.b16 %v3190, %v3186
    %v3483 = vpack.c.b16 %v3195, %v3191
    %v3484 = vpack.c.b16 %v3196, %v3192
    %v3485 = vpack.c.b16 %v3197, %v3193
    %v3486 = vpack.c.b16 %v3198, %v3194
    %v3487 = vpack.c.b16 %v3203, %v3199
    %v3488 = vpack.c.b16 %v3204, %v3200
    %v3489 = vpack.c.b16 %v3205, %v3201
    %v3490 = vpack.c.b16 %v3206, %v3202
    %v3491 = vpack.c.b16 %v3211, %v3207
    %v3492 = vpack.c.b16 %v3212, %v3208
    %v3493 = vpack.c.b16 %v3213, %v3209
    %v3494 = vpack.c.b16 %v3214, %v3210
    %v3495 = vpack.c.b16 %v3219, %v3215
    %v3496 = vpack.c.b16 %v3220, %v3216
    %v3497 = vpack.c.b16 %v3221, %v3217
    %v3498 = vpack.c.b16 %v3222, %v3218
    %v3499 = vpack.c.b16 %v3227, %v3223
    %v3500 = vpack.c.b16 %v3228, %v3224
    %v3501 = vpack.c.b16 %v3229, %v3225
    %v3502 = vpack.c.b16 %v3230, %v3226
    %v3503 = vpack.c.b16 %v3235, %v3231
    %v3504 = vpack.c.b16 %v3236, %v3232
    %v3505 = vpack.c.b16 %v3237, %v3233
    %v3506 = vpack.c.b16 %v3238, %v3234
    %v3507 = vpack.c.b16 %v3243, %v3239
    %v3508 = vpack.c.b16 %v3244, %v3240
    %v3509 = vpack.c.b16 %v3245, %v3241
    %v3510 = vpack.c.b16 %v3246, %v3242
    %v3511 = vpack.c.b16 %v3251, %v3247
    %v3512 = vpack.c.b16 %v3252, %v3248
    %v3513 = vpack.c.b16 %v3253, %v3249
    %v3514 = vpack.c.b16 %v3254, %v3250
    %v3515 = vpack.c.b16 %v3259, %v3255
    %v3516 = vpack.c.b16 %v3260, %v3256
    %v3517 = vpack.c.b16 %v3261, %v3257
    %v3518 = vpack.c.b16 %v3262, %v3258
    %3775 = vmatprep.subr.bf16.mxu0 %v3292
    %3776 = vmatpush1.bf16.msra.mxu0 %v3291
    %3777 = vmatprep.subr.bf16.mxu0 %v3288
    %3778 = vmatpush1.bf16.msra.mxu0 %v3287
    %3779 = vmatprep.subr.bf16.mxu0 %v3284
    %3780 = vmatpush1.bf16.msra.mxu0 %v3283
    %3781 = vmatprep.subr.bf16.mxu0 %v3280
    %3782 = vmatpush1.bf16.msra.mxu0 %v3279
    %3783 = vmatprep.subr.bf16.mxu0 %v3276
    %3784 = vmatpush1.bf16.msra.mxu0 %v3275
    %3785 = vmatprep.subr.bf16.mxu0 %v3272
    %3786 = vmatpush1.bf16.msra.mxu0 %v3271
    %3787 = vmatprep.subr.bf16.mxu0 %v3268
    %3788 = vmatpush1.bf16.msra.mxu0 %v3267
    %3789 = vmatprep.subr.bf16.mxu0 %v3264
    %3790 = vmatpush1.bf16.msra.mxu0 %v3263
    %3791 = vmatprep.subr.bf16.mxu0 %v3324
    %3792 = vmatpush2.bf16.msra.mxu0 %v3323
    %3793 = vmatprep.subr.bf16.mxu0 %v3320
    %3794 = vmatpush2.bf16.msra.mxu0 %v3319
    %3795 = vmatprep.subr.bf16.mxu0 %v3316
    %3796 = vmatpush2.bf16.msra.mxu0 %v3315
    %3797 = vmatprep.subr.bf16.mxu0 %v3312
    %3798 = vmatpush2.bf16.msra.mxu0 %v3311
    %3799 = vmatprep.subr.bf16.mxu0 %v3308
    %3800 = vmatpush2.bf16.msra.mxu0 %v3307
    %3801 = vmatprep.subr.bf16.mxu0 %v3304
    %3802 = vmatpush2.bf16.msra.mxu0 %v3303
    %3803 = vmatprep.subr.bf16.mxu0 %v3300
    %3804 = vmatpush2.bf16.msra.mxu0 %v3299
    %3805 = vmatprep.subr.bf16.mxu0 %v3296
    %3806 = vmatpush2.bf16.msra.mxu0 %v3295
    %3807 = vmatprep.mubr.bf16.mxu0 %v2210
    %3808 = vmatmul.mubr.bf16.gmra.mxu0 %v2209
    %v3809 = vpop.f32.mrf.mxu0
    %v3810 = vadd.f32 %v2478, %v3809
    %v3811 = vpop.f32.mrf.mxu0
    %v3812 = vadd.f32 %v2482, %v3811
    %v3813 = vpop.f32.mrf.mxu0
    %v3814 = vadd.f32 %v2478, %v3813
    %v3815 = vpop.f32.mrf.mxu0
    %v3816 = vadd.f32 %v2482, %v3815
    %3817 = vdwg.mxu0
    %3818 = vmatprep.subr.bf16.mxu0 %v3356
    %3819 = vmatpush1.bf16.msra.mxu0 %v3355
    %3820 = vmatprep.subr.bf16.mxu0 %v3352
    %3821 = vmatpush1.bf16.msra.mxu0 %v3351
    %3822 = vmatprep.subr.bf16.mxu0 %v3348
    %3823 = vmatpush1.bf16.msra.mxu0 %v3347
    %3824 = vmatprep.subr.bf16.mxu0 %v3344
    %3825 = vmatpush1.bf16.msra.mxu0 %v3343
    %3826 = vmatprep.subr.bf16.mxu0 %v3340
    %3827 = vmatpush1.bf16.msra.mxu0 %v3339
    %3828 = vmatprep.subr.bf16.mxu0 %v3336
    %3829 = vmatpush1.bf16.msra.mxu0 %v3335
    %3830 = vmatprep.subr.bf16.mxu0 %v3332
    %3831 = vmatpush1.bf16.msra.mxu0 %v3331
    %3832 = vmatprep.subr.bf16.mxu0 %v3328
    %3833 = vmatpush1.bf16.msra.mxu0 %v3327
    %3834 = vmatprep.subr.bf16.mxu0 %v3388
    %3835 = vmatpush2.bf16.msra.mxu0 %v3387
    %3836 = vmatprep.subr.bf16.mxu0 %v3384
    %3837 = vmatpush2.bf16.msra.mxu0 %v3383
    %3838 = vmatprep.subr.bf16.mxu0 %v3380
    %3839 = vmatpush2.bf16.msra.mxu0 %v3379
    %3840 = vmatprep.subr.bf16.mxu0 %v3376
    %3841 = vmatpush2.bf16.msra.mxu0 %v3375
    %3842 = vmatprep.subr.bf16.mxu0 %v3372
    %3843 = vmatpush2.bf16.msra.mxu0 %v3371
    %3844 = vmatprep.subr.bf16.mxu0 %v3368
    %3845 = vmatpush2.bf16.msra.mxu0 %v3367
    %3846 = vmatprep.subr.bf16.mxu0 %v3364
    %3847 = vmatpush2.bf16.msra.mxu0 %v3363
    %3848 = vmatprep.subr.bf16.mxu0 %v3360
    %3849 = vmatpush2.bf16.msra.mxu0 %v3359
    %3850 = vmatprep.mubr.bf16.mxu0 %v2212
    %3851 = vmatmul.mubr.bf16.gmra.mxu0 %v2211
    %v3852 = vpop.f32.mrf.mxu0
    %v3853 = vadd.f32 %v3810, %v3852
    %v3854 = vpop.f32.mrf.mxu0
    %v3855 = vadd.f32 %v3812, %v3854
    %v3856 = vpop.f32.mrf.mxu0
    %v3857 = vadd.f32 %v3814, %v3856
    %v3858 = vpop.f32.mrf.mxu0
    %v3859 = vadd.f32 %v3816, %v3858
    %3860 = vdwg.mxu0
    %3861 = vmatprep.subr.bf16.mxu0 %v3420
    %3862 = vmatpush1.bf16.msra.mxu0 %v3419
    %3863 = vmatprep.subr.bf16.mxu0 %v3416
    %3864 = vmatpush1.bf16.msra.mxu0 %v3415
    %3865 = vmatprep.subr.bf16.mxu0 %v3412
    %3866 = vmatpush1.bf16.msra.mxu0 %v3411
    %3867 = vmatprep.subr.bf16.mxu0 %v3408
    %3868 = vmatpush1.bf16.msra.mxu0 %v3407
    %3869 = vmatprep.subr.bf16.mxu0 %v3404
    %3870 = vmatpush1.bf16.msra.mxu0 %v3403
    %3871 = vmatprep.subr.bf16.mxu0 %v3400
    %3872 = vmatpush1.bf16.msra.mxu0 %v3399
    %3873 = vmatprep.subr.bf16.mxu0 %v3396
    %3874 = vmatpush1.bf16.msra.mxu0 %v3395
    %3875 = vmatprep.subr.bf16.mxu0 %v3392
    %3876 = vmatpush1.bf16.msra.mxu0 %v3391
    %3877 = vmatprep.subr.bf16.mxu0 %v3452
    %3878 = vmatpush2.bf16.msra.mxu0 %v3451
    %3879 = vmatprep.subr.bf16.mxu0 %v3448
    %3880 = vmatpush2.bf16.msra.mxu0 %v3447
    %3881 = vmatprep.subr.bf16.mxu0 %v3444
    %3882 = vmatpush2.bf16.msra.mxu0 %v3443
    %3883 = vmatprep.subr.bf16.mxu0 %v3440
    %3884 = vmatpush2.bf16.msra.mxu0 %v3439
    %3885 = vmatprep.subr.bf16.mxu0 %v3436
    %3886 = vmatpush2.bf16.msra.mxu0 %v3435
    %3887 = vmatprep.subr.bf16.mxu0 %v3432
    %3888 = vmatpush2.bf16.msra.mxu0 %v3431
    %3889 = vmatprep.subr.bf16.mxu0 %v3428
    %3890 = vmatpush2.bf16.msra.mxu0 %v3427
    %3891 = vmatprep.subr.bf16.mxu0 %v3424
    %3892 = vmatpush2.bf16.msra.mxu0 %v3423
    %3893 = vmatprep.mubr.bf16.mxu0 %v2214
    %3894 = vmatmul.mubr.bf16.gmra.mxu0 %v2213
    %v3895 = vpop.f32.mrf.mxu0
    %v3896 = vadd.f32 %v3853, %v3895
    %v3897 = vpop.f32.mrf.mxu0
    %v3898 = vadd.f32 %v3855, %v3897
    %v3899 = vpop.f32.mrf.mxu0
    %v3900 = vadd.f32 %v3857, %v3899
    %v3901 = vpop.f32.mrf.mxu0
    %v3902 = vadd.f32 %v3859, %v3901
    %3903 = vdwg.mxu0
    %3904 = vmatprep.subr.bf16.mxu0 %v3484
    %3905 = vmatpush1.bf16.msra.mxu0 %v3483
    %3906 = vmatprep.subr.bf16.mxu0 %v3480
    %3907 = vmatpush1.bf16.msra.mxu0 %v3479
    %3908 = vmatprep.subr.bf16.mxu0 %v3476
    %3909 = vmatpush1.bf16.msra.mxu0 %v3475
    %3910 = vmatprep.subr.bf16.mxu0 %v3472
    %3911 = vmatpush1.bf16.msra.mxu0 %v3471
    %3912 = vmatprep.subr.bf16.mxu0 %v3468
    %3913 = vmatpush1.bf16.msra.mxu0 %v3467
    %3914 = vmatprep.subr.bf16.mxu0 %v3464
    %3915 = vmatpush1.bf16.msra.mxu0 %v3463
    %3916 = vmatprep.subr.bf16.mxu0 %v3460
    %3917 = vmatpush1.bf16.msra.mxu0 %v3459
    %3918 = vmatprep.subr.bf16.mxu0 %v3456
    %3919 = vmatpush1.bf16.msra.mxu0 %v3455
    %3920 = vmatprep.subr.bf16.mxu0 %v3516
    %3921 = vmatpush2.bf16.msra.mxu0 %v3515
    %3922 = vmatprep.subr.bf16.mxu0 %v3512
    %3923 = vmatpush2.bf16.msra.mxu0 %v3511
    %3924 = vmatprep.subr.bf16.mxu0 %v3508
    %3925 = vmatpush2.bf16.msra.mxu0 %v3507
    %3926 = vmatprep.subr.bf16.mxu0 %v3504
    %3927 = vmatpush2.bf16.msra.mxu0 %v3503
    %3928 = vmatprep.subr.bf16.mxu0 %v3500
    %3929 = vmatpush2.bf16.msra.mxu0 %v3499
    %3930 = vmatprep.subr.bf16.mxu0 %v3496
    %3931 = vmatpush2.bf16.msra.mxu0 %v3495
    %3932 = vmatprep.subr.bf16.mxu0 %v3492
    %3933 = vmatpush2.bf16.msra.mxu0 %v3491
    %3934 = vmatprep.subr.bf16.mxu0 %v3488
    %3935 = vmatpush2.bf16.msra.mxu0 %v3487
    %3936 = vmatprep.mubr.bf16.mxu0 %v2216
    %3937 = vmatmul.mubr.bf16.gmra.mxu0 %v2215
    %v3938 = vpop.f32.mrf.mxu0
    %v3939 = vadd.f32 %v3896, %v3938
    %v3940 = vpop.f32.mrf.mxu0
    %v3941 = vadd.f32 %v3898, %v3940
    %v3942 = vpop.f32.mrf.mxu0
    %v3943 = vadd.f32 %v3900, %v3942
    %v3944 = vpop.f32.mrf.mxu0
    %v3945 = vadd.f32 %v3902, %v3944
    %3946 = vdwg.mxu0
    %3947 = vmatprep.subr.bf16.mxu0 %v3294
    %3948 = vmatpush1.bf16.msra.mxu0 %v3293
    %3949 = vmatprep.subr.bf16.mxu0 %v3290
    %3950 = vmatpush1.bf16.msra.mxu0 %v3289
    %3951 = vmatprep.subr.bf16.mxu0 %v3286
    %3952 = vmatpush1.bf16.msra.mxu0 %v3285
    %3953 = vmatprep.subr.bf16.mxu0 %v3282
    %3954 = vmatpush1.bf16.msra.mxu0 %v3281
    %3955 = vmatprep.subr.bf16.mxu0 %v3278
    %3956 = vmatpush1.bf16.msra.mxu0 %v3277
    %3957 = vmatprep.subr.bf16.mxu0 %v3274
    %3958 = vmatpush1.bf16.msra.mxu0 %v3273
    %3959 = vmatprep.subr.bf16.mxu0 %v3270
    %3960 = vmatpush1.bf16.msra.mxu0 %v3269
    %3961 = vmatprep.subr.bf16.mxu0 %v3266
    %3962 = vmatpush1.bf16.msra.mxu0 %v3265
    %3963 = vmatprep.subr.bf16.mxu0 %v3326
    %3964 = vmatpush2.bf16.msra.mxu0 %v3325
    %3965 = vmatprep.subr.bf16.mxu0 %v3322
    %3966 = vmatpush2.bf16.msra.mxu0 %v3321
    %3967 = vmatprep.subr.bf16.mxu0 %v3318
    %3968 = vmatpush2.bf16.msra.mxu0 %v3317
    %3969 = vmatprep.subr.bf16.mxu0 %v3314
    %3970 = vmatpush2.bf16.msra.mxu0 %v3313
    %3971 = vmatprep.subr.bf16.mxu0 %v3310
    %3972 = vmatpush2.bf16.msra.mxu0 %v3309
    %3973 = vmatprep.subr.bf16.mxu0 %v3306
    %3974 = vmatpush2.bf16.msra.mxu0 %v3305
    %3975 = vmatprep.subr.bf16.mxu0 %v3302
    %3976 = vmatpush2.bf16.msra.mxu0 %v3301
    %3977 = vmatprep.subr.bf16.mxu0 %v3298
    %3978 = vmatpush2.bf16.msra.mxu0 %v3297
    %3979 = vmatprep.mubr.bf16.mxu0 %v2210
    %3980 = vmatmul.mubr.bf16.gmra.mxu0 %v2209
    %v3981 = vpop.f32.mrf.mxu0
    %v3982 = vadd.f32 %v2486, %v3981
    %v3983 = vpop.f32.mrf.mxu0
    %v3984 = vadd.f32 %v2490, %v3983
    %v3985 = vpop.f32.mrf.mxu0
    %v3986 = vadd.f32 %v2486, %v3985
    %v3987 = vpop.f32.mrf.mxu0
    %v3988 = vadd.f32 %v2490, %v3987
    %3989 = vdwg.mxu0
    %3990 = vmatprep.subr.bf16.mxu0 %v3358
    %3991 = vmatpush1.bf16.msra.mxu0 %v3357
    %3992 = vmatprep.subr.bf16.mxu0 %v3354
    %3993 = vmatpush1.bf16.msra.mxu0 %v3353
    %3994 = vmatprep.subr.bf16.mxu0 %v3350
    %3995 = vmatpush1.bf16.msra.mxu0 %v3349
    %3996 = vmatprep.subr.bf16.mxu0 %v3346
    %3997 = vmatpush1.bf16.msra.mxu0 %v3345
    %3998 = vmatprep.subr.bf16.mxu0 %v3342
    %3999 = vmatpush1.bf16.msra.mxu0 %v3341
    %4000 = vmatprep.subr.bf16.mxu0 %v3338
    %4001 = vmatpush1.bf16.msra.mxu0 %v3337
    %4002 = vmatprep.subr.bf16.mxu0 %v3334
    %4003 = vmatpush1.bf16.msra.mxu0 %v3333
    %4004 = vmatprep.subr.bf16.mxu0 %v3330
    %4005 = vmatpush1.bf16.msra.mxu0 %v3329
    %4006 = vmatprep.subr.bf16.mxu0 %v3390
    %4007 = vmatpush2.bf16.msra.mxu0 %v3389
    %4008 = vmatprep.subr.bf16.mxu0 %v3386
    %4009 = vmatpush2.bf16.msra.mxu0 %v3385
    %4010 = vmatprep.subr.bf16.mxu0 %v3382
    %4011 = vmatpush2.bf16.msra.mxu0 %v3381
    %4012 = vmatprep.subr.bf16.mxu0 %v3378
    %4013 = vmatpush2.bf16.msra.mxu0 %v3377
    %4014 = vmatprep.subr.bf16.mxu0 %v3374
    %4015 = vmatpush2.bf16.msra.mxu0 %v3373
    %4016 = vmatprep.subr.bf16.mxu0 %v3370
    %4017 = vmatpush2.bf16.msra.mxu0 %v3369
    %4018 = vmatprep.subr.bf16.mxu0 %v3366
    %4019 = vmatpush2.bf16.msra.mxu0 %v3365
    %4020 = vmatprep.subr.bf16.mxu0 %v3362
    %4021 = vmatpush2.bf16.msra.mxu0 %v3361
    %4022 = vmatprep.mubr.bf16.mxu0 %v2212
    %4023 = vmatmul.mubr.bf16.gmra.mxu0 %v2211
    %v4024 = vpop.f32.mrf.mxu0
    %v4025 = vadd.f32 %v3982, %v4024
    %v4026 = vpop.f32.mrf.mxu0
    %v4027 = vadd.f32 %v3984, %v4026
    %v4028 = vpop.f32.mrf.mxu0
    %v4029 = vadd.f32 %v3986, %v4028
    %v4030 = vpop.f32.mrf.mxu0
    %v4031 = vadd.f32 %v3988, %v4030
    %4032 = vdwg.mxu0
    %4033 = vmatprep.subr.bf16.mxu0 %v3422
    %4034 = vmatpush1.bf16.msra.mxu0 %v3421
    %4035 = vmatprep.subr.bf16.mxu0 %v3418
    %4036 = vmatpush1.bf16.msra.mxu0 %v3417
    %4037 = vmatprep.subr.bf16.mxu0 %v3414
    %4038 = vmatpush1.bf16.msra.mxu0 %v3413
    %4039 = vmatprep.subr.bf16.mxu0 %v3410
    %4040 = vmatpush1.bf16.msra.mxu0 %v3409
    %4041 = vmatprep.subr.bf16.mxu0 %v3406
    %4042 = vmatpush1.bf16.msra.mxu0 %v3405
    %4043 = vmatprep.subr.bf16.mxu0 %v3402
    %4044 = vmatpush1.bf16.msra.mxu0 %v3401
    %4045 = vmatprep.subr.bf16.mxu0 %v3398
    %4046 = vmatpush1.bf16.msra.mxu0 %v3397
    %4047 = vmatprep.subr.bf16.mxu0 %v3394
    %4048 = vmatpush1.bf16.msra.mxu0 %v3393
    %4049 = vmatprep.subr.bf16.mxu0 %v3454
    %4050 = vmatpush2.bf16.msra.mxu0 %v3453
    %4051 = vmatprep.subr.bf16.mxu0 %v3450
    %4052 = vmatpush2.bf16.msra.mxu0 %v3449
    %4053 = vmatprep.subr.bf16.mxu0 %v3446
    %4054 = vmatpush2.bf16.msra.mxu0 %v3445
    %4055 = vmatprep.subr.bf16.mxu0 %v3442
    %4056 = vmatpush2.bf16.msra.mxu0 %v3441
    %4057 = vmatprep.subr.bf16.mxu0 %v3438
    %4058 = vmatpush2.bf16.msra.mxu0 %v3437
    %4059 = vmatprep.subr.bf16.mxu0 %v3434
    %4060 = vmatpush2.bf16.msra.mxu0 %v3433
    %4061 = vmatprep.subr.bf16.mxu0 %v3430
    %4062 = vmatpush2.bf16.msra.mxu0 %v3429
    %4063 = vmatprep.subr.bf16.mxu0 %v3426
    %4064 = vmatpush2.bf16.msra.mxu0 %v3425
    %4065 = vmatprep.mubr.bf16.mxu0 %v2214
    %4066 = vmatmul.mubr.bf16.gmra.mxu0 %v2213
    %v4067 = vpop.f32.mrf.mxu0
    %v4068 = vadd.f32 %v4025, %v4067
    %v4069 = vpop.f32.mrf.mxu0
    %v4070 = vadd.f32 %v4027, %v4069
    %v4071 = vpop.f32.mrf.mxu0
    %v4072 = vadd.f32 %v4029, %v4071
    %v4073 = vpop.f32.mrf.mxu0
    %v4074 = vadd.f32 %v4031, %v4073
    %4075 = vdwg.mxu0
    %4076 = vmatprep.subr.bf16.mxu0 %v3486
    %4077 = vmatpush1.bf16.msra.mxu0 %v3485
    %4078 = vmatprep.subr.bf16.mxu0 %v3482
    %4079 = vmatpush1.bf16.msra.mxu0 %v3481
    %4080 = vmatprep.subr.bf16.mxu0 %v3478
    %4081 = vmatpush1.bf16.msra.mxu0 %v3477
    %4082 = vmatprep.subr.bf16.mxu0 %v3474
    %4083 = vmatpush1.bf16.msra.mxu0 %v3473
    %4084 = vmatprep.subr.bf16.mxu0 %v3470
    %4085 = vmatpush1.bf16.msra.mxu0 %v3469
    %4086 = vmatprep.subr.bf16.mxu0 %v3466
    %4087 = vmatpush1.bf16.msra.mxu0 %v3465
    %4088 = vmatprep.subr.bf16.mxu0 %v3462
    %4089 = vmatpush1.bf16.msra.mxu0 %v3461
    %4090 = vmatprep.subr.bf16.mxu0 %v3458
    %4091 = vmatpush1.bf16.msra.mxu0 %v3457
    %4092 = vmatprep.subr.bf16.mxu0 %v3518
    %4093 = vmatpush2.bf16.msra.mxu0 %v3517
    %4094 = vmatprep.subr.bf16.mxu0 %v3514
    %4095 = vmatpush2.bf16.msra.mxu0 %v3513
    %4096 = vmatprep.subr.bf16.mxu0 %v3510
    %4097 = vmatpush2.bf16.msra.mxu0 %v3509
    %4098 = vmatprep.subr.bf16.mxu0 %v3506
    %4099 = vmatpush2.bf16.msra.mxu0 %v3505
    %4100 = vmatprep.subr.bf16.mxu0 %v3502
    %4101 = vmatpush2.bf16.msra.mxu0 %v3501
    %4102 = vmatprep.subr.bf16.mxu0 %v3498
    %4103 = vmatpush2.bf16.msra.mxu0 %v3497
    %4104 = vmatprep.subr.bf16.mxu0 %v3494
    %4105 = vmatpush2.bf16.msra.mxu0 %v3493
    %4106 = vmatprep.subr.bf16.mxu0 %v3490
    %4107 = vmatpush2.bf16.msra.mxu0 %v3489
    %4108 = vmatprep.mubr.bf16.mxu0 %v2216
    %4109 = vmatmul.mubr.bf16.gmra.mxu0 %v2215
    %v4110 = vpop.f32.mrf.mxu0
    %v4111 = vadd.f32 %v4068, %v4110
    %v4112 = vpop.f32.mrf.mxu0
    %v4113 = vadd.f32 %v4070, %v4112
    %v4114 = vpop.f32.mrf.mxu0
    %v4115 = vadd.f32 %v4072, %v4114
    %v4116 = vpop.f32.mrf.mxu0
    %v4117 = vadd.f32 %v4074, %v4116
    %4118 = vdwg.mxu0
    %v4119 = vmax.f32 %v3939, 0.0
    %v4120 = vmax.f32 %v3941, 0.0
    %v4121 = vmax.f32 %v4111, 0.0
    %v4122 = vmax.f32 %v4113, 0.0
    %v4123 = vmax.f32 %v3943, 0.0
    %v4124 = vmax.f32 %v3945, 0.0
    %v4125 = vmax.f32 %v4115, 0.0
    %v4126 = vmax.f32 %v4117, 0.0
    %v4127 = vpack.c.bf16 %v4123, %v4119
    %v4128 = vpack.c.bf16 %v4124, %v4120
    %v4129 = vpack.c.bf16 %v4125, %v4121
    %v4130 = vpack.c.bf16 %v4126, %v4122
    %v4131 = vld [vmem:[#allocation7] sm:$0xff]
    %v4132 = vld [vmem:[#allocation7 + $0x8] sm:$0xff]
    %v4133 = vld [vmem:[#allocation7 + $0x10] sm:$0xff]
    %v4134 = vld [vmem:[#allocation7 + $0x18] sm:$0xff]
    %v4135 = vld [vmem:[#allocation7 + $0x20] sm:$0xff]
    %v4136 = vld [vmem:[#allocation7 + $0x28] sm:$0xff]
    %v4137 = vld [vmem:[#allocation7 + $0x30] sm:$0xff]
    %v4138 = vld [vmem:[#allocation7 + $0x38] sm:$0xff]
    %v4139 = vld [vmem:[#allocation7 + $0x40] sm:$0xff]
    %v4140 = vld [vmem:[#allocation7 + $0x48] sm:$0xff]
    %v4141 = vld [vmem:[#allocation7 + $0x50] sm:$0xff]
    %v4142 = vld [vmem:[#allocation7 + $0x58] sm:$0xff]
    %v4143 = vld [vmem:[#allocation7 + $0x60] sm:$0xff]
    %v4144 = vld [vmem:[#allocation7 + $0x68] sm:$0xff]
    %v4145 = vld [vmem:[#allocation7 + $0x70] sm:$0xff]
    %v4146 = vld [vmem:[#allocation7 + $0x78] sm:$0xff]
    %v4147 = vld [vmem:[#allocation7 + $0x80] sm:$0xff]
    %v4148 = vld [vmem:[#allocation7 + $0x88] sm:$0xff]
    %v4149 = vld [vmem:[#allocation7 + $0x90] sm:$0xff]
    %v4150 = vld [vmem:[#allocation7 + $0x98] sm:$0xff]
    %v4151 = vld [vmem:[#allocation7 + $0xa0] sm:$0xff]
    %v4152 = vld [vmem:[#allocation7 + $0xa8] sm:$0xff]
    %v4153 = vld [vmem:[#allocation7 + $0xb0] sm:$0xff]
    %v4154 = vld [vmem:[#allocation7 + $0xb8] sm:$0xff]
    %v4155 = vld [vmem:[#allocation7 + $0xc0] sm:$0xff]
    %v4156 = vld [vmem:[#allocation7 + $0xc8] sm:$0xff]
    %v4157 = vld [vmem:[#allocation7 + $0xd0] sm:$0xff]
    %v4158 = vld [vmem:[#allocation7 + $0xd8] sm:$0xff]
    %v4159 = vld [vmem:[#allocation7 + $0xe0] sm:$0xff]
    %v4160 = vld [vmem:[#allocation7 + $0xe8] sm:$0xff]
    %v4161 = vld [vmem:[#allocation7 + $0xf0] sm:$0xff]
    %v4162 = vld [vmem:[#allocation7 + $0xf8] sm:$0xff]
    %v4163 = vld [vmem:[#allocation7 + $0x100] sm:$0xff]
    %v4164 = vld [vmem:[#allocation7 + $0x108] sm:$0xff]
    %v4165 = vld [vmem:[#allocation7 + $0x110] sm:$0xff]
    %v4166 = vld [vmem:[#allocation7 + $0x118] sm:$0xff]
    %v4167 = vld [vmem:[#allocation7 + $0x120] sm:$0xff]
    %v4168 = vld [vmem:[#allocation7 + $0x128] sm:$0xff]
    %v4169 = vld [vmem:[#allocation7 + $0x130] sm:$0xff]
    %v4170 = vld [vmem:[#allocation7 + $0x138] sm:$0xff]
    %v4171 = vld [vmem:[#allocation7 + $0x140] sm:$0xff]
    %v4172 = vld [vmem:[#allocation7 + $0x148] sm:$0xff]
    %v4173 = vld [vmem:[#allocation7 + $0x150] sm:$0xff]
    %v4174 = vld [vmem:[#allocation7 + $0x158] sm:$0xff]
    %v4175 = vld [vmem:[#allocation7 + $0x160] sm:$0xff]
    %v4176 = vld [vmem:[#allocation7 + $0x168] sm:$0xff]
    %v4177 = vld [vmem:[#allocation7 + $0x170] sm:$0xff]
    %v4178 = vld [vmem:[#allocation7 + $0x178] sm:$0xff]
    %v4179 = vld [vmem:[#allocation7 + $0x180] sm:$0xff]
    %v4180 = vld [vmem:[#allocation7 + $0x188] sm:$0xff]
    %v4181 = vld [vmem:[#allocation7 + $0x190] sm:$0xff]
    %v4182 = vld [vmem:[#allocation7 + $0x198] sm:$0xff]
    %v4183 = vld [vmem:[#allocation7 + $0x1a0] sm:$0xff]
    %v4184 = vld [vmem:[#allocation7 + $0x1a8] sm:$0xff]
    %v4185 = vld [vmem:[#allocation7 + $0x1b0] sm:$0xff]
    %v4186 = vld [vmem:[#allocation7 + $0x1b8] sm:$0xff]
    %v4187 = vld [vmem:[#allocation7 + $0x1c0] sm:$0xff]
    %v4188 = vld [vmem:[#allocation7 + $0x1c8] sm:$0xff]
    %v4189 = vld [vmem:[#allocation7 + $0x1d0] sm:$0xff]
    %v4190 = vld [vmem:[#allocation7 + $0x1d8] sm:$0xff]
    %v4191 = vld [vmem:[#allocation7 + $0x1e0] sm:$0xff]
    %v4192 = vld [vmem:[#allocation7 + $0x1e8] sm:$0xff]
    %v4193 = vld [vmem:[#allocation7 + $0x1f0] sm:$0xff]
    %v4194 = vld [vmem:[#allocation7 + $0x1f8] sm:$0xff]
    %v4195 = vld [vmem:[%s8] sm:$0x3]
    %v4197 = vlaneseq
    %v4198 = vshrl.u32 %v4197, 7
    %v4199 = vsub.s32 0, %v4198
    %v4200 = vrot.slane %v4195, %v4199
    %v4201 = vlaneseq
    %v4202 = vshrl.u32 %v4201, 7
    %v4203 = vsub.s32 1, %v4202
    %v4204 = vrot.slane %v4195, %v4203
    %v4271 = vunpack.c.l.b16 %v4131
    %v4272 = vunpack.c.h.b16 %v4131
    %v4273 = vunpack.c.l.b16 %v4132
    %v4274 = vunpack.c.h.b16 %v4132
    %v4275 = vunpack.c.l.b16 %v4133
    %v4276 = vunpack.c.h.b16 %v4133
    %v4277 = vunpack.c.l.b16 %v4134
    %v4278 = vunpack.c.h.b16 %v4134
    %v4279 = vunpack.c.l.b16 %v4135
    %v4280 = vunpack.c.h.b16 %v4135
    %v4281 = vunpack.c.l.b16 %v4136
    %v4282 = vunpack.c.h.b16 %v4136
    %v4283 = vunpack.c.l.b16 %v4137
    %v4284 = vunpack.c.h.b16 %v4137
    %v4285 = vunpack.c.l.b16 %v4138
    %v4286 = vunpack.c.h.b16 %v4138
    %v4287 = vunpack.c.l.b16 %v4139
    %v4288 = vunpack.c.h.b16 %v4139
    %v4289 = vunpack.c.l.b16 %v4140
    %v4290 = vunpack.c.h.b16 %v4140
    %v4291 = vunpack.c.l.b16 %v4141
    %v4292 = vunpack.c.h.b16 %v4141
    %v4293 = vunpack.c.l.b16 %v4142
    %v4294 = vunpack.c.h.b16 %v4142
    %v4295 = vunpack.c.l.b16 %v4143
    %v4296 = vunpack.c.h.b16 %v4143
    %v4297 = vunpack.c.l.b16 %v4144
    %v4298 = vunpack.c.h.b16 %v4144
    %v4299 = vunpack.c.l.b16 %v4145
    %v4300 = vunpack.c.h.b16 %v4145
    %v4301 = vunpack.c.l.b16 %v4146
    %v4302 = vunpack.c.h.b16 %v4146
    %v4303 = vunpack.c.l.b16 %v4147
    %v4304 = vunpack.c.h.b16 %v4147
    %v4305 = vunpack.c.l.b16 %v4148
    %v4306 = vunpack.c.h.b16 %v4148
    %v4307 = vunpack.c.l.b16 %v4149
    %v4308 = vunpack.c.h.b16 %v4149
    %v4309 = vunpack.c.l.b16 %v4150
    %v4310 = vunpack.c.h.b16 %v4150
    %v4311 = vunpack.c.l.b16 %v4151
    %v4312 = vunpack.c.h.b16 %v4151
    %v4313 = vunpack.c.l.b16 %v4152
    %v4314 = vunpack.c.h.b16 %v4152
    %v4315 = vunpack.c.l.b16 %v4153
    %v4316 = vunpack.c.h.b16 %v4153
    %v4317 = vunpack.c.l.b16 %v4154
    %v4318 = vunpack.c.h.b16 %v4154
    %v4319 = vunpack.c.l.b16 %v4155
    %v4320 = vunpack.c.h.b16 %v4155
    %v4321 = vunpack.c.l.b16 %v4156
    %v4322 = vunpack.c.h.b16 %v4156
    %v4323 = vunpack.c.l.b16 %v4157
    %v4324 = vunpack.c.h.b16 %v4157
    %v4325 = vunpack.c.l.b16 %v4158
    %v4326 = vunpack.c.h.b16 %v4158
    %v4327 = vunpack.c.l.b16 %v4159
    %v4328 = vunpack.c.h.b16 %v4159
    %v4329 = vunpack.c.l.b16 %v4160
    %v4330 = vunpack.c.h.b16 %v4160
    %v4331 = vunpack.c.l.b16 %v4161
    %v4332 = vunpack.c.h.b16 %v4161
    %v4333 = vunpack.c.l.b16 %v4162
    %v4334 = vunpack.c.h.b16 %v4162
    %v4335 = vunpack.c.l.b16 %v4163
    %v4336 = vunpack.c.h.b16 %v4163
    %v4337 = vunpack.c.l.b16 %v4164
    %v4338 = vunpack.c.h.b16 %v4164
    %v4339 = vunpack.c.l.b16 %v4165
    %v4340 = vunpack.c.h.b16 %v4165
    %v4341 = vunpack.c.l.b16 %v4166
    %v4342 = vunpack.c.h.b16 %v4166
    %v4343 = vunpack.c.l.b16 %v4167
    %v4344 = vunpack.c.h.b16 %v4167
    %v4345 = vunpack.c.l.b16 %v4168
    %v4346 = vunpack.c.h.b16 %v4168
    %v4347 = vunpack.c.l.b16 %v4169
    %v4348 = vunpack.c.h.b16 %v4169
    %v4349 = vunpack.c.l.b16 %v4170
    %v4350 = vunpack.c.h.b16 %v4170
    %v4351 = vunpack.c.l.b16 %v4171
    %v4352 = vunpack.c.h.b16 %v4171
    %v4353 = vunpack.c.l.b16 %v4172
    %v4354 = vunpack.c.h.b16 %v4172
    %v4355 = vunpack.c.l.b16 %v4173
    %v4356 = vunpack.c.h.b16 %v4173
    %v4357 = vunpack.c.l.b16 %v4174
    %v4358 = vunpack.c.h.b16 %v4174
    %v4359 = vunpack.c.l.b16 %v4175
    %v4360 = vunpack.c.h.b16 %v4175
    %v4361 = vunpack.c.l.b16 %v4176
    %v4362 = vunpack.c.h.b16 %v4176
    %v4363 = vunpack.c.l.b16 %v4177
    %v4364 = vunpack.c.h.b16 %v4177
    %v4365 = vunpack.c.l.b16 %v4178
    %v4366 = vunpack.c.h.b16 %v4178
    %v4367 = vunpack.c.l.b16 %v4179
    %v4368 = vunpack.c.h.b16 %v4179
    %v4369 = vunpack.c.l.b16 %v4180
    %v4370 = vunpack.c.h.b16 %v4180
    %v4371 = vunpack.c.l.b16 %v4181
    %v4372 = vunpack.c.h.b16 %v4181
    %v4373 = vunpack.c.l.b16 %v4182
    %v4374 = vunpack.c.h.b16 %v4182
    %v4375 = vunpack.c.l.b16 %v4183
    %v4376 = vunpack.c.h.b16 %v4183
    %v4377 = vunpack.c.l.b16 %v4184
    %v4378 = vunpack.c.h.b16 %v4184
    %v4379 = vunpack.c.l.b16 %v4185
    %v4380 = vunpack.c.h.b16 %v4185
    %v4381 = vunpack.c.l.b16 %v4186
    %v4382 = vunpack.c.h.b16 %v4186
    %v4383 = vunpack.c.l.b16 %v4187
    %v4384 = vunpack.c.h.b16 %v4187
    %v4385 = vunpack.c.l.b16 %v4188
    %v4386 = vunpack.c.h.b16 %v4188
    %v4387 = vunpack.c.l.b16 %v4189
    %v4388 = vunpack.c.h.b16 %v4189
    %v4389 = vunpack.c.l.b16 %v4190
    %v4390 = vunpack.c.h.b16 %v4190
    %v4391 = vunpack.c.l.b16 %v4191
    %v4392 = vunpack.c.h.b16 %v4191
    %v4393 = vunpack.c.l.b16 %v4192
    %v4394 = vunpack.c.h.b16 %v4192
    %v4395 = vunpack.c.l.b16 %v4193
    %v4396 = vunpack.c.h.b16 %v4193
    %v4397 = vunpack.c.l.b16 %v4194
    %v4398 = vunpack.c.h.b16 %v4194
    %v4399 = vpack.c.b16 %v4273, %v4271
    %v4400 = vpack.c.b16 %v4274, %v4272
    %v4401 = vpack.c.b16 %v4277, %v4275
    %v4402 = vpack.c.b16 %v4278, %v4276
    %v4403 = vpack.c.b16 %v4281, %v4279
    %v4404 = vpack.c.b16 %v4282, %v4280
    %v4405 = vpack.c.b16 %v4285, %v4283
    %v4406 = vpack.c.b16 %v4286, %v4284
    %v4407 = vpack.c.b16 %v4289, %v4287
    %v4408 = vpack.c.b16 %v4290, %v4288
    %v4409 = vpack.c.b16 %v4293, %v4291
    %v4410 = vpack.c.b16 %v4294, %v4292
    %v4411 = vpack.c.b16 %v4297, %v4295
    %v4412 = vpack.c.b16 %v4298, %v4296
    %v4413 = vpack.c.b16 %v4301, %v4299
    %v4414 = vpack.c.b16 %v4302, %v4300
    %v4415 = vpack.c.b16 %v4305, %v4303
    %v4416 = vpack.c.b16 %v4306, %v4304
    %v4417 = vpack.c.b16 %v4309, %v4307
    %v4418 = vpack.c.b16 %v4310, %v4308
    %v4419 = vpack.c.b16 %v4313, %v4311
    %v4420 = vpack.c.b16 %v4314, %v4312
    %v4421 = vpack.c.b16 %v4317, %v4315
    %v4422 = vpack.c.b16 %v4318, %v4316
    %v4423 = vpack.c.b16 %v4321, %v4319
    %v4424 = vpack.c.b16 %v4322, %v4320
    %v4425 = vpack.c.b16 %v4325, %v4323
    %v4426 = vpack.c.b16 %v4326, %v4324
    %v4427 = vpack.c.b16 %v4329, %v4327
    %v4428 = vpack.c.b16 %v4330, %v4328
    %v4429 = vpack.c.b16 %v4333, %v4331
    %v4430 = vpack.c.b16 %v4334, %v4332
    %v4431 = vpack.c.b16 %v4337, %v4335
    %v4432 = vpack.c.b16 %v4338, %v4336
    %v4433 = vpack.c.b16 %v4341, %v4339
    %v4434 = vpack.c.b16 %v4342, %v4340
    %v4435 = vpack.c.b16 %v4345, %v4343
    %v4436 = vpack.c.b16 %v4346, %v4344
    %v4437 = vpack.c.b16 %v4349, %v4347
    %v4438 = vpack.c.b16 %v4350, %v4348
    %v4439 = vpack.c.b16 %v4353, %v4351
    %v4440 = vpack.c.b16 %v4354, %v4352
    %v4441 = vpack.c.b16 %v4357, %v4355
    %v4442 = vpack.c.b16 %v4358, %v4356
    %v4443 = vpack.c.b16 %v4361, %v4359
    %v4444 = vpack.c.b16 %v4362, %v4360
    %v4445 = vpack.c.b16 %v4365, %v4363
    %v4446 = vpack.c.b16 %v4366, %v4364
    %v4447 = vpack.c.b16 %v4369, %v4367
    %v4448 = vpack.c.b16 %v4370, %v4368
    %v4449 = vpack.c.b16 %v4373, %v4371
    %v4450 = vpack.c.b16 %v4374, %v4372
    %v4451 = vpack.c.b16 %v4377, %v4375
    %v4452 = vpack.c.b16 %v4378, %v4376
    %v4453 = vpack.c.b16 %v4381, %v4379
    %v4454 = vpack.c.b16 %v4382, %v4380
    %v4455 = vpack.c.b16 %v4385, %v4383
    %v4456 = vpack.c.b16 %v4386, %v4384
    %v4457 = vpack.c.b16 %v4389, %v4387
    %v4458 = vpack.c.b16 %v4390, %v4388
    %v4459 = vpack.c.b16 %v4393, %v4391
    %v4460 = vpack.c.b16 %v4394, %v4392
    %v4461 = vpack.c.b16 %v4397, %v4395
    %v4462 = vpack.c.b16 %v4398, %v4396
    %4527 = vmatprep.subr.bf16.mxu0 %v4414
    %4528 = vmatpush1.bf16.msra.mxu0 %v4413
    %4529 = vmatprep.subr.bf16.mxu0 %v4412
    %4530 = vmatpush1.bf16.msra.mxu0 %v4411
    %4531 = vmatprep.subr.bf16.mxu0 %v4410
    %4532 = vmatpush1.bf16.msra.mxu0 %v4409
    %4533 = vmatprep.subr.bf16.mxu0 %v4408
    %4534 = vmatpush1.bf16.msra.mxu0 %v4407
    %4535 = vmatprep.subr.bf16.mxu0 %v4406
    %4536 = vmatpush1.bf16.msra.mxu0 %v4405
    %4537 = vmatprep.subr.bf16.mxu0 %v4404
    %4538 = vmatpush1.bf16.msra.mxu0 %v4403
    %4539 = vmatprep.subr.bf16.mxu0 %v4402
    %4540 = vmatpush1.bf16.msra.mxu0 %v4401
    %4541 = vmatprep.subr.bf16.mxu0 %v4400
    %4542 = vmatpush1.bf16.msra.mxu0 %v4399
    %4543 = vmatprep.subr.bf16.mxu0 %v4430
    %4544 = vmatpush2.bf16.msra.mxu0 %v4429
    %4545 = vmatprep.subr.bf16.mxu0 %v4428
    %4546 = vmatpush2.bf16.msra.mxu0 %v4427
    %4547 = vmatprep.subr.bf16.mxu0 %v4426
    %4548 = vmatpush2.bf16.msra.mxu0 %v4425
    %4549 = vmatprep.subr.bf16.mxu0 %v4424
    %4550 = vmatpush2.bf16.msra.mxu0 %v4423
    %4551 = vmatprep.subr.bf16.mxu0 %v4422
    %4552 = vmatpush2.bf16.msra.mxu0 %v4421
    %4553 = vmatprep.subr.bf16.mxu0 %v4420
    %4554 = vmatpush2.bf16.msra.mxu0 %v4419
    %4555 = vmatprep.subr.bf16.mxu0 %v4418
    %4556 = vmatpush2.bf16.msra.mxu0 %v4417
    %4557 = vmatprep.subr.bf16.mxu0 %v4416
    %4558 = vmatpush2.bf16.msra.mxu0 %v4415
    %4559 = vmatprep.mubr.bf16.mxu0 %v4128
    %4560 = vmatmul.mubr.bf16.gmra.mxu0 %v4127
    %v4561 = vpop.f32.mrf.mxu0
    %v4562 = vadd.f32 %v4200, %v4561
    %v4563 = vpop.f32.mrf.mxu0
    %v4564 = vadd.f32 %v4204, %v4563
    %v4565 = vpop.f32.mrf.mxu0
    %v4566 = vadd.f32 %v4200, %v4565
    %v4567 = vpop.f32.mrf.mxu0
    %v4568 = vadd.f32 %v4204, %v4567
    %4569 = vdwg.mxu0
    %4570 = vmatprep.subr.bf16.mxu0 %v4446
    %4571 = vmatpush1.bf16.msra.mxu0 %v4445
    %4572 = vmatprep.subr.bf16.mxu0 %v4444
    %4573 = vmatpush1.bf16.msra.mxu0 %v4443
    %4574 = vmatprep.subr.bf16.mxu0 %v4442
    %4575 = vmatpush1.bf16.msra.mxu0 %v4441
    %4576 = vmatprep.subr.bf16.mxu0 %v4440
    %4577 = vmatpush1.bf16.msra.mxu0 %v4439
    %4578 = vmatprep.subr.bf16.mxu0 %v4438
    %4579 = vmatpush1.bf16.msra.mxu0 %v4437
    %4580 = vmatprep.subr.bf16.mxu0 %v4436
    %4581 = vmatpush1.bf16.msra.mxu0 %v4435
    %4582 = vmatprep.subr.bf16.mxu0 %v4434
    %4583 = vmatpush1.bf16.msra.mxu0 %v4433
    %4584 = vmatprep.subr.bf16.mxu0 %v4432
    %4585 = vmatpush1.bf16.msra.mxu0 %v4431
    %4586 = vmatprep.subr.bf16.mxu0 %v4462
    %4587 = vmatpush2.bf16.msra.mxu0 %v4461
    %4588 = vmatprep.subr.bf16.mxu0 %v4460
    %4589 = vmatpush2.bf16.msra.mxu0 %v4459
    %4590 = vmatprep.subr.bf16.mxu0 %v4458
    %4591 = vmatpush2.bf16.msra.mxu0 %v4457
    %4592 = vmatprep.subr.bf16.mxu0 %v4456
    %4593 = vmatpush2.bf16.msra.mxu0 %v4455
    %4594 = vmatprep.subr.bf16.mxu0 %v4454
    %4595 = vmatpush2.bf16.msra.mxu0 %v4453
    %4596 = vmatprep.subr.bf16.mxu0 %v4452
    %4597 = vmatpush2.bf16.msra.mxu0 %v4451
    %4598 = vmatprep.subr.bf16.mxu0 %v4450
    %4599 = vmatpush2.bf16.msra.mxu0 %v4449
    %4600 = vmatprep.subr.bf16.mxu0 %v4448
    %4601 = vmatpush2.bf16.msra.mxu0 %v4447
    %4602 = vmatprep.mubr.bf16.mxu0 %v4130
    %4603 = vmatmul.mubr.bf16.gmra.mxu0 %v4129
    %v4604 = vpop.f32.mrf.mxu0
    %v4605 = vadd.f32 %v4562, %v4604
    %v4606 = vpop.f32.mrf.mxu0
    %v4607 = vadd.f32 %v4564, %v4606
    %v4608 = vpop.f32.mrf.mxu0
    %v4609 = vadd.f32 %v4566, %v4608
    %v4610 = vpop.f32.mrf.mxu0
    %v4611 = vadd.f32 %v4568, %v4610
    %4612 = vdwg.mxu0
    %v4613 = vmax.f32 %v4605, 0.0
    %v4614 = vmax.f32 %v4607, 0.0
    %v4615 = vmax.f32 %v4609, 0.0
    %v4616 = vmax.f32 %v4611, 0.0
    %v4617 = vpack.c.bf16 %v4615, %v4613
    %v4618 = vpack.c.bf16 %v4616, %v4614
    %v4619 = vld [vmem:[#allocation8] sm:$0xf]
    %v4620 = vld [vmem:[#allocation8 + $0x4] sm:$0xf]
    %v4621 = vld [vmem:[#allocation8 + $0x8] sm:$0xf]
    %v4622 = vld [vmem:[#allocation8 + $0xc] sm:$0xf]
    %v4623 = vld [vmem:[#allocation8 + $0x10] sm:$0xf]
    %v4624 = vld [vmem:[#allocation8 + $0x14] sm:$0xf]
    %v4625 = vld [vmem:[#allocation8 + $0x18] sm:$0xf]
    %v4626 = vld [vmem:[#allocation8 + $0x1c] sm:$0xf]
    %v4627 = vld [vmem:[#allocation8 + $0x20] sm:$0xf]
    %v4628 = vld [vmem:[#allocation8 + $0x24] sm:$0xf]
    %v4629 = vld [vmem:[#allocation8 + $0x28] sm:$0xf]
    %v4630 = vld [vmem:[#allocation8 + $0x2c] sm:$0xf]
    %v4631 = vld [vmem:[#allocation8 + $0x30] sm:$0xf]
    %v4632 = vld [vmem:[#allocation8 + $0x34] sm:$0xf]
    %v4633 = vld [vmem:[#allocation8 + $0x38] sm:$0xf]
    %v4634 = vld [vmem:[#allocation8 + $0x3c] sm:$0xf]
    %v4635 = vld [vmem:[#allocation8 + $0x40] sm:$0xf]
    %v4636 = vld [vmem:[#allocation8 + $0x44] sm:$0xf]
    %v4637 = vld [vmem:[#allocation8 + $0x48] sm:$0xf]
    %v4638 = vld [vmem:[#allocation8 + $0x4c] sm:$0xf]
    %v4639 = vld [vmem:[#allocation8 + $0x50] sm:$0xf]
    %v4640 = vld [vmem:[#allocation8 + $0x54] sm:$0xf]
    %v4641 = vld [vmem:[#allocation8 + $0x58] sm:$0xf]
    %v4642 = vld [vmem:[#allocation8 + $0x5c] sm:$0xf]
    %v4643 = vld [vmem:[#allocation8 + $0x60] sm:$0xf]
    %v4644 = vld [vmem:[#allocation8 + $0x64] sm:$0xf]
    %v4645 = vld [vmem:[#allocation8 + $0x68] sm:$0xf]
    %v4646 = vld [vmem:[#allocation8 + $0x6c] sm:$0xf]
    %v4647 = vld [vmem:[#allocation8 + $0x70] sm:$0xf]
    %v4648 = vld [vmem:[#allocation8 + $0x74] sm:$0xf]
    %v4649 = vld [vmem:[#allocation8 + $0x78] sm:$0xf]
    %v4650 = vld [vmem:[#allocation8 + $0x7c] sm:$0xf]
    %v4651 = vld [vmem:[%s10] sm:$0x1]
    %v4653 = vlaneseq
    %v4654 = vshrl.u32 %v4653, 7
    %v4655 = vsub.s32 0, %v4654
    %v4656 = vrot.slane %v4651, %v4655
    %v4690 = vunpack.c.l.b16 %v4619
    %v4691 = vunpack.c.l.b16 %v4620
    %v4692 = vunpack.c.l.b16 %v4621
    %v4693 = vunpack.c.l.b16 %v4622
    %v4694 = vunpack.c.l.b16 %v4623
    %v4695 = vunpack.c.l.b16 %v4624
    %v4696 = vunpack.c.l.b16 %v4625
    %v4697 = vunpack.c.l.b16 %v4626
    %v4698 = vunpack.c.l.b16 %v4627
    %v4699 = vunpack.c.l.b16 %v4628
    %v4700 = vunpack.c.l.b16 %v4629
    %v4701 = vunpack.c.l.b16 %v4630
    %v4702 = vunpack.c.l.b16 %v4631
    %v4703 = vunpack.c.l.b16 %v4632
    %v4704 = vunpack.c.l.b16 %v4633
    %v4705 = vunpack.c.l.b16 %v4634
    %v4706 = vunpack.c.l.b16 %v4635
    %v4707 = vunpack.c.l.b16 %v4636
    %v4708 = vunpack.c.l.b16 %v4637
    %v4709 = vunpack.c.l.b16 %v4638
    %v4710 = vunpack.c.l.b16 %v4639
    %v4711 = vunpack.c.l.b16 %v4640
    %v4712 = vunpack.c.l.b16 %v4641
    %v4713 = vunpack.c.l.b16 %v4642
    %v4714 = vunpack.c.l.b16 %v4643
    %v4715 = vunpack.c.l.b16 %v4644
    %v4716 = vunpack.c.l.b16 %v4645
    %v4717 = vunpack.c.l.b16 %v4646
    %v4718 = vunpack.c.l.b16 %v4647
    %v4719 = vunpack.c.l.b16 %v4648
    %v4720 = vunpack.c.l.b16 %v4649
    %v4721 = vunpack.c.l.b16 %v4650
    %v4722 = vpack.c.b16 %v4691, %v4690
    %v4723 = vpack.c.b16 %v4693, %v4692
    %v4724 = vpack.c.b16 %v4695, %v4694
    %v4725 = vpack.c.b16 %v4697, %v4696
    %v4726 = vpack.c.b16 %v4699, %v4698
    %v4727 = vpack.c.b16 %v4701, %v4700
    %v4728 = vpack.c.b16 %v4703, %v4702
    %v4729 = vpack.c.b16 %v4705, %v4704
    %v4730 = vpack.c.b16 %v4707, %v4706
    %v4731 = vpack.c.b16 %v4709, %v4708
    %v4732 = vpack.c.b16 %v4711, %v4710
    %v4733 = vpack.c.b16 %v4713, %v4712
    %v4734 = vpack.c.b16 %v4715, %v4714
    %v4735 = vpack.c.b16 %v4717, %v4716
    %v4736 = vpack.c.b16 %v4719, %v4718
    %v4737 = vpack.c.b16 %v4721, %v4720
    %4754 = vmatprep.subr.bf16.mxu0 0
    %4755 = vmatpush1.bf16.msra.mxu0 %v4729
    %4756 = vmatprep.subr.bf16.mxu0 0
    %4757 = vmatpush1.bf16.msra.mxu0 %v4728
    %4758 = vmatprep.subr.bf16.mxu0 0
    %4759 = vmatpush1.bf16.msra.mxu0 %v4727
    %4760 = vmatprep.subr.bf16.mxu0 0
    %4761 = vmatpush1.bf16.msra.mxu0 %v4726
    %4762 = vmatprep.subr.bf16.mxu0 0
    %4763 = vmatpush1.bf16.msra.mxu0 %v4725
    %4764 = vmatprep.subr.bf16.mxu0 0
    %4765 = vmatpush1.bf16.msra.mxu0 %v4724
    %4766 = vmatprep.subr.bf16.mxu0 0
    %4767 = vmatpush1.bf16.msra.mxu0 %v4723
    %4768 = vmatprep.subr.bf16.mxu0 0
    %4769 = vmatpush1.bf16.msra.mxu0 %v4722
    %4770 = vmatprep.subr.bf16.mxu0 0
    %4771 = vmatpush2.bf16.msra.mxu0 %v4737
    %4772 = vmatprep.subr.bf16.mxu0 0
    %4773 = vmatpush2.bf16.msra.mxu0 %v4736
    %4774 = vmatprep.subr.bf16.mxu0 0
    %4775 = vmatpush2.bf16.msra.mxu0 %v4735
    %4776 = vmatprep.subr.bf16.mxu0 0
    %4777 = vmatpush2.bf16.msra.mxu0 %v4734
    %4778 = vmatprep.subr.bf16.mxu0 0
    %4779 = vmatpush2.bf16.msra.mxu0 %v4733
    %4780 = vmatprep.subr.bf16.mxu0 0
    %4781 = vmatpush2.bf16.msra.mxu0 %v4732
    %4782 = vmatprep.subr.bf16.mxu0 0
    %4783 = vmatpush2.bf16.msra.mxu0 %v4731
    %4784 = vmatprep.subr.bf16.mxu0 0
    %4785 = vmatpush2.bf16.msra.mxu0 %v4730
    %4786 = vmatprep.mubr.bf16.mxu0 %v4618
    %4787 = vmatmul.mubr.bf16.gmra.mxu0 %v4617
    %v4788 = vpop.f32.mrf.mxu0
    %v4789 = vadd.f32 %v4656, %v4788
    %v4790 = vpop.f32.mrf.mxu0
    %v4791 = vpop.f32.mrf.mxu0
    %v4792 = vadd.f32 %v4656, %v4791
    %v4793 = vpop.f32.mrf.mxu0
    %4794 = vdwg.mxu0
    %v4795 = vmax.f32 %v4789, 0.0
    %v4796 = vmax.f32 %v4792, 0.0
    %v4797 = vpack.c.bf16 %v4796, %v4795
    %v4798 = vld [vmem:[%s11] sm:$0xf]
    %v4799 = vld [vmem:[%s11 + $0x4] sm:$0xf]
    %v4800 = vld [vmem:[%s11 + $0x8] sm:$0xf]
    %v4801 = vld [vmem:[%s11 + $0xc] sm:$0xf]
    %v4802 = vld [vmem:[%s11 + $0x10] sm:$0xf]
    %v4803 = vld [vmem:[%s11 + $0x14] sm:$0xf]
    %v4804 = vld [vmem:[%s11 + $0x18] sm:$0xf]
    %v4805 = vld [vmem:[%s11 + $0x1c] sm:$0xf]
    %v4806 = vld [vmem:[%s11 + $0x20] sm:$0xf]
    %v4807 = vld [vmem:[%s11 + $0x24] sm:$0xf]
    %v4808 = vld [vmem:[%s11 + $0x28] sm:$0xf]
    %v4809 = vld [vmem:[%s11 + $0x2c] sm:$0xf]
    %v4810 = vld [vmem:[%s11 + $0x30] sm:$0xf]
    %v4811 = vld [vmem:[%s11 + $0x34] sm:$0xf]
    %v4812 = vld [vmem:[%s11 + $0x38] sm:$0xf]
    %v4813 = vld [vmem:[%s11 + $0x3c] sm:$0xf]
    %v4814 = vld [vmem:[%s12] sm:$0x1]
    %v4816 = vlaneseq
    %v4817 = vshrl.u32 %v4816, 7
    %v4818 = vsub.s32 0, %v4817
    %v4819 = vrot.slane %v4814, %v4818
    %v4837 = vunpack.c.l.b16 %v4798
    %v4838 = vunpack.c.l.b16 %v4799
    %v4839 = vunpack.c.l.b16 %v4800
    %v4840 = vunpack.c.l.b16 %v4801
    %v4841 = vunpack.c.l.b16 %v4802
    %v4842 = vunpack.c.l.b16 %v4803
    %v4843 = vunpack.c.l.b16 %v4804
    %v4844 = vunpack.c.l.b16 %v4805
    %v4845 = vunpack.c.l.b16 %v4806
    %v4846 = vunpack.c.l.b16 %v4807
    %v4847 = vunpack.c.l.b16 %v4808
    %v4848 = vunpack.c.l.b16 %v4809
    %v4849 = vunpack.c.l.b16 %v4810
    %v4850 = vunpack.c.l.b16 %v4811
    %v4851 = vunpack.c.l.b16 %v4812
    %v4852 = vunpack.c.l.b16 %v4813
    %v4853 = vpack.c.b16 %v4838, %v4837
    %v4854 = vpack.c.b16 %v4840, %v4839
    %v4855 = vpack.c.b16 %v4842, %v4841
    %v4856 = vpack.c.b16 %v4844, %v4843
    %v4857 = vpack.c.b16 %v4846, %v4845
    %v4858 = vpack.c.b16 %v4848, %v4847
    %v4859 = vpack.c.b16 %v4850, %v4849
    %v4860 = vpack.c.b16 %v4852, %v4851
    %4869 = vmatprep.subr.bf16.mxu0 0
    %4870 = vmatpush1.bf16.msra.mxu0 %v4860
    %4871 = vmatprep.subr.bf16.mxu0 0
    %4872 = vmatpush1.bf16.msra.mxu0 %v4859
    %4873 = vmatprep.subr.bf16.mxu0 0
    %4874 = vmatpush1.bf16.msra.mxu0 %v4858
    %4875 = vmatprep.subr.bf16.mxu0 0
    %4876 = vmatpush1.bf16.msra.mxu0 %v4857
    %4877 = vmatprep.subr.bf16.mxu0 0
    %4878 = vmatpush1.bf16.msra.mxu0 %v4856
    %4879 = vmatprep.subr.bf16.mxu0 0
    %4880 = vmatpush1.bf16.msra.mxu0 %v4855
    %4881 = vmatprep.subr.bf16.mxu0 0
    %4882 = vmatpush1.bf16.msra.mxu0 %v4854
    %4883 = vmatprep.subr.bf16.mxu0 0
    %4884 = vmatpush1.bf16.msra.mxu0 %v4853
    %4885 = vmatprep.subr.bf16.mxu0 0
    %4886 = vmatpush2.bf16.msra.mxu0 0
    %4887 = vmatprep.subr.bf16.mxu0 0
    %4888 = vmatpush2.bf16.msra.mxu0 0
    %4889 = vmatprep.subr.bf16.mxu0 0
    %4890 = vmatpush2.bf16.msra.mxu0 0
    %4891 = vmatprep.subr.bf16.mxu0 0
    %4892 = vmatpush2.bf16.msra.mxu0 0
    %4893 = vmatprep.subr.bf16.mxu0 0
    %4894 = vmatpush2.bf16.msra.mxu0 0
    %4895 = vmatprep.subr.bf16.mxu0 0
    %4896 = vmatpush2.bf16.msra.mxu0 0
    %4897 = vmatprep.subr.bf16.mxu0 0
    %4898 = vmatpush2.bf16.msra.mxu0 0
    %4899 = vmatprep.subr.bf16.mxu0 0
    %4900 = vmatpush2.bf16.msra.mxu0 0
    %4901 = vmatprep.mubr.bf16.mxu0 0
    %4902 = vmatmul.mubr.bf16.gmra.mxu0 %v4797
    %v4903 = vpop.f32.mrf.mxu0
    %v4904 = vadd.f32 %v4819, %v4903
    %v4905 = vpop.f32.mrf.mxu0
    %v4906 = vpop.f32.mrf.mxu0
    %v4907 = vadd.f32 %v4819, %v4906
    %v4908 = vpop.f32.mrf.mxu0
    %4909 = vdwg.mxu0
    %v4910 = vmax.f32 %v4904, 0.0
    %v4911 = vmax.f32 %v4907, 0.0
    %v4912 = vpack.c.bf16 %v4911, %v4910
    %v4913 = vld [vmem:[%s13] sm:$0xf]
    %v4914 = vld [vmem:[%s13 + $0x4] sm:$0xf]
    %v4915 = vld [vmem:[%s13 + $0x8] sm:$0xf]
    %v4916 = vld [vmem:[%s13 + $0xc] sm:$0xf]
    %v4917 = vld [vmem:[#allocation2] sm:$0x1]
    %v4919 = vlaneseq
    %v4920 = vshrl.u32 %v4919, 7
    %v4921 = vsub.s32 0, %v4920
    %v4922 = vrot.slane %v4917, %v4921
    %v4928 = vunpack.c.l.b16 %v4913
    %v4929 = vunpack.c.l.b16 %v4914
    %v4930 = vunpack.c.l.b16 %v4915
    %v4931 = vunpack.c.l.b16 %v4916
    %v4932 = vpack.c.b16 %v4929, %v4928
    %v4933 = vpack.c.b16 %v4931, %v4930
    %vm4936 = vcmask 261120
    %v4938 = vsel %vm4936, %v4912, 0
    %4940 = vmatprep.subr.bf16.mxu0 0
    %4941 = vmatpush1.bf16.msra.mxu0 0
    %4942 = vmatprep.subr.bf16.mxu0 0
    %4943 = vmatpush1.bf16.msra.mxu0 0
    %4944 = vmatprep.subr.bf16.mxu0 0
    %4945 = vmatpush1.bf16.msra.mxu0 0
    %4946 = vmatprep.subr.bf16.mxu0 0
    %4947 = vmatpush1.bf16.msra.mxu0 0
    %4948 = vmatprep.subr.bf16.mxu0 0
    %4949 = vmatpush1.bf16.msra.mxu0 0
    %4950 = vmatprep.subr.bf16.mxu0 0
    %4951 = vmatpush1.bf16.msra.mxu0 0
    %4952 = vmatprep.subr.bf16.mxu0 0
    %4953 = vmatpush1.bf16.msra.mxu0 %v4933
    %4954 = vmatprep.subr.bf16.mxu0 0
    %4955 = vmatpush1.bf16.msra.mxu0 %v4932
    %4956 = vmatprep.subr.bf16.mxu0 0
    %4957 = vmatpush2.bf16.msra.mxu0 0
    %4958 = vmatprep.subr.bf16.mxu0 0
    %4959 = vmatpush2.bf16.msra.mxu0 0
    %4960 = vmatprep.subr.bf16.mxu0 0
    %4961 = vmatpush2.bf16.msra.mxu0 0
    %4962 = vmatprep.subr.bf16.mxu0 0
    %4963 = vmatpush2.bf16.msra.mxu0 0
    %4964 = vmatprep.subr.bf16.mxu0 0
    %4965 = vmatpush2.bf16.msra.mxu0 0
    %4966 = vmatprep.subr.bf16.mxu0 0
    %4967 = vmatpush2.bf16.msra.mxu0 0
    %4968 = vmatprep.subr.bf16.mxu0 0
    %4969 = vmatpush2.bf16.msra.mxu0 0
    %4970 = vmatprep.subr.bf16.mxu0 0
    %4971 = vmatpush2.bf16.msra.mxu0 0
    %4972 = vmatprep.mubr.bf16.mxu0 0
    %4973 = vmatmul.mubr.bf16.gmra.mxu0 %v4938
    %v4974 = vpop.f32.mrf.mxu0
    %v4975 = vadd.f32 %v4922, %v4974
    %v4976 = vpop.f32.mrf.mxu0
    %v4977 = vpop.f32.mrf.mxu0
    %v4978 = vadd.f32 %v4922, %v4977
    %v4979 = vpop.f32.mrf.mxu0
    %4980 = vdwg.mxu0
    %vm4981 = vcmask 7168
    %4982 = vst.msk [vmem:[%s15] sm:$0xff] %vm4981, %v4975
    %4983 = vst.msk [vmem:[%s15 + $0x8] sm:$0xff] %vm4981, %v4978
    // Predicated region
    $region78: #{mlp_forward.1} parent=1 // pred_check
      _
    $region79: #{mlp_forward.1} parent=1 // pred_check_branch
      %4985 = sbr.rel (0) target = $region81
    $region80: #{mlp_forward.1} parent=1 // pred_region
      _
    $region81: #{mlp_forward.1} parent=1 // pred_fallthru
      _
    // Predicated region
    $region82: #{mlp_forward.1} parent=1 // pred_check
      _
    $region83: #{mlp_forward.1} parent=1 // pred_check_branch
      %4987 = sbr.rel (0) target = $region85
    $region84: #{mlp_forward.1} parent=1 // pred_region
      _
    $region85: #{mlp_forward.1} parent=1 // pred_fallthru
      _
    %4988 = vsyncpa [#allocation4], 1
    %4989 = vsyncpa [#allocation6], 1
    %4990 = vsyncpa [#allocation9], 1

</llo_original>
